<compile_context>
chip_gen: v7x
topology: tpu7x:2x2x1
jax: 0.10.0
libtpu: 0.0.40
codegen_flags: <defaults>
</compile_context>

<pallas_src>
import jax
import jax.numpy as jnp
from jax.experimental import pallas as pl
from jax.experimental.pallas import tpu as pltpu


HIDDEN = (1024, 512, 256, 128)
HEAD_LANES = 128   # fused actor|critic head output, padded to a full lane tile
_SUBLANE = 16      # bf16 sublane packing


def _round_up(x, m):
    return (x + m - 1) // m * m


def _cdiv(a, b):
    return (a + b - 1) // b


def _default_batch_tile():
    # v5e's MXU is 128x128, so M=128 already fills it; v6e/v7x (256x256) want 256.
    try:
        kind = jax.devices()[0].device_kind.lower()
        if "v5 lite" in kind or "v5lite" in kind or "v5e" in kind:
            return 128
    except Exception:
        pass
    return 256


def actor_critic_kernel(
    x_ref,
    w1_ref, b1_ref,
    w2_ref, b2_ref,
    w3_ref, b3_ref,
    w4_ref, b4_ref,
    wh_ref, bh_ref,
    out_ref,
):
    # Cast activations to bf16 only at the MXU inputs; bias add + ReLU in f32.
    x = x_ref[...].astype(jnp.bfloat16)

    h = jnp.dot(x, w1_ref[...], preferred_element_type=jnp.float32) + b1_ref[...]
    h = jnp.maximum(h, 0.0).astype(jnp.bfloat16)

    h = jnp.dot(h, w2_ref[...], preferred_element_type=jnp.float32) + b2_ref[...]
    h = jnp.maximum(h, 0.0).astype(jnp.bfloat16)

    h = jnp.dot(h, w3_ref[...], preferred_element_type=jnp.float32) + b3_ref[...]
    h = jnp.maximum(h, 0.0).astype(jnp.bfloat16)

    h = jnp.dot(h, w4_ref[...], preferred_element_type=jnp.float32) + b4_ref[...]
    h = jnp.maximum(h, 0.0).astype(jnp.bfloat16)

    # Fused actor|critic head: one lane-dense (tile, 128) store.
    out_ref[...] = (
        jnp.dot(h, wh_ref[...], preferred_element_type=jnp.float32) + bh_ref[...]
    )


def fuse_head(params):
    """Fuse actor/critic heads into one lane-dense (128, 128) weight + bias.

    Call ONCE at parameter-init time; the fused `wh`/`bh` are what the kernel
    consumes (logits/value are sliced out of the fused output in the wrapper).
    """
    action_size = params["wa"].shape[1]
    assert action_size + 1 <= HEAD_LANES, "fused head assumes action_size < 128"
    head_w = jnp.zeros((HIDDEN[-1], HEAD_LANES), jnp.bfloat16)
    head_w = head_w.at[:, :action_size].set(params["wa"])
    head_w = head_w.at[:, action_size:action_size + 1].set(params["wc"])
    head_b = jnp.zeros((1, HEAD_LANES), jnp.float32)
    head_b = head_b.at[:, :action_size].set(params["ba"])
    head_b = head_b.at[:, action_size:action_size + 1].set(params["bc"])
    return dict(params, wh=head_w, bh=head_b)


def _vmem_limit_bytes(tile, state_size, weight_bytes, buffered_weights):
    """Tile-scaled VMEM budget: resident weights + activations + i/o blocks."""
    weight_buf = weight_bytes * (1 if buffered_weights else 2)
    act_f32 = tile * (sum(HIDDEN) + HEAD_LANES) * 4          # f32 layer outputs
    act_bf16 = tile * (state_size + sum(HIDDEN)) * 2          # bf16 MXU-input copies
    io = 2 * tile * (state_size + HEAD_LANES) * 4             # double-buffered in/out
    est = weight_buf + act_f32 + act_bf16 + io
    est = int(est * 1.5) + (4 << 20)                          # compiler scratch slack
    return max(16 << 20, min(est, 64 << 20))


def actor_critic_forward(state, params, *, batch_tile=None):
    """Run the fused ActorCritic forward pass.

    state:  (batch, state_size) float32
    params: dict with w1..w4 (in,out) bf16, b1..b4 (1,out) f32, wa/wc/ba/bc,
            and pre-fused wh (128,128) bf16 / bh (1,128) f32 (see fuse_head).
    returns (logits (batch, action_size), state_value (batch, 1)) float32
    """
    batch, state_size = state.shape
    action_size = params["wa"].shape[1]

    if "wh" not in params or "bh" not in params:
        # Fallback only; prefer fusing once at init so this cost is not per-call.
        params = fuse_head(params)

    if batch_tile is None:
        batch_tile = _default_batch_tile()

    # Balanced tiles: padding is capped below one sublane group per tile.
    num_tiles = max(1, _cdiv(batch, batch_tile))
    tile = _round_up(_cdiv(batch, num_tiles), _SUBLANE)
    padded_batch = num_tiles * tile

    x = state
    if padded_batch != batch:
        x = jnp.pad(state, ((0, padded_batch - batch), (0, 0)))

    args = (
        x,
        params["w1"], params["b1"],
        params["w2"], params["b2"],
        params["w3"], params["b3"],
        params["w4"], params["b4"],
        params["wh"], params["bh"],
    )

    weight_bytes = sum(int(a.size) * a.dtype.itemsize for a in args[1:])
    flops_per_row = 2 * (
        state_size * HIDDEN[0]
        + HIDDEN[0] * HIDDEN[1]
        + HIDDEN[1] * HIDDEN[2]
        + HIDDEN[2] * HIDDEN[3]
        + HIDDEN[3] * HEAD_LANES
    )
    cost = pl.CostEstimate(
        flops=flops_per_row * padded_batch,
        transcendentals=0,
        bytes_accessed=weight_bytes + padded_batch * (state_size + HEAD_LANES) * 4,
    )

    # Single grid step -> "arbitrary" (megacore would only duplicate the weight
    # DMA); multiple tiles -> "parallel" so v7x's two TCs split the batch.
    dim_sem = ("parallel",) if num_tiles > 1 else ("arbitrary",)

    def build(buffered_weights):
        def resident(a):
            # Whole array as one block with a constant index_map: fetched once,
            # stays resident in VMEM across all batch tiles.  Buffered(1) avoids
            # the pointless second buffer for never-changing blocks.
            kw = {}
            if buffered_weights:
                kw["pipeline_mode"] = pl.Buffered(1)
            return pl.BlockSpec(a.shape, lambda i: (0, 0), **kw)

        in_specs = [pl.BlockSpec((tile, state_size), lambda i: (i, 0))]
        in_specs += [resident(a) for a in args[1:]]
        out_spec = pl.BlockSpec((tile, HEAD_LANES), lambda i: (i, 0))

        return pl.pallas_call(
            actor_critic_kernel,
            grid=(num_tiles,),
            in_specs=in_specs,
            out_specs=out_spec,
            out_shape=jax.ShapeDtypeStruct((padded_batch, HEAD_LANES), jnp.float32),
            compiler_params=pltpu.CompilerParams(
                dimension_semantics=dim_sem,
                vmem_limit_bytes=_vmem_limit_bytes(
                    tile, state_size, weight_bytes, buffered_weights
                ),
            ),
            cost_estimate=cost,
        )

    use_buffered = hasattr(pl, "Buffered")
    try:
        out = build(use_buffered)(*args)
    except Exception:
        if not use_buffered:
            raise
        # Robust fallback: default (double-buffered) resident weights.
        out = build(False)(*args)

    logits = out[:batch, :action_size]
    state_value = out[:batch, action_size:action_size + 1]
    return logits, state_value


def init_params(key, state_size, action_size):
    """Deterministic synthetic initialization (Kaiming-uniform-ish).

    Weights stored as bf16 (in, out); biases as f32 (1, out).  The fused head
    weight/bias are built here, once, so the forward pass never rebuilds them.
    """
    dims = [
        ("1", state_size, HIDDEN[0]),
        ("2", HIDDEN[0], HIDDEN[1]),
        ("3", HIDDEN[1], HIDDEN[2]),
        ("4", HIDDEN[2], HIDDEN[3]),
        ("a", HIDDEN[3], action_size),
        ("c", HIDDEN[3], 1),
    ]
    params = {}
    for name, fan_in, fan_out in dims:
        key, kw, kb = jax.random.split(key, 3)
        bound = 1.0 / (fan_in ** 0.5)
        params[f"w{name}"] = jax.random.uniform(
            kw, (fan_in, fan_out), jnp.float32, -bound, bound
        ).astype(jnp.bfloat16)
        params[f"b{name}"] = jax.random.uniform(
            kb, (1, fan_out), jnp.float32, -bound, bound
        )
    return fuse_head(params)


def reference_forward(state, params):
    """Pure-JAX reference mirroring the kernel numerics (bf16 in, f32 acc)."""
    def dense(x, w, b):
        return jnp.dot(
            x.astype(jnp.bfloat16), w, preferred_element_type=jnp.float32
        ) + b

    h = jnp.maximum(dense(state, params["w1"], params["b1"]), 0.0)
    h = jnp.maximum(dense(h, params["w2"], params["b2"]), 0.0)
    h = jnp.maximum(dense(h, params["w3"], params["b3"]), 0.0)
    h = jnp.maximum(dense(h, params["w4"], params["b4"]), 0.0)
    logits = dense(h, params["wa"], params["ba"])
    value = dense(h, params["wc"], params["bc"])
    return logits, value


if __name__ == "__main__":
    batch = 8
    state_size = 32
    action_size = 4

    key = jax.random.PRNGKey(0)
    key, k_state = jax.random.split(key)
    state = jax.random.normal(k_state, (batch, state_size), jnp.float32)
    params = init_params(key, state_size, action_size)

    logits, value = actor_critic_forward(state, params)
    jax.block_until_ready((logits, value))

    ref_logits, ref_value = reference_forward(state, params)
    assert logits.shape == (batch, action_size)
    assert value.shape == (batch, 1)
    assert jnp.allclose(logits, ref_logits, atol=2e-2, rtol=2e-2)
    assert jnp.allclose(value, ref_value, atol=2e-2, rtol=2e-2)

    print("KERNEL_OK")
</pallas_src>

<mosaic_0001>
module attributes {stable_mosaic.version = 11 : i64} {
  func.func @actor_critic_kernel(%arg0: i32, %arg1: memref<16x32xf32, #tpu.memory_space<vmem>>, %arg2: memref<32x1024xbf16, #tpu.memory_space<vmem>>, %arg3: memref<1x1024xf32, #tpu.memory_space<vmem>>, %arg4: memref<1024x512xbf16, #tpu.memory_space<vmem>>, %arg5: memref<1x512xf32, #tpu.memory_space<vmem>>, %arg6: memref<512x256xbf16, #tpu.memory_space<vmem>>, %arg7: memref<1x256xf32, #tpu.memory_space<vmem>>, %arg8: memref<256x128xbf16, #tpu.memory_space<vmem>>, %arg9: memref<1x128xf32, #tpu.memory_space<vmem>>, %arg10: memref<128x128xbf16, #tpu.memory_space<vmem>>, %arg11: memref<1x128xf32, #tpu.memory_space<vmem>>, %arg12: memref<16x128xf32, #tpu.memory_space<vmem>>) attributes {dimension_semantics = [#tpu.dimension_semantics<arbitrary>], iteration_bounds = array<i64: 1>, scalar_prefetch = 0 : i64, scratch_operands = 0 : i64, tpu.core_type = #tpu.core_type<tc>, window_params = [{transform_indices = @transform_0, window_bounds = array<i64: 16, 32>}, {pipeline_mode = #tpu.pipeline_mode<synchronous>, transform_indices = @transform_1, window_bounds = array<i64: 32, 1024>}, {pipeline_mode = #tpu.pipeline_mode<synchronous>, transform_indices = @transform_2, window_bounds = array<i64: 1, 1024>}, {pipeline_mode = #tpu.pipeline_mode<synchronous>, transform_indices = @transform_3, window_bounds = array<i64: 1024, 512>}, {pipeline_mode = #tpu.pipeline_mode<synchronous>, transform_indices = @transform_4, window_bounds = array<i64: 1, 512>}, {pipeline_mode = #tpu.pipeline_mode<synchronous>, transform_indices = @transform_5, window_bounds = array<i64: 512, 256>}, {pipeline_mode = #tpu.pipeline_mode<synchronous>, transform_indices = @transform_6, window_bounds = array<i64: 1, 256>}, {pipeline_mode = #tpu.pipeline_mode<synchronous>, transform_indices = @transform_7, window_bounds = array<i64: 256, 128>}, {pipeline_mode = #tpu.pipeline_mode<synchronous>, transform_indices = @transform_8, window_bounds = array<i64: 1, 128>}, {pipeline_mode = #tpu.pipeline_mode<synchronous>, transform_indices = @transform_9, window_bounds = array<i64: 128, 128>}, {pipeline_mode = #tpu.pipeline_mode<synchronous>, transform_indices = @transform_10, window_bounds = array<i64: 1, 128>}, {transform_indices = @transform_11, window_bounds = array<i64: 16, 128>}]} {
    %c0 = arith.constant 0 : index
    %c0_0 = arith.constant 0 : index
    %0 = vector.load %arg1[%c0, %c0_0] : memref<16x32xf32, #tpu.memory_space<vmem>>, vector<16x32xf32>
    %1 = arith.truncf %0 : vector<16x32xf32> to vector<16x32xbf16>
    %c0_1 = arith.constant 0 : index
    %c0_2 = arith.constant 0 : index
    %2 = vector.load %arg2[%c0_1, %c0_2] : memref<32x1024xbf16, #tpu.memory_space<vmem>>, vector<32x1024xbf16>
    %cst = arith.constant dense<0.000000e+00> : vector<16x1024xf32>
    %3 = tpu.matmul %1, %2, %cst {dimension_numbers = #tpu.dot_dimension_numbers<[1], [0], [0], [1], [0, 0, 1, 1], [], []>} : vector<16x32xbf16>, vector<32x1024xbf16>, vector<16x1024xf32> -> vector<16x1024xf32>
    %c0_3 = arith.constant 0 : index
    %c0_4 = arith.constant 0 : index
    %4 = vector.load %arg3[%c0_3, %c0_4] : memref<1x1024xf32, #tpu.memory_space<vmem>>, vector<1x1024xf32>
    %5 = vector.broadcast %4 : vector<1x1024xf32> to vector<16x1024xf32>
    %6 = arith.addf %3, %5 : vector<16x1024xf32>
    %cst_5 = arith.constant 0.000000e+00 : f32
    %7 = vector.broadcast %cst_5 : f32 to vector<16x1024xf32>
    %8 = arith.maximumf %6, %7 : vector<16x1024xf32>
    %9 = arith.truncf %8 : vector<16x1024xf32> to vector<16x1024xbf16>
    %c0_6 = arith.constant 0 : index
    %c0_7 = arith.constant 0 : index
    %10 = vector.load %arg4[%c0_6, %c0_7] : memref<1024x512xbf16, #tpu.memory_space<vmem>>, vector<1024x512xbf16>
    %cst_8 = arith.constant dense<0.000000e+00> : vector<16x512xf32>
    %11 = tpu.matmul %9, %10, %cst_8 {dimension_numbers = #tpu.dot_dimension_numbers<[1], [0], [0], [1], [0, 0, 1, 1], [], []>} : vector<16x1024xbf16>, vector<1024x512xbf16>, vector<16x512xf32> -> vector<16x512xf32>
    %c0_9 = arith.constant 0 : index
    %c0_10 = arith.constant 0 : index
    %12 = vector.load %arg5[%c0_9, %c0_10] : memref<1x512xf32, #tpu.memory_space<vmem>>, vector<1x512xf32>
    %13 = vector.broadcast %12 : vector<1x512xf32> to vector<16x512xf32>
    %14 = arith.addf %11, %13 : vector<16x512xf32>
    %cst_11 = arith.constant 0.000000e+00 : f32
    %15 = vector.broadcast %cst_11 : f32 to vector<16x512xf32>
    %16 = arith.maximumf %14, %15 : vector<16x512xf32>
    %17 = arith.truncf %16 : vector<16x512xf32> to vector<16x512xbf16>
    %c0_12 = arith.constant 0 : index
    %c0_13 = arith.constant 0 : index
    %18 = vector.load %arg6[%c0_12, %c0_13] : memref<512x256xbf16, #tpu.memory_space<vmem>>, vector<512x256xbf16>
    %cst_14 = arith.constant dense<0.000000e+00> : vector<16x256xf32>
    %19 = tpu.matmul %17, %18, %cst_14 {dimension_numbers = #tpu.dot_dimension_numbers<[1], [0], [0], [1], [0, 0, 1, 1], [], []>} : vector<16x512xbf16>, vector<512x256xbf16>, vector<16x256xf32> -> vector<16x256xf32>
    %c0_15 = arith.constant 0 : index
    %c0_16 = arith.constant 0 : index
    %20 = vector.load %arg7[%c0_15, %c0_16] : memref<1x256xf32, #tpu.memory_space<vmem>>, vector<1x256xf32>
    %21 = vector.broadcast %20 : vector<1x256xf32> to vector<16x256xf32>
    %22 = arith.addf %19, %21 : vector<16x256xf32>
    %cst_17 = arith.constant 0.000000e+00 : f32
    %23 = vector.broadcast %cst_17 : f32 to vector<16x256xf32>
    %24 = arith.maximumf %22, %23 : vector<16x256xf32>
    %25 = arith.truncf %24 : vector<16x256xf32> to vector<16x256xbf16>
    %c0_18 = arith.constant 0 : index
    %c0_19 = arith.constant 0 : index
    %26 = vector.load %arg8[%c0_18, %c0_19] : memref<256x128xbf16, #tpu.memory_space<vmem>>, vector<256x128xbf16>
    %cst_20 = arith.constant dense<0.000000e+00> : vector<16x128xf32>
    %27 = tpu.matmul %25, %26, %cst_20 {dimension_numbers = #tpu.dot_dimension_numbers<[1], [0], [0], [1], [0, 0, 1, 1], [], []>} : vector<16x256xbf16>, vector<256x128xbf16>, vector<16x128xf32> -> vector<16x128xf32>
    %c0_21 = arith.constant 0 : index
    %c0_22 = arith.constant 0 : index
    %28 = vector.load %arg9[%c0_21, %c0_22] : memref<1x128xf32, #tpu.memory_space<vmem>>, vector<1x128xf32>
    %29 = vector.broadcast %28 : vector<1x128xf32> to vector<16x128xf32>
    %30 = arith.addf %27, %29 : vector<16x128xf32>
    %cst_23 = arith.constant 0.000000e+00 : f32
    %31 = vector.broadcast %cst_23 : f32 to vector<16x128xf32>
    %32 = arith.maximumf %30, %31 : vector<16x128xf32>
    %33 = arith.truncf %32 : vector<16x128xf32> to vector<16x128xbf16>
    %c0_24 = arith.constant 0 : index
    %c0_25 = arith.constant 0 : index
    %34 = vector.load %arg10[%c0_24, %c0_25] : memref<128x128xbf16, #tpu.memory_space<vmem>>, vector<128x128xbf16>
    %cst_26 = arith.constant dense<0.000000e+00> : vector<16x128xf32>
    %35 = tpu.matmul %33, %34, %cst_26 {dimension_numbers = #tpu.dot_dimension_numbers<[1], [0], [0], [1], [0, 0, 1, 1], [], []>} : vector<16x128xbf16>, vector<128x128xbf16>, vector<16x128xf32> -> vector<16x128xf32>
    %c0_27 = arith.constant 0 : index
    %c0_28 = arith.constant 0 : index
    %36 = vector.load %arg11[%c0_27, %c0_28] : memref<1x128xf32, #tpu.memory_space<vmem>>, vector<1x128xf32>
    %37 = vector.broadcast %36 : vector<1x128xf32> to vector<16x128xf32>
    %38 = arith.addf %35, %37 : vector<16x128xf32>
    %c0_29 = arith.constant 0 : index
    %c0_30 = arith.constant 0 : index
    %39 = vector.load %arg12[%c0_29, %c0_30] : memref<16x128xf32, #tpu.memory_space<vmem>>, vector<16x128xf32>
    tpu.vector_store %arg12[%c0_29, %c0_30], %38 {strides = array<i32>} : memref<16x128xf32, #tpu.memory_space<vmem>>, vector<16x128xf32>,
    return
  }
  func.func @transform_0(%arg0: i32) -> (i32, i32) {
    %c0_i32 = arith.constant 0 : i32
    %c0_i32_0 = arith.constant 0 : i32
    return %arg0, %c0_i32 : i32, i32
  }
  func.func @transform_1(%arg0: i32) -> (i32, i32) {
    %c0_i32 = arith.constant 0 : i32
    %c0_i32_0 = arith.constant 0 : i32
    %c0_i32_1 = arith.constant 0 : i32
    return %c0_i32, %c0_i32_0 : i32, i32
  }
  func.func @transform_2(%arg0: i32) -> (i32, i32) {
    %c0_i32 = arith.constant 0 : i32
    %c0_i32_0 = arith.constant 0 : i32
    %c0_i32_1 = arith.constant 0 : i32
    return %c0_i32, %c0_i32_0 : i32, i32
  }
  func.func @transform_3(%arg0: i32) -> (i32, i32) {
    %c0_i32 = arith.constant 0 : i32
    %c0_i32_0 = arith.constant 0 : i32
    %c0_i32_1 = arith.constant 0 : i32
    return %c0_i32, %c0_i32_0 : i32, i32
  }
  func.func @transform_4(%arg0: i32) -> (i32, i32) {
    %c0_i32 = arith.constant 0 : i32
    %c0_i32_0 = arith.constant 0 : i32
    %c0_i32_1 = arith.constant 0 : i32
    return %c0_i32, %c0_i32_0 : i32, i32
  }
  func.func @transform_5(%arg0: i32) -> (i32, i32) {
    %c0_i32 = arith.constant 0 : i32
    %c0_i32_0 = arith.constant 0 : i32
    %c0_i32_1 = arith.constant 0 : i32
    return %c0_i32, %c0_i32_0 : i32, i32
  }
  func.func @transform_6(%arg0: i32) -> (i32, i32) {
    %c0_i32 = arith.constant 0 : i32
    %c0_i32_0 = arith.constant 0 : i32
    %c0_i32_1 = arith.constant 0 : i32
    return %c0_i32, %c0_i32_0 : i32, i32
  }
  func.func @transform_7(%arg0: i32) -> (i32, i32) {
    %c0_i32 = arith.constant 0 : i32
    %c0_i32_0 = arith.constant 0 : i32
    %c0_i32_1 = arith.constant 0 : i32
    return %c0_i32, %c0_i32_0 : i32, i32
  }
  func.func @transform_8(%arg0: i32) -> (i32, i32) {
    %c0_i32 = arith.constant 0 : i32
    %c0_i32_0 = arith.constant 0 : i32
    %c0_i32_1 = arith.constant 0 : i32
    return %c0_i32, %c0_i32_0 : i32, i32
  }
  func.func @transform_9(%arg0: i32) -> (i32, i32) {
    %c0_i32 = arith.constant 0 : i32
    %c0_i32_0 = arith.constant 0 : i32
    %c0_i32_1 = arith.constant 0 : i32
    return %c0_i32, %c0_i32_0 : i32, i32
  }
  func.func @transform_10(%arg0: i32) -> (i32, i32) {
    %c0_i32 = arith.constant 0 : i32
    %c0_i32_0 = arith.constant 0 : i32
    %c0_i32_1 = arith.constant 0 : i32
    return %c0_i32, %c0_i32_0 : i32, i32
  }
  func.func @transform_11(%arg0: i32) -> (i32, i32) {
    %c0_i32 = arith.constant 0 : i32
    %c0_i32_0 = arith.constant 0 : i32
    return %arg0, %c0_i32 : i32, i32
  }
}

module attributes {stable_mosaic.version = 11 : i64} {
  func.func @actor_critic_kernel(%arg0: i32, %arg1: memref<16x32xf32, #tpu.memory_space<vmem>>, %arg2: memref<32x1024xbf16, #tpu.memory_space<vmem>>, %arg3: memref<1x1024xf32, #tpu.memory_space<vmem>>, %arg4: memref<1024x512xbf16, #tpu.memory_space<vmem>>, %arg5: memref<1x512xf32, #tpu.memory_space<vmem>>, %arg6: memref<512x256xbf16, #tpu.memory_space<vmem>>, %arg7: memref<1x256xf32, #tpu.memory_space<vmem>>, %arg8: memref<256x128xbf16, #tpu.memory_space<vmem>>, %arg9: memref<1x128xf32, #tpu.memory_space<vmem>>, %arg10: memref<128x128xbf16, #tpu.memory_space<vmem>>, %arg11: memref<1x128xf32, #tpu.memory_space<vmem>>, %arg12: memref<16x128xf32, #tpu.memory_space<vmem>>) attributes {dimension_semantics = [#tpu.dimension_semantics<arbitrary>], iteration_bounds = array<i64: 1>, scalar_prefetch = 0 : i64, scratch_operands = 0 : i64, tpu.core_type = #tpu.core_type<tc>, window_params = [{transform_indices = @transform_0, window_bounds = array<i64: 16, 32>}, {pipeline_mode = #tpu.pipeline_mode<synchronous>, transform_indices = @transform_1, window_bounds = array<i64: 32, 1024>}, {pipeline_mode = #tpu.pipeline_mode<synchronous>, transform_indices = @transform_2, window_bounds = array<i64: 1, 1024>}, {pipeline_mode = #tpu.pipeline_mode<synchronous>, transform_indices = @transform_3, window_bounds = array<i64: 1024, 512>}, {pipeline_mode = #tpu.pipeline_mode<synchronous>, transform_indices = @transform_4, window_bounds = array<i64: 1, 512>}, {pipeline_mode = #tpu.pipeline_mode<synchronous>, transform_indices = @transform_5, window_bounds = array<i64: 512, 256>}, {pipeline_mode = #tpu.pipeline_mode<synchronous>, transform_indices = @transform_6, window_bounds = array<i64: 1, 256>}, {pipeline_mode = #tpu.pipeline_mode<synchronous>, transform_indices = @transform_7, window_bounds = array<i64: 256, 128>}, {pipeline_mode = #tpu.pipeline_mode<synchronous>, transform_indices = @transform_8, window_bounds = array<i64: 1, 128>}, {pipeline_mode = #tpu.pipeline_mode<synchronous>, transform_indices = @transform_9, window_bounds = array<i64: 128, 128>}, {pipeline_mode = #tpu.pipeline_mode<synchronous>, transform_indices = @transform_10, window_bounds = array<i64: 1, 128>}, {transform_indices = @transform_11, window_bounds = array<i64: 16, 128>}]} {
    %c0 = arith.constant 0 : index
    %c0_0 = arith.constant 0 : index
    %0 = vector.load %arg1[%c0, %c0_0] : memref<16x32xf32, #tpu.memory_space<vmem>>, vector<16x32xf32>
    %1 = arith.truncf %0 : vector<16x32xf32> to vector<16x32xbf16>
    %c0_1 = arith.constant 0 : index
    %c0_2 = arith.constant 0 : index
    %2 = vector.load %arg2[%c0_1, %c0_2] : memref<32x1024xbf16, #tpu.memory_space<vmem>>, vector<32x1024xbf16>
    %cst = arith.constant dense<0.000000e+00> : vector<16x1024xf32>
    %3 = tpu.matmul %1, %2, %cst {dimension_numbers = #tpu.dot_dimension_numbers<[1], [0], [0], [1], [0, 0, 1, 1], [], []>} : vector<16x32xbf16>, vector<32x1024xbf16>, vector<16x1024xf32> -> vector<16x1024xf32>
    %c0_3 = arith.constant 0 : index
    %c0_4 = arith.constant 0 : index
    %4 = vector.load %arg3[%c0_3, %c0_4] : memref<1x1024xf32, #tpu.memory_space<vmem>>, vector<1x1024xf32>
    %5 = vector.broadcast %4 : vector<1x1024xf32> to vector<16x1024xf32>
    %6 = arith.addf %3, %5 : vector<16x1024xf32>
    %cst_5 = arith.constant 0.000000e+00 : f32
    %7 = vector.broadcast %cst_5 : f32 to vector<16x1024xf32>
    %8 = arith.maximumf %6, %7 : vector<16x1024xf32>
    %9 = arith.truncf %8 : vector<16x1024xf32> to vector<16x1024xbf16>
    %c0_6 = arith.constant 0 : index
    %c0_7 = arith.constant 0 : index
    %10 = vector.load %arg4[%c0_6, %c0_7] : memref<1024x512xbf16, #tpu.memory_space<vmem>>, vector<1024x512xbf16>
    %cst_8 = arith.constant dense<0.000000e+00> : vector<16x512xf32>
    %11 = tpu.matmul %9, %10, %cst_8 {dimension_numbers = #tpu.dot_dimension_numbers<[1], [0], [0], [1], [0, 0, 1, 1], [], []>} : vector<16x1024xbf16>, vector<1024x512xbf16>, vector<16x512xf32> -> vector<16x512xf32>
    %c0_9 = arith.constant 0 : index
    %c0_10 = arith.constant 0 : index
    %12 = vector.load %arg5[%c0_9, %c0_10] : memref<1x512xf32, #tpu.memory_space<vmem>>, vector<1x512xf32>
    %13 = vector.broadcast %12 : vector<1x512xf32> to vector<16x512xf32>
    %14 = arith.addf %11, %13 : vector<16x512xf32>
    %cst_11 = arith.constant 0.000000e+00 : f32
    %15 = vector.broadcast %cst_11 : f32 to vector<16x512xf32>
    %16 = arith.maximumf %14, %15 : vector<16x512xf32>
    %17 = arith.truncf %16 : vector<16x512xf32> to vector<16x512xbf16>
    %c0_12 = arith.constant 0 : index
    %c0_13 = arith.constant 0 : index
    %18 = vector.load %arg6[%c0_12, %c0_13] : memref<512x256xbf16, #tpu.memory_space<vmem>>, vector<512x256xbf16>
    %cst_14 = arith.constant dense<0.000000e+00> : vector<16x256xf32>
    %19 = tpu.matmul %17, %18, %cst_14 {dimension_numbers = #tpu.dot_dimension_numbers<[1], [0], [0], [1], [0, 0, 1, 1], [], []>} : vector<16x512xbf16>, vector<512x256xbf16>, vector<16x256xf32> -> vector<16x256xf32>
    %c0_15 = arith.constant 0 : index
    %c0_16 = arith.constant 0 : index
    %20 = vector.load %arg7[%c0_15, %c0_16] : memref<1x256xf32, #tpu.memory_space<vmem>>, vector<1x256xf32>
    %21 = vector.broadcast %20 : vector<1x256xf32> to vector<16x256xf32>
    %22 = arith.addf %19, %21 : vector<16x256xf32>
    %cst_17 = arith.constant 0.000000e+00 : f32
    %23 = vector.broadcast %cst_17 : f32 to vector<16x256xf32>
    %24 = arith.maximumf %22, %23 : vector<16x256xf32>
    %25 = arith.truncf %24 : vector<16x256xf32> to vector<16x256xbf16>
    %c0_18 = arith.constant 0 : index
    %c0_19 = arith.constant 0 : index
    %26 = vector.load %arg8[%c0_18, %c0_19] : memref<256x128xbf16, #tpu.memory_space<vmem>>, vector<256x128xbf16>
    %cst_20 = arith.constant dense<0.000000e+00> : vector<16x128xf32>
    %27 = tpu.matmul %25, %26, %cst_20 {dimension_numbers = #tpu.dot_dimension_numbers<[1], [0], [0], [1], [0, 0, 1, 1], [], []>} : vector<16x256xbf16>, vector<256x128xbf16>, vector<16x128xf32> -> vector<16x128xf32>
    %c0_21 = arith.constant 0 : index
    %c0_22 = arith.constant 0 : index
    %28 = vector.load %arg9[%c0_21, %c0_22] : memref<1x128xf32, #tpu.memory_space<vmem>>, vector<1x128xf32>
    %29 = vector.broadcast %28 : vector<1x128xf32> to vector<16x128xf32>
    %30 = arith.addf %27, %29 : vector<16x128xf32>
    %cst_23 = arith.constant 0.000000e+00 : f32
    %31 = vector.broadcast %cst_23 : f32 to vector<16x128xf32>
    %32 = arith.maximumf %30, %31 : vector<16x128xf32>
    %33 = arith.truncf %32 : vector<16x128xf32> to vector<16x128xbf16>
    %c0_24 = arith.constant 0 : index
    %c0_25 = arith.constant 0 : index
    %34 = vector.load %arg10[%c0_24, %c0_25] : memref<128x128xbf16, #tpu.memory_space<vmem>>, vector<128x128xbf16>
    %cst_26 = arith.constant dense<0.000000e+00> : vector<16x128xf32>
    %35 = tpu.matmul %33, %34, %cst_26 {dimension_numbers = #tpu.dot_dimension_numbers<[1], [0], [0], [1], [0, 0, 1, 1], [], []>} : vector<16x128xbf16>, vector<128x128xbf16>, vector<16x128xf32> -> vector<16x128xf32>
    %c0_27 = arith.constant 0 : index
    %c0_28 = arith.constant 0 : index
    %36 = vector.load %arg11[%c0_27, %c0_28] : memref<1x128xf32, #tpu.memory_space<vmem>>, vector<1x128xf32>
    %37 = vector.broadcast %36 : vector<1x128xf32> to vector<16x128xf32>
    %38 = arith.addf %35, %37 : vector<16x128xf32>
    %c0_29 = arith.constant 0 : index
    %c0_30 = arith.constant 0 : index
    %39 = vector.load %arg12[%c0_29, %c0_30] : memref<16x128xf32, #tpu.memory_space<vmem>>, vector<16x128xf32>
    tpu.vector_store %arg12[%c0_29, %c0_30], %38 {strides = array<i32>} : memref<16x128xf32, #tpu.memory_space<vmem>>, vector<16x128xf32>,
    return
  }
  func.func @transform_0(%arg0: i32) -> (i32, i32) {
    %c0_i32 = arith.constant 0 : i32
    %c0_i32_0 = arith.constant 0 : i32
    return %arg0, %c0_i32 : i32, i32
  }
  func.func @transform_1(%arg0: i32) -> (i32, i32) {
    %c0_i32 = arith.constant 0 : i32
    %c0_i32_0 = arith.constant 0 : i32
    %c0_i32_1 = arith.constant 0 : i32
    return %c0_i32, %c0_i32_0 : i32, i32
  }
  func.func @transform_2(%arg0: i32) -> (i32, i32) {
    %c0_i32 = arith.constant 0 : i32
    %c0_i32_0 = arith.constant 0 : i32
    %c0_i32_1 = arith.constant 0 : i32
    return %c0_i32, %c0_i32_0 : i32, i32
  }
  func.func @transform_3(%arg0: i32) -> (i32, i32) {
    %c0_i32 = arith.constant 0 : i32
    %c0_i32_0 = arith.constant 0 : i32
    %c0_i32_1 = arith.constant 0 : i32
    return %c0_i32, %c0_i32_0 : i32, i32
  }
  func.func @transform_4(%arg0: i32) -> (i32, i32) {
    %c0_i32 = arith.constant 0 : i32
    %c0_i32_0 = arith.constant 0 : i32
    %c0_i32_1 = arith.constant 0 : i32
    return %c0_i32, %c0_i32_0 : i32, i32
  }
  func.func @transform_5(%arg0: i32) -> (i32, i32) {
    %c0_i32 = arith.constant 0 : i32
    %c0_i32_0 = arith.constant 0 : i32
    %c0_i32_1 = arith.constant 0 : i32
    return %c0_i32, %c0_i32_0 : i32, i32
  }
  func.func @transform_6(%arg0: i32) -> (i32, i32) {
    %c0_i32 = arith.constant 0 : i32
    %c0_i32_0 = arith.constant 0 : i32
    %c0_i32_1 = arith.constant 0 : i32
    return %c0_i32, %c0_i32_0 : i32, i32
  }
  func.func @transform_7(%arg0: i32) -> (i32, i32) {
    %c0_i32 = arith.constant 0 : i32
    %c0_i32_0 = arith.constant 0 : i32
    %c0_i32_1 = arith.constant 0 : i32
    return %c0_i32, %c0_i32_0 : i32, i32
  }
  func.func @transform_8(%arg0: i32) -> (i32, i32) {
    %c0_i32 = arith.constant 0 : i32
    %c0_i32_0 = arith.constant 0 : i32
    %c0_i32_1 = arith.constant 0 : i32
    return %c0_i32, %c0_i32_0 : i32, i32
  }
  func.func @transform_9(%arg0: i32) -> (i32, i32) {
    %c0_i32 = arith.constant 0 : i32
    %c0_i32_0 = arith.constant 0 : i32
    %c0_i32_1 = arith.constant 0 : i32
    return %c0_i32, %c0_i32_0 : i32, i32
  }
  func.func @transform_10(%arg0: i32) -> (i32, i32) {
    %c0_i32 = arith.constant 0 : i32
    %c0_i32_0 = arith.constant 0 : i32
    %c0_i32_1 = arith.constant 0 : i32
    return %c0_i32, %c0_i32_0 : i32, i32
  }
  func.func @transform_11(%arg0: i32) -> (i32, i32) {
    %c0_i32 = arith.constant 0 : i32
    %c0_i32_0 = arith.constant 0 : i32
    return %arg0, %c0_i32 : i32, i32
  }
}

</mosaic_0001>

<llo_original>
// kernel: tpu_custom_call.1
$region0: #{tpu_custom_call.1}
  #allocation0 [shape = 'u32[]', space=smem, size = 0x4, offset = 0x4, fixed_abs, tag = 'smem constant byte address 0x4 - core index']
  #allocation1 [shape = 'u32[144,128]{1,0:T(1,128)}', space=vmem, size = 0x12000, scoped, tag = 'internal scratch']
  %s0 = inlined_call_operand.hbm [shape: f32[16,32], index: 0, kind: input, shape index: {}]
  %s1 = inlined_call_operand.hbm [shape: bf16[32,1024], index: 1, kind: input, shape index: {}]
  %s2 = inlined_call_operand.hbm [shape: f32[1,1024], index: 2, kind: input, shape index: {}]
  %s3 = inlined_call_operand.hbm [shape: bf16[1024,512], index: 3, kind: input, shape index: {}]
  %s4 = inlined_call_operand.vmem [shape: f32[1,512], index: 4, kind: input, shape index: {}]
  %s5 = inlined_call_operand.hbm [shape: bf16[512,256], index: 5, kind: input, shape index: {}]
  %s6 = inlined_call_operand.vmem [shape: f32[1,256], index: 6, kind: input, shape index: {}]
  %s7 = inlined_call_operand.hbm [shape: bf16[256,128], index: 7, kind: input, shape index: {}]
  %s8 = inlined_call_operand.vmem [shape: f32[1,128], index: 8, kind: input, shape index: {}]
  %s9 = inlined_call_operand.hbm [shape: bf16[128,128], index: 9, kind: input, shape index: {}]
  %s10 = inlined_call_operand.vmem [shape: f32[1,128], index: 10, kind: input, shape index: {}]
  %s11 = inlined_call_operand.hbm [shape: f32[16,128], index: 11, kind: output, shape index: {}]
  %s12 = sld [smem:[#allocation0]]
  $region82: #{tpu_custom_call.1} parent=0
    _
  %s14 = ssub.s32 1, %s12
  %s15 = scalar_select 0, %s14, %s12
  $region1: #{tpu_custom_call.1} parent=0
    #allocation2 [shape = 'u8[8192]{0}', space=vmem, size = 0x2000, scoped, tag = 'input window, operand 0, single buffered']
    #allocation3 [shape = 's32[1]{0}', space=sflag, size = 0x4, scoped, tag = 'scoped memory for tpu_custom_call.1']
    #allocation4 [shape = 's32[1]{0}', space=sflag, size = 0x4, scoped, tag = 'scoped memory for tpu_custom_call.1']
    #allocation5 [shape = 'u8[65536]{0}', space=vmem, size = 0x10000, scoped, tag = 'input window, operand 1, single buffered']
    #allocation6 [shape = 's32[1]{0}', space=sflag, size = 0x4, scoped, tag = 'scoped memory for tpu_custom_call.1']
    #allocation7 [shape = 'u8[4096]{0}', space=vmem, size = 0x1000, scoped, tag = 'input window, operand 2, single buffered']
    #allocation8 [shape = 'u8[1048576]{0}', space=vmem, size = 0x100000, scoped, tag = 'input window, operand 3, single buffered']
    #allocation9 [shape = 's32[1]{0}', space=sflag, size = 0x4, scoped, tag = 'scoped memory for tpu_custom_call.1']
    #allocation10 [shape = 'u8[262144]{0}', space=vmem, size = 0x40000, scoped, tag = 'input window, operand 5, single buffered']
    #allocation11 [shape = 'u8[65536]{0}', space=vmem, size = 0x10000, scoped, tag = 'input window, operand 7, single buffered']
    #allocation12 [shape = 's32[1]{0}', space=sflag, size = 0x4, scoped, tag = 'scoped memory for tpu_custom_call.1']
    #allocation13 [shape = 'u8[32768]{0}', space=vmem, size = 0x8000, scoped, tag = 'input window, operand 9, single buffered']
    #allocation14 [shape = 'u8[8192]{0}', space=vmem, size = 0x2000, scoped, tag = 'output window, operand 0, single buffered']
    %16 = vsyncpa [#allocation3], 0
    %17 = vsyncpa [#allocation6], 0
    %18 = vsyncpa [#allocation9], 0
    %19 = vsyncpa [#allocation12], 0
    %20 = vsyncpa [#allocation4], 0
    // Predicated region
    $region2: #{tpu_custom_call.1} parent=1 // pred_check
      _
    $region3: #{tpu_custom_call.1} parent=1 // pred_check_branch
      %22 = sbr.rel (0) target = $region5
    $region4: #{tpu_custom_call.1} parent=1 // pred_region
      %s24 = ssub.s32 256, 256
      %25 = vsyncadd [#allocation3], %s24
      %s26 = sshll.u32 [#allocation2], 4
      %s27 = int_to_ptr.vmem [resolvable:$true] %s26
      %32 = dma.hbm_to_vmem [thread:$0]  %s0, 256, %s27, [#allocation3], 128, 128, 8
    $region5: #{tpu_custom_call.1} parent=1 // pred_fallthru
      _
    // Predicated region
    $region6: #{tpu_custom_call.1} parent=1 // pred_check
      _
    $region7: #{tpu_custom_call.1} parent=1 // pred_check_branch
      %34 = sbr.rel (0) target = $region9
    $region8: #{tpu_custom_call.1} parent=1 // pred_region
      %s36 = ssub.s32 2048, 2048
      %37 = vsyncadd [#allocation6], %s36
      %s38 = sshll.u32 [#allocation5], 4
      %s39 = int_to_ptr.vmem [resolvable:$true] %s38
      %44 = dma.hbm_to_vmem [thread:$0]  %s1, 2048, %s39, [#allocation6], 512, 512, 32
    $region9: #{tpu_custom_call.1} parent=1 // pred_fallthru
      _
    // Predicated region
    $region10: #{tpu_custom_call.1} parent=1 // pred_check
      _
    $region11: #{tpu_custom_call.1} parent=1 // pred_check_branch
      %46 = sbr.rel (0) target = $region13
    $region12: #{tpu_custom_call.1} parent=1 // pred_region
      %s48 = ssub.s32 128, 128
      %49 = vsyncadd [#allocation6], %s48
      %s51 = sshll.u32 [#allocation7], 4
      %s52 = int_to_ptr.vmem [resolvable:$true] %s51
      %54 = dma.hbm_to_vmem [thread:$0]  %s2, 128, %s52, [#allocation6]
    $region13: #{tpu_custom_call.1} parent=1 // pred_fallthru
      _
    // Predicated region
    $region14: #{tpu_custom_call.1} parent=1 // pred_check
      _
    $region15: #{tpu_custom_call.1} parent=1 // pred_check_branch
      %56 = sbr.rel (0) target = $region17
    $region16: #{tpu_custom_call.1} parent=1 // pred_region
      %s58 = ssub.s32 32768, 32768
      %59 = vsyncadd [#allocation9], %s58
      %s60 = sshll.u32 [#allocation8], 4
      %s61 = int_to_ptr.vmem [resolvable:$true] %s60
      %66 = dma.hbm_to_vmem [thread:$0]  %s3, 32768, %s61, [#allocation9], 256, 256, 16
    $region17: #{tpu_custom_call.1} parent=1 // pred_fallthru
      _
    // Predicated region
    $region18: #{tpu_custom_call.1} parent=1 // pred_check
      _
    $region19: #{tpu_custom_call.1} parent=1 // pred_check_branch
      %68 = sbr.rel (0) target = $region21
    $region20: #{tpu_custom_call.1} parent=1 // pred_region
      _
    $region21: #{tpu_custom_call.1} parent=1 // pred_fallthru
      _
    // Predicated region
    $region22: #{tpu_custom_call.1} parent=1 // pred_check
      _
    $region23: #{tpu_custom_call.1} parent=1 // pred_check_branch
      %70 = sbr.rel (0) target = $region25
    $region24: #{tpu_custom_call.1} parent=1 // pred_region
      %s72 = ssub.s32 8192, 8192
      %73 = vsyncadd [#allocation9], %s72
      %s74 = sshll.u32 [#allocation10], 4
      %s75 = int_to_ptr.vmem [resolvable:$true] %s74
      %80 = dma.hbm_to_vmem [thread:$0]  %s5, 8192, %s75, [#allocation9], 128, 128, 8
    $region25: #{tpu_custom_call.1} parent=1 // pred_fallthru
      _
    // Predicated region
    $region26: #{tpu_custom_call.1} parent=1 // pred_check
      _
    $region27: #{tpu_custom_call.1} parent=1 // pred_check_branch
      %82 = sbr.rel (0) target = $region29
    $region28: #{tpu_custom_call.1} parent=1 // pred_region
      _
    $region29: #{tpu_custom_call.1} parent=1 // pred_fallthru
      _
    // Predicated region
    $region30: #{tpu_custom_call.1} parent=1 // pred_check
      _
    $region31: #{tpu_custom_call.1} parent=1 // pred_check_branch
      %84 = sbr.rel (0) target = $region33
    $region32: #{tpu_custom_call.1} parent=1 // pred_region
      %s86 = ssub.s32 2048, 2048
      %87 = vsyncadd [#allocation12], %s86
      %s88 = sshll.u32 [#allocation11], 4
      %s89 = int_to_ptr.vmem [resolvable:$true] %s88
      %94 = dma.hbm_to_vmem [thread:$0]  %s7, 2048, %s89, [#allocation12], 64, 64, 4
    $region33: #{tpu_custom_call.1} parent=1 // pred_fallthru
      _
    // Predicated region
    $region34: #{tpu_custom_call.1} parent=1 // pred_check
      _
    $region35: #{tpu_custom_call.1} parent=1 // pred_check_branch
      %96 = sbr.rel (0) target = $region37
    $region36: #{tpu_custom_call.1} parent=1 // pred_region
      _
    $region37: #{tpu_custom_call.1} parent=1 // pred_fallthru
      _
    // Predicated region
    $region38: #{tpu_custom_call.1} parent=1 // pred_check
      _
    $region39: #{tpu_custom_call.1} parent=1 // pred_check_branch
      %98 = sbr.rel (0) target = $region41
    $region40: #{tpu_custom_call.1} parent=1 // pred_region
      %s100 = ssub.s32 1024, 1024
      %101 = vsyncadd [#allocation12], %s100
      %s102 = sshll.u32 [#allocation13], 4
      %s103 = int_to_ptr.vmem [resolvable:$true] %s102
      %108 = dma.hbm_to_vmem [thread:$0]  %s9, 1024, %s103, [#allocation12], 64, 64, 4
    $region41: #{tpu_custom_call.1} parent=1 // pred_fallthru
      _
    // Predicated region
    $region42: #{tpu_custom_call.1} parent=1 // pred_check
      _
    $region43: #{tpu_custom_call.1} parent=1 // pred_check_branch
      %110 = sbr.rel (0) target = $region45
    $region44: #{tpu_custom_call.1} parent=1 // pred_region
      _
    $region45: #{tpu_custom_call.1} parent=1 // pred_fallthru
      _
    // Predicated region
    $region46: #{tpu_custom_call.1} parent=1 // pred_check
      _
    $region47: #{tpu_custom_call.1} parent=1 // pred_check_branch
      %112 = sbr.rel (0) target = $region49
    $region48: #{tpu_custom_call.1} parent=1 // pred_region
      %113 = dma.done [#allocation3], 256
    $region49: #{tpu_custom_call.1} parent=1 // pred_fallthru
      _
    // Predicated region
    $region50: #{tpu_custom_call.1} parent=1 // pred_check
      _
    $region51: #{tpu_custom_call.1} parent=1 // pred_check_branch
      %115 = sbr.rel (0) target = $region53
    $region52: #{tpu_custom_call.1} parent=1 // pred_region
      %116 = dma.done [#allocation6], 2048
    $region53: #{tpu_custom_call.1} parent=1 // pred_fallthru
      _
    // Predicated region
    $region54: #{tpu_custom_call.1} parent=1 // pred_check
      _
    $region55: #{tpu_custom_call.1} parent=1 // pred_check_branch
      %118 = sbr.rel (0) target = $region57
    $region56: #{tpu_custom_call.1} parent=1 // pred_region
      %119 = dma.done [#allocation6], 128
    $region57: #{tpu_custom_call.1} parent=1 // pred_fallthru
      _
    // Predicated region
    $region58: #{tpu_custom_call.1} parent=1 // pred_check
      _
    $region59: #{tpu_custom_call.1} parent=1 // pred_check_branch
      %121 = sbr.rel (0) target = $region61
    $region60: #{tpu_custom_call.1} parent=1 // pred_region
      %122 = dma.done [#allocation9], 32768
    $region61: #{tpu_custom_call.1} parent=1 // pred_fallthru
      _
    // Predicated region
    $region62: #{tpu_custom_call.1} parent=1 // pred_check
      _
    $region63: #{tpu_custom_call.1} parent=1 // pred_check_branch
      %124 = sbr.rel (0) target = $region65
    $region64: #{tpu_custom_call.1} parent=1 // pred_region
      %125 = dma.done [#allocation9], 8192
    $region65: #{tpu_custom_call.1} parent=1 // pred_fallthru
      _
    // Predicated region
    $region66: #{tpu_custom_call.1} parent=1 // pred_check
      _
    $region67: #{tpu_custom_call.1} parent=1 // pred_check_branch
      %127 = sbr.rel (0) target = $region69
    $region68: #{tpu_custom_call.1} parent=1 // pred_region
      %128 = dma.done [#allocation12], 2048
    $region69: #{tpu_custom_call.1} parent=1 // pred_fallthru
      _
    // Predicated region
    $region70: #{tpu_custom_call.1} parent=1 // pred_check
      _
    $region71: #{tpu_custom_call.1} parent=1 // pred_check_branch
      %130 = sbr.rel (0) target = $region73
    $region72: #{tpu_custom_call.1} parent=1 // pred_region
      %131 = dma.done [#allocation12], 1024
    $region73: #{tpu_custom_call.1} parent=1 // pred_fallthru
      _
    %v133 = vld [vmem:[#allocation2] sm:$0xff]
    %v134 = vld [vmem:[#allocation2 + $0x8] sm:$0xff]
    %v135 = vpack.c.bf16 %v134, %v133
    %v136 = vld [vmem:[#allocation5] sm:$0xff]
    %v137 = vld [vmem:[#allocation5 + $0x8] sm:$0xff]
    %v138 = vld [vmem:[#allocation5 + $0x10] sm:$0xff]
    %v139 = vld [vmem:[#allocation5 + $0x18] sm:$0xff]
    %v140 = vld [vmem:[#allocation5 + $0x20] sm:$0xff]
    %v141 = vld [vmem:[#allocation5 + $0x28] sm:$0xff]
    %v142 = vld [vmem:[#allocation5 + $0x30] sm:$0xff]
    %v143 = vld [vmem:[#allocation5 + $0x38] sm:$0xff]
    %v144 = vld [vmem:[#allocation5 + $0x40] sm:$0xff]
    %v145 = vld [vmem:[#allocation5 + $0x48] sm:$0xff]
    %v146 = vld [vmem:[#allocation5 + $0x50] sm:$0xff]
    %v147 = vld [vmem:[#allocation5 + $0x58] sm:$0xff]
    %v148 = vld [vmem:[#allocation5 + $0x60] sm:$0xff]
    %v149 = vld [vmem:[#allocation5 + $0x68] sm:$0xff]
    %v150 = vld [vmem:[#allocation5 + $0x70] sm:$0xff]
    %v151 = vld [vmem:[#allocation5 + $0x78] sm:$0xff]
    %v152 = vld [vmem:[#allocation7] sm:$0xff]
    %v154 = vlaneseq
    %v155 = vshrl.u32 %v154, 7
    %v156 = vsub.s32 0, %v155
    %v157 = vrot.slane %v152, %v156
    %v158 = vlaneseq
    %v159 = vshrl.u32 %v158, 7
    %v160 = vsub.s32 1, %v159
    %v161 = vrot.slane %v152, %v160
    %v162 = vlaneseq
    %v163 = vshrl.u32 %v162, 7
    %v164 = vsub.s32 2, %v163
    %v165 = vrot.slane %v152, %v164
    %v166 = vlaneseq
    %v167 = vshrl.u32 %v166, 7
    %v168 = vsub.s32 3, %v167
    %v169 = vrot.slane %v152, %v168
    %v170 = vlaneseq
    %v171 = vshrl.u32 %v170, 7
    %v172 = vsub.s32 4, %v171
    %v173 = vrot.slane %v152, %v172
    %v174 = vlaneseq
    %v175 = vshrl.u32 %v174, 7
    %v176 = vsub.s32 5, %v175
    %v177 = vrot.slane %v152, %v176
    %v178 = vlaneseq
    %v179 = vshrl.u32 %v178, 7
    %v180 = vsub.s32 6, %v179
    %v181 = vrot.slane %v152, %v180
    %v182 = vlaneseq
    %v183 = vshrl.u32 %v182, 7
    %v184 = vsub.s32 7, %v183
    %v185 = vrot.slane %v152, %v184
    %v210 = vunpack.c.l.b16 %v136
    %v211 = vunpack.c.h.b16 %v136
    %v212 = vunpack.c.l.b16 %v137
    %v213 = vunpack.c.h.b16 %v137
    %v214 = vunpack.c.l.b16 %v138
    %v215 = vunpack.c.h.b16 %v138
    %v216 = vunpack.c.l.b16 %v139
    %v217 = vunpack.c.h.b16 %v139
    %v218 = vunpack.c.l.b16 %v140
    %v219 = vunpack.c.h.b16 %v140
    %v220 = vunpack.c.l.b16 %v141
    %v221 = vunpack.c.h.b16 %v141
    %v222 = vunpack.c.l.b16 %v142
    %v223 = vunpack.c.h.b16 %v142
    %v224 = vunpack.c.l.b16 %v143
    %v225 = vunpack.c.h.b16 %v143
    %v226 = vunpack.c.l.b16 %v144
    %v227 = vunpack.c.h.b16 %v144
    %v228 = vunpack.c.l.b16 %v145
    %v229 = vunpack.c.h.b16 %v145
    %v230 = vunpack.c.l.b16 %v146
    %v231 = vunpack.c.h.b16 %v146
    %v232 = vunpack.c.l.b16 %v147
    %v233 = vunpack.c.h.b16 %v147
    %v234 = vunpack.c.l.b16 %v148
    %v235 = vunpack.c.h.b16 %v148
    %v236 = vunpack.c.l.b16 %v149
    %v237 = vunpack.c.h.b16 %v149
    %v238 = vunpack.c.l.b16 %v150
    %v239 = vunpack.c.h.b16 %v150
    %v240 = vunpack.c.l.b16 %v151
    %v241 = vunpack.c.h.b16 %v151
    %v242 = vpack.c.b16 %v218, %v210
    %v243 = vpack.c.b16 %v219, %v211
    %v244 = vpack.c.b16 %v220, %v212
    %v245 = vpack.c.b16 %v221, %v213
    %v246 = vpack.c.b16 %v222, %v214
    %v247 = vpack.c.b16 %v223, %v215
    %v248 = vpack.c.b16 %v224, %v216
    %v249 = vpack.c.b16 %v225, %v217
    %v250 = vpack.c.b16 %v234, %v226
    %v251 = vpack.c.b16 %v235, %v227
    %v252 = vpack.c.b16 %v236, %v228
    %v253 = vpack.c.b16 %v237, %v229
    %v254 = vpack.c.b16 %v238, %v230
    %v255 = vpack.c.b16 %v239, %v231
    %v256 = vpack.c.b16 %v240, %v232
    %v257 = vpack.c.b16 %v241, %v233
    %vm274 = vcmask 261120
    %v276 = vsel %vm274, %v135, 0
    %278 = vmatprep.subr.bf16.mxu0 %v243
    %279 = vmatpush1.bf16.msra.mxu0 %v242
    %280 = vmatprep.subr.bf16.mxu0 %v251
    %281 = vmatpush1.bf16.msra.mxu0 %v250
    %282 = vmatprep.subr.bf16.mxu0 0
    %283 = vmatpush1.bf16.msra.mxu0 0
    %284 = vmatprep.subr.bf16.mxu0 0
    %285 = vmatpush1.bf16.msra.mxu0 0
    %286 = vmatprep.subr.bf16.mxu0 0
    %287 = vmatpush1.bf16.msra.mxu0 0
    %288 = vmatprep.subr.bf16.mxu0 0
    %289 = vmatpush1.bf16.msra.mxu0 0
    %290 = vmatprep.subr.bf16.mxu0 0
    %291 = vmatpush1.bf16.msra.mxu0 0
    %292 = vmatprep.subr.bf16.mxu0 0
    %293 = vmatpush1.bf16.msra.mxu0 0
    %294 = vmatprep.subr.bf16.mxu0 0
    %295 = vmatpush1.bf16.msra.mxu0 0
    %296 = vmatprep.subr.bf16.mxu0 0
    %297 = vmatpush1.bf16.msra.mxu0 0
    %298 = vmatprep.subr.bf16.mxu0 0
    %299 = vmatpush1.bf16.msra.mxu0 0
    %300 = vmatprep.subr.bf16.mxu0 0
    %301 = vmatpush1.bf16.msra.mxu0 0
    %302 = vmatprep.subr.bf16.mxu0 0
    %303 = vmatpush1.bf16.msra.mxu0 0
    %304 = vmatprep.subr.bf16.mxu0 0
    %305 = vmatpush1.bf16.msra.mxu0 0
    %306 = vmatprep.subr.bf16.mxu0 0
    %307 = vmatpush1.bf16.msra.mxu0 0
    %308 = vmatprep.subr.bf16.mxu0 0
    %309 = vmatpush1.bf16.msra.mxu0 0
    %310 = vmatprep.mubr.bf16.mxu0 0
    %311 = vmatmul.mubr.bf16.gmra.mrb[0].mxu0 %v276
    %v312 = vpop.f32.mrb[0].mxu0
    %v313 = vadd.f32 %v157, %v312
    %v314 = vpop.f32.mrb[0].mxu0
    %v315 = vadd.f32 %v161, %v314
    %v316 = vpop.f32.mrb[0].mxu0
    %v317 = vadd.f32 %v157, %v316
    %v318 = vpop.f32.mrb[0].mxu0
    %v319 = vadd.f32 %v161, %v318
    %320 = vdwg.mxu0
    %321 = vmatprep.subr.bf16.mxu0 %v245
    %322 = vmatpush1.bf16.msra.mxu0 %v244
    %323 = vmatprep.subr.bf16.mxu0 %v253
    %324 = vmatpush1.bf16.msra.mxu0 %v252
    %325 = vmatprep.subr.bf16.mxu0 0
    %326 = vmatpush1.bf16.msra.mxu0 0
    %327 = vmatprep.subr.bf16.mxu0 0
    %328 = vmatpush1.bf16.msra.mxu0 0
    %329 = vmatprep.subr.bf16.mxu0 0
    %330 = vmatpush1.bf16.msra.mxu0 0
    %331 = vmatprep.subr.bf16.mxu0 0
    %332 = vmatpush1.bf16.msra.mxu0 0
    %333 = vmatprep.subr.bf16.mxu0 0
    %334 = vmatpush1.bf16.msra.mxu0 0
    %335 = vmatprep.subr.bf16.mxu0 0
    %336 = vmatpush1.bf16.msra.mxu0 0
    %337 = vmatprep.subr.bf16.mxu0 0
    %338 = vmatpush1.bf16.msra.mxu0 0
    %339 = vmatprep.subr.bf16.mxu0 0
    %340 = vmatpush1.bf16.msra.mxu0 0
    %341 = vmatprep.subr.bf16.mxu0 0
    %342 = vmatpush1.bf16.msra.mxu0 0
    %343 = vmatprep.subr.bf16.mxu0 0
    %344 = vmatpush1.bf16.msra.mxu0 0
    %345 = vmatprep.subr.bf16.mxu0 0
    %346 = vmatpush1.bf16.msra.mxu0 0
    %347 = vmatprep.subr.bf16.mxu0 0
    %348 = vmatpush1.bf16.msra.mxu0 0
    %349 = vmatprep.subr.bf16.mxu0 0
    %350 = vmatpush1.bf16.msra.mxu0 0
    %351 = vmatprep.subr.bf16.mxu0 0
    %352 = vmatpush1.bf16.msra.mxu0 0
    %353 = vmatprep.mubr.bf16.mxu0 0
    %354 = vmatmul.mubr.bf16.gmra.mrb[0].mxu0 %v276
    %v355 = vpop.f32.mrb[0].mxu0
    %v356 = vadd.f32 %v165, %v355
    %v357 = vpop.f32.mrb[0].mxu0
    %v358 = vadd.f32 %v169, %v357
    %v359 = vpop.f32.mrb[0].mxu0
    %v360 = vadd.f32 %v165, %v359
    %v361 = vpop.f32.mrb[0].mxu0
    %v362 = vadd.f32 %v169, %v361
    %363 = vdwg.mxu0
    %364 = vmatprep.subr.bf16.mxu0 %v247
    %365 = vmatpush1.bf16.msra.mxu0 %v246
    %366 = vmatprep.subr.bf16.mxu0 %v255
    %367 = vmatpush1.bf16.msra.mxu0 %v254
    %368 = vmatprep.subr.bf16.mxu0 0
    %369 = vmatpush1.bf16.msra.mxu0 0
    %370 = vmatprep.subr.bf16.mxu0 0
    %371 = vmatpush1.bf16.msra.mxu0 0
    %372 = vmatprep.subr.bf16.mxu0 0
    %373 = vmatpush1.bf16.msra.mxu0 0
    %374 = vmatprep.subr.bf16.mxu0 0
    %375 = vmatpush1.bf16.msra.mxu0 0
    %376 = vmatprep.subr.bf16.mxu0 0
    %377 = vmatpush1.bf16.msra.mxu0 0
    %378 = vmatprep.subr.bf16.mxu0 0
    %379 = vmatpush1.bf16.msra.mxu0 0
    %380 = vmatprep.subr.bf16.mxu0 0
    %381 = vmatpush1.bf16.msra.mxu0 0
    %382 = vmatprep.subr.bf16.mxu0 0
    %383 = vmatpush1.bf16.msra.mxu0 0
    %384 = vmatprep.subr.bf16.mxu0 0
    %385 = vmatpush1.bf16.msra.mxu0 0
    %386 = vmatprep.subr.bf16.mxu0 0
    %387 = vmatpush1.bf16.msra.mxu0 0
    %388 = vmatprep.subr.bf16.mxu0 0
    %389 = vmatpush1.bf16.msra.mxu0 0
    %390 = vmatprep.subr.bf16.mxu0 0
    %391 = vmatpush1.bf16.msra.mxu0 0
    %392 = vmatprep.subr.bf16.mxu0 0
    %393 = vmatpush1.bf16.msra.mxu0 0
    %394 = vmatprep.subr.bf16.mxu0 0
    %395 = vmatpush1.bf16.msra.mxu0 0
    %396 = vmatprep.mubr.bf16.mxu0 0
    %397 = vmatmul.mubr.bf16.gmra.mrb[0].mxu0 %v276
    %v398 = vpop.f32.mrb[0].mxu0
    %v399 = vadd.f32 %v173, %v398
    %v400 = vpop.f32.mrb[0].mxu0
    %v401 = vadd.f32 %v177, %v400
    %v402 = vpop.f32.mrb[0].mxu0
    %v403 = vadd.f32 %v173, %v402
    %v404 = vpop.f32.mrb[0].mxu0
    %v405 = vadd.f32 %v177, %v404
    %406 = vdwg.mxu0
    %407 = vmatprep.subr.bf16.mxu0 %v249
    %408 = vmatpush1.bf16.msra.mxu0 %v248
    %409 = vmatprep.subr.bf16.mxu0 %v257
    %410 = vmatpush1.bf16.msra.mxu0 %v256
    %411 = vmatprep.subr.bf16.mxu0 0
    %412 = vmatpush1.bf16.msra.mxu0 0
    %413 = vmatprep.subr.bf16.mxu0 0
    %414 = vmatpush1.bf16.msra.mxu0 0
    %415 = vmatprep.subr.bf16.mxu0 0
    %416 = vmatpush1.bf16.msra.mxu0 0
    %417 = vmatprep.subr.bf16.mxu0 0
    %418 = vmatpush1.bf16.msra.mxu0 0
    %419 = vmatprep.subr.bf16.mxu0 0
    %420 = vmatpush1.bf16.msra.mxu0 0
    %421 = vmatprep.subr.bf16.mxu0 0
    %422 = vmatpush1.bf16.msra.mxu0 0
    %423 = vmatprep.subr.bf16.mxu0 0
    %424 = vmatpush1.bf16.msra.mxu0 0
    %425 = vmatprep.subr.bf16.mxu0 0
    %426 = vmatpush1.bf16.msra.mxu0 0
    %427 = vmatprep.subr.bf16.mxu0 0
    %428 = vmatpush1.bf16.msra.mxu0 0
    %429 = vmatprep.subr.bf16.mxu0 0
    %430 = vmatpush1.bf16.msra.mxu0 0
    %431 = vmatprep.subr.bf16.mxu0 0
    %432 = vmatpush1.bf16.msra.mxu0 0
    %433 = vmatprep.subr.bf16.mxu0 0
    %434 = vmatpush1.bf16.msra.mxu0 0
    %435 = vmatprep.subr.bf16.mxu0 0
    %436 = vmatpush1.bf16.msra.mxu0 0
    %437 = vmatprep.subr.bf16.mxu0 0
    %438 = vmatpush1.bf16.msra.mxu0 0
    %439 = vmatprep.mubr.bf16.mxu0 0
    %440 = vmatmul.mubr.bf16.gmra.mrb[0].mxu0 %v276
    %v441 = vpop.f32.mrb[0].mxu0
    %v442 = vadd.f32 %v181, %v441
    %v443 = vpop.f32.mrb[0].mxu0
    %v444 = vadd.f32 %v185, %v443
    %v445 = vpop.f32.mrb[0].mxu0
    %v446 = vadd.f32 %v181, %v445
    %v447 = vpop.f32.mrb[0].mxu0
    %v448 = vadd.f32 %v185, %v447
    %449 = vdwg.mxu0
    %v450 = vmax.f32 %v313, 0.0
    %v451 = vmax.f32 %v315, 0.0
    %v452 = vmax.f32 %v356, 0.0
    %v453 = vmax.f32 %v358, 0.0
    %v454 = vmax.f32 %v399, 0.0
    %v455 = vmax.f32 %v401, 0.0
    %v456 = vmax.f32 %v442, 0.0
    %v457 = vmax.f32 %v444, 0.0
    %v458 = vmax.f32 %v317, 0.0
    %v459 = vmax.f32 %v319, 0.0
    %v460 = vmax.f32 %v360, 0.0
    %v461 = vmax.f32 %v362, 0.0
    %v462 = vmax.f32 %v403, 0.0
    %v463 = vmax.f32 %v405, 0.0
    %v464 = vmax.f32 %v446, 0.0
    %v465 = vmax.f32 %v448, 0.0
    %v466 = vpack.c.bf16 %v458, %v450
    %v467 = vpack.c.bf16 %v459, %v451
    %v468 = vpack.c.bf16 %v460, %v452
    %v469 = vpack.c.bf16 %v461, %v453
    %v470 = vpack.c.bf16 %v462, %v454
    %v471 = vpack.c.bf16 %v463, %v455
    %v472 = vpack.c.bf16 %v464, %v456
    %v473 = vpack.c.bf16 %v465, %v457
    %v474 = vld [vmem:[#allocation8] sm:$0xff]
    %v475 = vld [vmem:[#allocation8 + $0x8] sm:$0xff]
    %v476 = vld [vmem:[#allocation8 + $0x10] sm:$0xff]
    %v477 = vld [vmem:[#allocation8 + $0x18] sm:$0xff]
    %v478 = vld [vmem:[#allocation8 + $0x20] sm:$0xff]
    %v479 = vld [vmem:[#allocation8 + $0x28] sm:$0xff]
    %v480 = vld [vmem:[#allocation8 + $0x30] sm:$0xff]
    %v481 = vld [vmem:[#allocation8 + $0x38] sm:$0xff]
    %v482 = vld [vmem:[#allocation8 + $0x40] sm:$0xff]
    %v483 = vld [vmem:[#allocation8 + $0x48] sm:$0xff]
    %v484 = vld [vmem:[#allocation8 + $0x50] sm:$0xff]
    %v485 = vld [vmem:[#allocation8 + $0x58] sm:$0xff]
    %v486 = vld [vmem:[#allocation8 + $0x60] sm:$0xff]
    %v487 = vld [vmem:[#allocation8 + $0x68] sm:$0xff]
    %v488 = vld [vmem:[#allocation8 + $0x70] sm:$0xff]
    %v489 = vld [vmem:[#allocation8 + $0x78] sm:$0xff]
    %v490 = vld [vmem:[#allocation8 + $0x80] sm:$0xff]
    %v491 = vld [vmem:[#allocation8 + $0x88] sm:$0xff]
    %v492 = vld [vmem:[#allocation8 + $0x90] sm:$0xff]
    %v493 = vld [vmem:[#allocation8 + $0x98] sm:$0xff]
    %v494 = vld [vmem:[#allocation8 + $0xa0] sm:$0xff]
    %v495 = vld [vmem:[#allocation8 + $0xa8] sm:$0xff]
    %v496 = vld [vmem:[#allocation8 + $0xb0] sm:$0xff]
    %v497 = vld [vmem:[#allocation8 + $0xb8] sm:$0xff]
    %v498 = vld [vmem:[#allocation8 + $0xc0] sm:$0xff]
    %v499 = vld [vmem:[#allocation8 + $0xc8] sm:$0xff]
    %v500 = vld [vmem:[#allocation8 + $0xd0] sm:$0xff]
    %v501 = vld [vmem:[#allocation8 + $0xd8] sm:$0xff]
    %v502 = vld [vmem:[#allocation8 + $0xe0] sm:$0xff]
    %v503 = vld [vmem:[#allocation8 + $0xe8] sm:$0xff]
    %v504 = vld [vmem:[#allocation8 + $0xf0] sm:$0xff]
    %v505 = vld [vmem:[#allocation8 + $0xf8] sm:$0xff]
    %v506 = vld [vmem:[#allocation8 + $0x100] sm:$0xff]
    %v507 = vld [vmem:[#allocation8 + $0x108] sm:$0xff]
    %v508 = vld [vmem:[#allocation8 + $0x110] sm:$0xff]
    %v509 = vld [vmem:[#allocation8 + $0x118] sm:$0xff]
    %v510 = vld [vmem:[#allocation8 + $0x120] sm:$0xff]
    %v511 = vld [vmem:[#allocation8 + $0x128] sm:$0xff]
    %v512 = vld [vmem:[#allocation8 + $0x130] sm:$0xff]
    %v513 = vld [vmem:[#allocation8 + $0x138] sm:$0xff]
    %v514 = vld [vmem:[#allocation8 + $0x140] sm:$0xff]
    %v515 = vld [vmem:[#allocation8 + $0x148] sm:$0xff]
    %v516 = vld [vmem:[#allocation8 + $0x150] sm:$0xff]
    %v517 = vld [vmem:[#allocation8 + $0x158] sm:$0xff]
    %v518 = vld [vmem:[#allocation8 + $0x160] sm:$0xff]
    %v519 = vld [vmem:[#allocation8 + $0x168] sm:$0xff]
    %v520 = vld [vmem:[#allocation8 + $0x170] sm:$0xff]
    %v521 = vld [vmem:[#allocation8 + $0x178] sm:$0xff]
    %v522 = vld [vmem:[#allocation8 + $0x180] sm:$0xff]
    %v523 = vld [vmem:[#allocation8 + $0x188] sm:$0xff]
    %v524 = vld [vmem:[#allocation8 + $0x190] sm:$0xff]
    %v525 = vld [vmem:[#allocation8 + $0x198] sm:$0xff]
    %v526 = vld [vmem:[#allocation8 + $0x1a0] sm:$0xff]
    %v527 = vld [vmem:[#allocation8 + $0x1a8] sm:$0xff]
    %v528 = vld [vmem:[#allocation8 + $0x1b0] sm:$0xff]
    %v529 = vld [vmem:[#allocation8 + $0x1b8] sm:$0xff]
    %v530 = vld [vmem:[#allocation8 + $0x1c0] sm:$0xff]
    %v531 = vld [vmem:[#allocation8 + $0x1c8] sm:$0xff]
    %v532 = vld [vmem:[#allocation8 + $0x1d0] sm:$0xff]
    %v533 = vld [vmem:[#allocation8 + $0x1d8] sm:$0xff]
    %v534 = vld [vmem:[#allocation8 + $0x1e0] sm:$0xff]
    %v535 = vld [vmem:[#allocation8 + $0x1e8] sm:$0xff]
    %v536 = vld [vmem:[#allocation8 + $0x1f0] sm:$0xff]
    %v537 = vld [vmem:[#allocation8 + $0x1f8] sm:$0xff]
    %v538 = vld [vmem:[#allocation8 + $0x200] sm:$0xff]
    %v539 = vld [vmem:[#allocation8 + $0x208] sm:$0xff]
    %v540 = vld [vmem:[#allocation8 + $0x210] sm:$0xff]
    %v541 = vld [vmem:[#allocation8 + $0x218] sm:$0xff]
    %v542 = vld [vmem:[#allocation8 + $0x220] sm:$0xff]
    %v543 = vld [vmem:[#allocation8 + $0x228] sm:$0xff]
    %v544 = vld [vmem:[#allocation8 + $0x230] sm:$0xff]
    %v545 = vld [vmem:[#allocation8 + $0x238] sm:$0xff]
    %v546 = vld [vmem:[#allocation8 + $0x240] sm:$0xff]
    %v547 = vld [vmem:[#allocation8 + $0x248] sm:$0xff]
    %v548 = vld [vmem:[#allocation8 + $0x250] sm:$0xff]
    %v549 = vld [vmem:[#allocation8 + $0x258] sm:$0xff]
    %v550 = vld [vmem:[#allocation8 + $0x260] sm:$0xff]
    %v551 = vld [vmem:[#allocation8 + $0x268] sm:$0xff]
    %v552 = vld [vmem:[#allocation8 + $0x270] sm:$0xff]
    %v553 = vld [vmem:[#allocation8 + $0x278] sm:$0xff]
    %v554 = vld [vmem:[#allocation8 + $0x280] sm:$0xff]
    %v555 = vld [vmem:[#allocation8 + $0x288] sm:$0xff]
    %v556 = vld [vmem:[#allocation8 + $0x290] sm:$0xff]
    %v557 = vld [vmem:[#allocation8 + $0x298] sm:$0xff]
    %v558 = vld [vmem:[#allocation8 + $0x2a0] sm:$0xff]
    %v559 = vld [vmem:[#allocation8 + $0x2a8] sm:$0xff]
    %v560 = vld [vmem:[#allocation8 + $0x2b0] sm:$0xff]
    %v561 = vld [vmem:[#allocation8 + $0x2b8] sm:$0xff]
    %v562 = vld [vmem:[#allocation8 + $0x2c0] sm:$0xff]
    %v563 = vld [vmem:[#allocation8 + $0x2c8] sm:$0xff]
    %v564 = vld [vmem:[#allocation8 + $0x2d0] sm:$0xff]
    %v565 = vld [vmem:[#allocation8 + $0x2d8] sm:$0xff]
    %v566 = vld [vmem:[#allocation8 + $0x2e0] sm:$0xff]
    %v567 = vld [vmem:[#allocation8 + $0x2e8] sm:$0xff]
    %v568 = vld [vmem:[#allocation8 + $0x2f0] sm:$0xff]
    %v569 = vld [vmem:[#allocation8 + $0x2f8] sm:$0xff]
    %v570 = vld [vmem:[#allocation8 + $0x300] sm:$0xff]
    %v571 = vld [vmem:[#allocation8 + $0x308] sm:$0xff]
    %v572 = vld [vmem:[#allocation8 + $0x310] sm:$0xff]
    %v573 = vld [vmem:[#allocation8 + $0x318] sm:$0xff]
    %v574 = vld [vmem:[#allocation8 + $0x320] sm:$0xff]
    %v575 = vld [vmem:[#allocation8 + $0x328] sm:$0xff]
    %v576 = vld [vmem:[#allocation8 + $0x330] sm:$0xff]
    %v577 = vld [vmem:[#allocation8 + $0x338] sm:$0xff]
    %v578 = vld [vmem:[#allocation8 + $0x340] sm:$0xff]
    %v579 = vld [vmem:[#allocation8 + $0x348] sm:$0xff]
    %v580 = vld [vmem:[#allocation8 + $0x350] sm:$0xff]
    %v581 = vld [vmem:[#allocation8 + $0x358] sm:$0xff]
    %v582 = vld [vmem:[#allocation8 + $0x360] sm:$0xff]
    %v583 = vld [vmem:[#allocation8 + $0x368] sm:$0xff]
    %v584 = vld [vmem:[#allocation8 + $0x370] sm:$0xff]
    %v585 = vld [vmem:[#allocation8 + $0x378] sm:$0xff]
    %v586 = vld [vmem:[#allocation8 + $0x380] sm:$0xff]
    %v587 = vld [vmem:[#allocation8 + $0x388] sm:$0xff]
    %v588 = vld [vmem:[#allocation8 + $0x390] sm:$0xff]
    %v589 = vld [vmem:[#allocation8 + $0x398] sm:$0xff]
    %v590 = vld [vmem:[#allocation8 + $0x3a0] sm:$0xff]
    %v591 = vld [vmem:[#allocation8 + $0x3a8] sm:$0xff]
    %v592 = vld [vmem:[#allocation8 + $0x3b0] sm:$0xff]
    %v593 = vld [vmem:[#allocation8 + $0x3b8] sm:$0xff]
    %v594 = vld [vmem:[#allocation8 + $0x3c0] sm:$0xff]
    %v595 = vld [vmem:[#allocation8 + $0x3c8] sm:$0xff]
    %v596 = vld [vmem:[#allocation8 + $0x3d0] sm:$0xff]
    %v597 = vld [vmem:[#allocation8 + $0x3d8] sm:$0xff]
    %v598 = vld [vmem:[#allocation8 + $0x3e0] sm:$0xff]
    %v599 = vld [vmem:[#allocation8 + $0x3e8] sm:$0xff]
    %v600 = vld [vmem:[#allocation8 + $0x3f0] sm:$0xff]
    %v601 = vld [vmem:[#allocation8 + $0x3f8] sm:$0xff]
    %v602 = vld [vmem:[#allocation8 + $0x400] sm:$0xff]
    %v603 = vld [vmem:[#allocation8 + $0x408] sm:$0xff]
    %v604 = vld [vmem:[#allocation8 + $0x410] sm:$0xff]
    %v605 = vld [vmem:[#allocation8 + $0x418] sm:$0xff]
    %v606 = vld [vmem:[#allocation8 + $0x420] sm:$0xff]
    %v607 = vld [vmem:[#allocation8 + $0x428] sm:$0xff]
    %v608 = vld [vmem:[#allocation8 + $0x430] sm:$0xff]
    %v609 = vld [vmem:[#allocation8 + $0x438] sm:$0xff]
    %v610 = vld [vmem:[#allocation8 + $0x440] sm:$0xff]
    %v611 = vld [vmem:[#allocation8 + $0x448] sm:$0xff]
    %v612 = vld [vmem:[#allocation8 + $0x450] sm:$0xff]
    %v613 = vld [vmem:[#allocation8 + $0x458] sm:$0xff]
    %v614 = vld [vmem:[#allocation8 + $0x460] sm:$0xff]
    %v615 = vld [vmem:[#allocation8 + $0x468] sm:$0xff]
    %v616 = vld [vmem:[#allocation8 + $0x470] sm:$0xff]
    %v617 = vld [vmem:[#allocation8 + $0x478] sm:$0xff]
    %v618 = vld [vmem:[#allocation8 + $0x480] sm:$0xff]
    %v619 = vld [vmem:[#allocation8 + $0x488] sm:$0xff]
    %v620 = vld [vmem:[#allocation8 + $0x490] sm:$0xff]
    %v621 = vld [vmem:[#allocation8 + $0x498] sm:$0xff]
    %v622 = vld [vmem:[#allocation8 + $0x4a0] sm:$0xff]
    %v623 = vld [vmem:[#allocation8 + $0x4a8] sm:$0xff]
    %v624 = vld [vmem:[#allocation8 + $0x4b0] sm:$0xff]
    %v625 = vld [vmem:[#allocation8 + $0x4b8] sm:$0xff]
    %v626 = vld [vmem:[#allocation8 + $0x4c0] sm:$0xff]
    %v627 = vld [vmem:[#allocation8 + $0x4c8] sm:$0xff]
    %v628 = vld [vmem:[#allocation8 + $0x4d0] sm:$0xff]
    %v629 = vld [vmem:[#allocation8 + $0x4d8] sm:$0xff]
    %v630 = vld [vmem:[#allocation8 + $0x4e0] sm:$0xff]
    %v631 = vld [vmem:[#allocation8 + $0x4e8] sm:$0xff]
    %v632 = vld [vmem:[#allocation8 + $0x4f0] sm:$0xff]
    %v633 = vld [vmem:[#allocation8 + $0x4f8] sm:$0xff]
    %v634 = vld [vmem:[#allocation8 + $0x500] sm:$0xff]
    %v635 = vld [vmem:[#allocation8 + $0x508] sm:$0xff]
    %v636 = vld [vmem:[#allocation8 + $0x510] sm:$0xff]
    %v637 = vld [vmem:[#allocation8 + $0x518] sm:$0xff]
    %v638 = vld [vmem:[#allocation8 + $0x520] sm:$0xff]
    %v639 = vld [vmem:[#allocation8 + $0x528] sm:$0xff]
    %v640 = vld [vmem:[#allocation8 + $0x530] sm:$0xff]
    %v641 = vld [vmem:[#allocation8 + $0x538] sm:$0xff]
    %v642 = vld [vmem:[#allocation8 + $0x540] sm:$0xff]
    %v643 = vld [vmem:[#allocation8 + $0x548] sm:$0xff]
    %v644 = vld [vmem:[#allocation8 + $0x550] sm:$0xff]
    %v645 = vld [vmem:[#allocation8 + $0x558] sm:$0xff]
    %v646 = vld [vmem:[#allocation8 + $0x560] sm:$0xff]
    %v647 = vld [vmem:[#allocation8 + $0x568] sm:$0xff]
    %v648 = vld [vmem:[#allocation8 + $0x570] sm:$0xff]
    %v649 = vld [vmem:[#allocation8 + $0x578] sm:$0xff]
    %v650 = vld [vmem:[#allocation8 + $0x580] sm:$0xff]
    %v651 = vld [vmem:[#allocation8 + $0x588] sm:$0xff]
    %v652 = vld [vmem:[#allocation8 + $0x590] sm:$0xff]
    %v653 = vld [vmem:[#allocation8 + $0x598] sm:$0xff]
    %v654 = vld [vmem:[#allocation8 + $0x5a0] sm:$0xff]
    %v655 = vld [vmem:[#allocation8 + $0x5a8] sm:$0xff]
    %v656 = vld [vmem:[#allocation8 + $0x5b0] sm:$0xff]
    %v657 = vld [vmem:[#allocation8 + $0x5b8] sm:$0xff]
    %v658 = vld [vmem:[#allocation8 + $0x5c0] sm:$0xff]
    %v659 = vld [vmem:[#allocation8 + $0x5c8] sm:$0xff]
    %v660 = vld [vmem:[#allocation8 + $0x5d0] sm:$0xff]
    %v661 = vld [vmem:[#allocation8 + $0x5d8] sm:$0xff]
    %v662 = vld [vmem:[#allocation8 + $0x5e0] sm:$0xff]
    %v663 = vld [vmem:[#allocation8 + $0x5e8] sm:$0xff]
    %v664 = vld [vmem:[#allocation8 + $0x5f0] sm:$0xff]
    %v665 = vld [vmem:[#allocation8 + $0x5f8] sm:$0xff]
    %v666 = vld [vmem:[#allocation8 + $0x600] sm:$0xff]
    %v667 = vld [vmem:[#allocation8 + $0x608] sm:$0xff]
    %v668 = vld [vmem:[#allocation8 + $0x610] sm:$0xff]
    %v669 = vld [vmem:[#allocation8 + $0x618] sm:$0xff]
    %v670 = vld [vmem:[#allocation8 + $0x620] sm:$0xff]
    %v671 = vld [vmem:[#allocation8 + $0x628] sm:$0xff]
    %v672 = vld [vmem:[#allocation8 + $0x630] sm:$0xff]
    %v673 = vld [vmem:[#allocation8 + $0x638] sm:$0xff]
    %v674 = vld [vmem:[#allocation8 + $0x640] sm:$0xff]
    %v675 = vld [vmem:[#allocation8 + $0x648] sm:$0xff]
    %v676 = vld [vmem:[#allocation8 + $0x650] sm:$0xff]
    %v677 = vld [vmem:[#allocation8 + $0x658] sm:$0xff]
    %v678 = vld [vmem:[#allocation8 + $0x660] sm:$0xff]
    %v679 = vld [vmem:[#allocation8 + $0x668] sm:$0xff]
    %v680 = vld [vmem:[#allocation8 + $0x670] sm:$0xff]
    %v681 = vld [vmem:[#allocation8 + $0x678] sm:$0xff]
    %v682 = vld [vmem:[#allocation8 + $0x680] sm:$0xff]
    %v683 = vld [vmem:[#allocation8 + $0x688] sm:$0xff]
    %v684 = vld [vmem:[#allocation8 + $0x690] sm:$0xff]
    %v685 = vld [vmem:[#allocation8 + $0x698] sm:$0xff]
    %v686 = vld [vmem:[#allocation8 + $0x6a0] sm:$0xff]
    %v687 = vld [vmem:[#allocation8 + $0x6a8] sm:$0xff]
    %v688 = vld [vmem:[#allocation8 + $0x6b0] sm:$0xff]
    %v689 = vld [vmem:[#allocation8 + $0x6b8] sm:$0xff]
    %v690 = vld [vmem:[#allocation8 + $0x6c0] sm:$0xff]
    %v691 = vld [vmem:[#allocation8 + $0x6c8] sm:$0xff]
    %v692 = vld [vmem:[#allocation8 + $0x6d0] sm:$0xff]
    %v693 = vld [vmem:[#allocation8 + $0x6d8] sm:$0xff]
    %v694 = vld [vmem:[#allocation8 + $0x6e0] sm:$0xff]
    %v695 = vld [vmem:[#allocation8 + $0x6e8] sm:$0xff]
    %v696 = vld [vmem:[#allocation8 + $0x6f0] sm:$0xff]
    %v697 = vld [vmem:[#allocation8 + $0x6f8] sm:$0xff]
    %v698 = vld [vmem:[#allocation8 + $0x700] sm:$0xff]
    %v699 = vld [vmem:[#allocation8 + $0x708] sm:$0xff]
    %v700 = vld [vmem:[#allocation8 + $0x710] sm:$0xff]
    %v701 = vld [vmem:[#allocation8 + $0x718] sm:$0xff]
    %v702 = vld [vmem:[#allocation8 + $0x720] sm:$0xff]
    %v703 = vld [vmem:[#allocation8 + $0x728] sm:$0xff]
    %v704 = vld [vmem:[#allocation8 + $0x730] sm:$0xff]
    %v705 = vld [vmem:[#allocation8 + $0x738] sm:$0xff]
    %v706 = vld [vmem:[#allocation8 + $0x740] sm:$0xff]
    %v707 = vld [vmem:[#allocation8 + $0x748] sm:$0xff]
    %v708 = vld [vmem:[#allocation8 + $0x750] sm:$0xff]
    %v709 = vld [vmem:[#allocation8 + $0x758] sm:$0xff]
    %v710 = vld [vmem:[#allocation8 + $0x760] sm:$0xff]
    %v711 = vld [vmem:[#allocation8 + $0x768] sm:$0xff]
    %v712 = vld [vmem:[#allocation8 + $0x770] sm:$0xff]
    %v713 = vld [vmem:[#allocation8 + $0x778] sm:$0xff]
    %v714 = vld [vmem:[#allocation8 + $0x780] sm:$0xff]
    %v715 = vld [vmem:[#allocation8 + $0x788] sm:$0xff]
    %v716 = vld [vmem:[#allocation8 + $0x790] sm:$0xff]
    %v717 = vld [vmem:[#allocation8 + $0x798] sm:$0xff]
    %v718 = vld [vmem:[#allocation8 + $0x7a0] sm:$0xff]
    %v719 = vld [vmem:[#allocation8 + $0x7a8] sm:$0xff]
    %v720 = vld [vmem:[#allocation8 + $0x7b0] sm:$0xff]
    %v721 = vld [vmem:[#allocation8 + $0x7b8] sm:$0xff]
    %v722 = vld [vmem:[#allocation8 + $0x7c0] sm:$0xff]
    %v723 = vld [vmem:[#allocation8 + $0x7c8] sm:$0xff]
    %v724 = vld [vmem:[#allocation8 + $0x7d0] sm:$0xff]
    %v725 = vld [vmem:[#allocation8 + $0x7d8] sm:$0xff]
    %v726 = vld [vmem:[#allocation8 + $0x7e0] sm:$0xff]
    %v727 = vld [vmem:[#allocation8 + $0x7e8] sm:$0xff]
    %v728 = vld [vmem:[#allocation8 + $0x7f0] sm:$0xff]
    %v729 = vld [vmem:[#allocation8 + $0x7f8] sm:$0xff]
    %v730 = vld [vmem:[%s4] sm:$0xf]
    %v732 = vlaneseq
    %v733 = vshrl.u32 %v732, 7
    %v734 = vsub.s32 0, %v733
    %v735 = vrot.slane %v730, %v734
    %v736 = vlaneseq
    %v737 = vshrl.u32 %v736, 7
    %v738 = vsub.s32 1, %v737
    %v739 = vrot.slane %v730, %v738
    %v740 = vlaneseq
    %v741 = vshrl.u32 %v740, 7
    %v742 = vsub.s32 2, %v741
    %v743 = vrot.slane %v730, %v742
    %v744 = vlaneseq
    %v745 = vshrl.u32 %v744, 7
    %v746 = vsub.s32 3, %v745
    %v747 = vrot.slane %v730, %v746
    %v1008 = vunpack.c.l.b16 %v474
    %v1009 = vunpack.c.h.b16 %v474
    %v1010 = vunpack.c.l.b16 %v475
    %v1011 = vunpack.c.h.b16 %v475
    %v1012 = vunpack.c.l.b16 %v476
    %v1013 = vunpack.c.h.b16 %v476
    %v1014 = vunpack.c.l.b16 %v477
    %v1015 = vunpack.c.h.b16 %v477
    %v1016 = vunpack.c.l.b16 %v478
    %v1017 = vunpack.c.h.b16 %v478
    %v1018 = vunpack.c.l.b16 %v479
    %v1019 = vunpack.c.h.b16 %v479
    %v1020 = vunpack.c.l.b16 %v480
    %v1021 = vunpack.c.h.b16 %v480
    %v1022 = vunpack.c.l.b16 %v481
    %v1023 = vunpack.c.h.b16 %v481
    %v1024 = vunpack.c.l.b16 %v482
    %v1025 = vunpack.c.h.b16 %v482
    %v1026 = vunpack.c.l.b16 %v483
    %v1027 = vunpack.c.h.b16 %v483
    %v1028 = vunpack.c.l.b16 %v484
    %v1029 = vunpack.c.h.b16 %v484
    %v1030 = vunpack.c.l.b16 %v485
    %v1031 = vunpack.c.h.b16 %v485
    %v1032 = vunpack.c.l.b16 %v486
    %v1033 = vunpack.c.h.b16 %v486
    %v1034 = vunpack.c.l.b16 %v487
    %v1035 = vunpack.c.h.b16 %v487
    %v1036 = vunpack.c.l.b16 %v488
    %v1037 = vunpack.c.h.b16 %v488
    %v1038 = vunpack.c.l.b16 %v489
    %v1039 = vunpack.c.h.b16 %v489
    %v1040 = vunpack.c.l.b16 %v490
    %v1041 = vunpack.c.h.b16 %v490
    %v1042 = vunpack.c.l.b16 %v491
    %v1043 = vunpack.c.h.b16 %v491
    %v1044 = vunpack.c.l.b16 %v492
    %v1045 = vunpack.c.h.b16 %v492
    %v1046 = vunpack.c.l.b16 %v493
    %v1047 = vunpack.c.h.b16 %v493
    %v1048 = vunpack.c.l.b16 %v494
    %v1049 = vunpack.c.h.b16 %v494
    %v1050 = vunpack.c.l.b16 %v495
    %v1051 = vunpack.c.h.b16 %v495
    %v1052 = vunpack.c.l.b16 %v496
    %v1053 = vunpack.c.h.b16 %v496
    %v1054 = vunpack.c.l.b16 %v497
    %v1055 = vunpack.c.h.b16 %v497
    %v1056 = vunpack.c.l.b16 %v498
    %v1057 = vunpack.c.h.b16 %v498
    %v1058 = vunpack.c.l.b16 %v499
    %v1059 = vunpack.c.h.b16 %v499
    %v1060 = vunpack.c.l.b16 %v500
    %v1061 = vunpack.c.h.b16 %v500
    %v1062 = vunpack.c.l.b16 %v501
    %v1063 = vunpack.c.h.b16 %v501
    %v1064 = vunpack.c.l.b16 %v502
    %v1065 = vunpack.c.h.b16 %v502
    %v1066 = vunpack.c.l.b16 %v503
    %v1067 = vunpack.c.h.b16 %v503
    %v1068 = vunpack.c.l.b16 %v504
    %v1069 = vunpack.c.h.b16 %v504
    %v1070 = vunpack.c.l.b16 %v505
    %v1071 = vunpack.c.h.b16 %v505
    %v1072 = vunpack.c.l.b16 %v506
    %v1073 = vunpack.c.h.b16 %v506
    %v1074 = vunpack.c.l.b16 %v507
    %v1075 = vunpack.c.h.b16 %v507
    %v1076 = vunpack.c.l.b16 %v508
    %v1077 = vunpack.c.h.b16 %v508
    %v1078 = vunpack.c.l.b16 %v509
    %v1079 = vunpack.c.h.b16 %v509
    %v1080 = vunpack.c.l.b16 %v510
    %v1081 = vunpack.c.h.b16 %v510
    %v1082 = vunpack.c.l.b16 %v511
    %v1083 = vunpack.c.h.b16 %v511
    %v1084 = vunpack.c.l.b16 %v512
    %v1085 = vunpack.c.h.b16 %v512
    %v1086 = vunpack.c.l.b16 %v513
    %v1087 = vunpack.c.h.b16 %v513
    %v1088 = vunpack.c.l.b16 %v514
    %v1089 = vunpack.c.h.b16 %v514
    %v1090 = vunpack.c.l.b16 %v515
    %v1091 = vunpack.c.h.b16 %v515
    %v1092 = vunpack.c.l.b16 %v516
    %v1093 = vunpack.c.h.b16 %v516
    %v1094 = vunpack.c.l.b16 %v517
    %v1095 = vunpack.c.h.b16 %v517
    %v1096 = vunpack.c.l.b16 %v518
    %v1097 = vunpack.c.h.b16 %v518
    %v1098 = vunpack.c.l.b16 %v519
    %v1099 = vunpack.c.h.b16 %v519
    %v1100 = vunpack.c.l.b16 %v520
    %v1101 = vunpack.c.h.b16 %v520
    %v1102 = vunpack.c.l.b16 %v521
    %v1103 = vunpack.c.h.b16 %v521
    %v1104 = vunpack.c.l.b16 %v522
    %v1105 = vunpack.c.h.b16 %v522
    %v1106 = vunpack.c.l.b16 %v523
    %v1107 = vunpack.c.h.b16 %v523
    %v1108 = vunpack.c.l.b16 %v524
    %v1109 = vunpack.c.h.b16 %v524
    %v1110 = vunpack.c.l.b16 %v525
    %v1111 = vunpack.c.h.b16 %v525
    %v1112 = vunpack.c.l.b16 %v526
    %v1113 = vunpack.c.h.b16 %v526
    %v1114 = vunpack.c.l.b16 %v527
    %v1115 = vunpack.c.h.b16 %v527
    %v1116 = vunpack.c.l.b16 %v528
    %v1117 = vunpack.c.h.b16 %v528
    %v1118 = vunpack.c.l.b16 %v529
    %v1119 = vunpack.c.h.b16 %v529
    %v1120 = vunpack.c.l.b16 %v530
    %v1121 = vunpack.c.h.b16 %v530
    %v1122 = vunpack.c.l.b16 %v531
    %v1123 = vunpack.c.h.b16 %v531
    %v1124 = vunpack.c.l.b16 %v532
    %v1125 = vunpack.c.h.b16 %v532
    %v1126 = vunpack.c.l.b16 %v533
    %v1127 = vunpack.c.h.b16 %v533
    %v1128 = vunpack.c.l.b16 %v534
    %v1129 = vunpack.c.h.b16 %v534
    %v1130 = vunpack.c.l.b16 %v535
    %v1131 = vunpack.c.h.b16 %v535
    %v1132 = vunpack.c.l.b16 %v536
    %v1133 = vunpack.c.h.b16 %v536
    %v1134 = vunpack.c.l.b16 %v537
    %v1135 = vunpack.c.h.b16 %v537
    %v1136 = vunpack.c.l.b16 %v538
    %v1137 = vunpack.c.h.b16 %v538
    %v1138 = vunpack.c.l.b16 %v539
    %v1139 = vunpack.c.h.b16 %v539
    %v1140 = vunpack.c.l.b16 %v540
    %v1141 = vunpack.c.h.b16 %v540
    %v1142 = vunpack.c.l.b16 %v541
    %v1143 = vunpack.c.h.b16 %v541
    %v1144 = vunpack.c.l.b16 %v542
    %v1145 = vunpack.c.h.b16 %v542
    %v1146 = vunpack.c.l.b16 %v543
    %v1147 = vunpack.c.h.b16 %v543
    %v1148 = vunpack.c.l.b16 %v544
    %v1149 = vunpack.c.h.b16 %v544
    %v1150 = vunpack.c.l.b16 %v545
    %v1151 = vunpack.c.h.b16 %v545
    %v1152 = vunpack.c.l.b16 %v546
    %v1153 = vunpack.c.h.b16 %v546
    %v1154 = vunpack.c.l.b16 %v547
    %v1155 = vunpack.c.h.b16 %v547
    %v1156 = vunpack.c.l.b16 %v548
    %v1157 = vunpack.c.h.b16 %v548
    %v1158 = vunpack.c.l.b16 %v549
    %v1159 = vunpack.c.h.b16 %v549
    %v1160 = vunpack.c.l.b16 %v550
    %v1161 = vunpack.c.h.b16 %v550
    %v1162 = vunpack.c.l.b16 %v551
    %v1163 = vunpack.c.h.b16 %v551
    %v1164 = vunpack.c.l.b16 %v552
    %v1165 = vunpack.c.h.b16 %v552
    %v1166 = vunpack.c.l.b16 %v553
    %v1167 = vunpack.c.h.b16 %v553
    %v1168 = vunpack.c.l.b16 %v554
    %v1169 = vunpack.c.h.b16 %v554
    %v1170 = vunpack.c.l.b16 %v555
    %v1171 = vunpack.c.h.b16 %v555
    %v1172 = vunpack.c.l.b16 %v556
    %v1173 = vunpack.c.h.b16 %v556
    %v1174 = vunpack.c.l.b16 %v557
    %v1175 = vunpack.c.h.b16 %v557
    %v1176 = vunpack.c.l.b16 %v558
    %v1177 = vunpack.c.h.b16 %v558
    %v1178 = vunpack.c.l.b16 %v559
    %v1179 = vunpack.c.h.b16 %v559
    %v1180 = vunpack.c.l.b16 %v560
    %v1181 = vunpack.c.h.b16 %v560
    %v1182 = vunpack.c.l.b16 %v561
    %v1183 = vunpack.c.h.b16 %v561
    %v1184 = vunpack.c.l.b16 %v562
    %v1185 = vunpack.c.h.b16 %v562
    %v1186 = vunpack.c.l.b16 %v563
    %v1187 = vunpack.c.h.b16 %v563
    %v1188 = vunpack.c.l.b16 %v564
    %v1189 = vunpack.c.h.b16 %v564
    %v1190 = vunpack.c.l.b16 %v565
    %v1191 = vunpack.c.h.b16 %v565
    %v1192 = vunpack.c.l.b16 %v566
    %v1193 = vunpack.c.h.b16 %v566
    %v1194 = vunpack.c.l.b16 %v567
    %v1195 = vunpack.c.h.b16 %v567
    %v1196 = vunpack.c.l.b16 %v568
    %v1197 = vunpack.c.h.b16 %v568
    %v1198 = vunpack.c.l.b16 %v569
    %v1199 = vunpack.c.h.b16 %v569
    %v1200 = vunpack.c.l.b16 %v570
    %v1201 = vunpack.c.h.b16 %v570
    %v1202 = vunpack.c.l.b16 %v571
    %v1203 = vunpack.c.h.b16 %v571
    %v1204 = vunpack.c.l.b16 %v572
    %v1205 = vunpack.c.h.b16 %v572
    %v1206 = vunpack.c.l.b16 %v573
    %v1207 = vunpack.c.h.b16 %v573
    %v1208 = vunpack.c.l.b16 %v574
    %v1209 = vunpack.c.h.b16 %v574
    %v1210 = vunpack.c.l.b16 %v575
    %v1211 = vunpack.c.h.b16 %v575
    %v1212 = vunpack.c.l.b16 %v576
    %v1213 = vunpack.c.h.b16 %v576
    %v1214 = vunpack.c.l.b16 %v577
    %v1215 = vunpack.c.h.b16 %v577
    %v1216 = vunpack.c.l.b16 %v578
    %v1217 = vunpack.c.h.b16 %v578
    %v1218 = vunpack.c.l.b16 %v579
    %v1219 = vunpack.c.h.b16 %v579
    %v1220 = vunpack.c.l.b16 %v580
    %v1221 = vunpack.c.h.b16 %v580
    %v1222 = vunpack.c.l.b16 %v581
    %v1223 = vunpack.c.h.b16 %v581
    %v1224 = vunpack.c.l.b16 %v582
    %v1225 = vunpack.c.h.b16 %v582
    %v1226 = vunpack.c.l.b16 %v583
    %v1227 = vunpack.c.h.b16 %v583
    %v1228 = vunpack.c.l.b16 %v584
    %v1229 = vunpack.c.h.b16 %v584
    %v1230 = vunpack.c.l.b16 %v585
    %v1231 = vunpack.c.h.b16 %v585
    %v1232 = vunpack.c.l.b16 %v586
    %v1233 = vunpack.c.h.b16 %v586
    %v1234 = vunpack.c.l.b16 %v587
    %v1235 = vunpack.c.h.b16 %v587
    %v1236 = vunpack.c.l.b16 %v588
    %v1237 = vunpack.c.h.b16 %v588
    %v1238 = vunpack.c.l.b16 %v589
    %v1239 = vunpack.c.h.b16 %v589
    %v1240 = vunpack.c.l.b16 %v590
    %v1241 = vunpack.c.h.b16 %v590
    %v1242 = vunpack.c.l.b16 %v591
    %v1243 = vunpack.c.h.b16 %v591
    %v1244 = vunpack.c.l.b16 %v592
    %v1245 = vunpack.c.h.b16 %v592
    %v1246 = vunpack.c.l.b16 %v593
    %v1247 = vunpack.c.h.b16 %v593
    %v1248 = vunpack.c.l.b16 %v594
    %v1249 = vunpack.c.h.b16 %v594
    %v1250 = vunpack.c.l.b16 %v595
    %v1251 = vunpack.c.h.b16 %v595
    %v1252 = vunpack.c.l.b16 %v596
    %v1253 = vunpack.c.h.b16 %v596
    %v1254 = vunpack.c.l.b16 %v597
    %v1255 = vunpack.c.h.b16 %v597
    %v1256 = vunpack.c.l.b16 %v598
    %v1257 = vunpack.c.h.b16 %v598
    %v1258 = vunpack.c.l.b16 %v599
    %v1259 = vunpack.c.h.b16 %v599
    %v1260 = vunpack.c.l.b16 %v600
    %v1261 = vunpack.c.h.b16 %v600
    %v1262 = vunpack.c.l.b16 %v601
    %v1263 = vunpack.c.h.b16 %v601
    %v1264 = vunpack.c.l.b16 %v602
    %v1265 = vunpack.c.h.b16 %v602
    %v1266 = vunpack.c.l.b16 %v603
    %v1267 = vunpack.c.h.b16 %v603
    %v1268 = vunpack.c.l.b16 %v604
    %v1269 = vunpack.c.h.b16 %v604
    %v1270 = vunpack.c.l.b16 %v605
    %v1271 = vunpack.c.h.b16 %v605
    %v1272 = vunpack.c.l.b16 %v606
    %v1273 = vunpack.c.h.b16 %v606
    %v1274 = vunpack.c.l.b16 %v607
    %v1275 = vunpack.c.h.b16 %v607
    %v1276 = vunpack.c.l.b16 %v608
    %v1277 = vunpack.c.h.b16 %v608
    %v1278 = vunpack.c.l.b16 %v609
    %v1279 = vunpack.c.h.b16 %v609
    %v1280 = vunpack.c.l.b16 %v610
    %v1281 = vunpack.c.h.b16 %v610
    %v1282 = vunpack.c.l.b16 %v611
    %v1283 = vunpack.c.h.b16 %v611
    %v1284 = vunpack.c.l.b16 %v612
    %v1285 = vunpack.c.h.b16 %v612
    %v1286 = vunpack.c.l.b16 %v613
    %v1287 = vunpack.c.h.b16 %v613
    %v1288 = vunpack.c.l.b16 %v614
    %v1289 = vunpack.c.h.b16 %v614
    %v1290 = vunpack.c.l.b16 %v615
    %v1291 = vunpack.c.h.b16 %v615
    %v1292 = vunpack.c.l.b16 %v616
    %v1293 = vunpack.c.h.b16 %v616
    %v1294 = vunpack.c.l.b16 %v617
    %v1295 = vunpack.c.h.b16 %v617
    %v1296 = vunpack.c.l.b16 %v618
    %v1297 = vunpack.c.h.b16 %v618
    %v1298 = vunpack.c.l.b16 %v619
    %v1299 = vunpack.c.h.b16 %v619
    %v1300 = vunpack.c.l.b16 %v620
    %v1301 = vunpack.c.h.b16 %v620
    %v1302 = vunpack.c.l.b16 %v621
    %v1303 = vunpack.c.h.b16 %v621
    %v1304 = vunpack.c.l.b16 %v622
    %v1305 = vunpack.c.h.b16 %v622
    %v1306 = vunpack.c.l.b16 %v623
    %v1307 = vunpack.c.h.b16 %v623
    %v1308 = vunpack.c.l.b16 %v624
    %v1309 = vunpack.c.h.b16 %v624
    %v1310 = vunpack.c.l.b16 %v625
    %v1311 = vunpack.c.h.b16 %v625
    %v1312 = vunpack.c.l.b16 %v626
    %v1313 = vunpack.c.h.b16 %v626
    %v1314 = vunpack.c.l.b16 %v627
    %v1315 = vunpack.c.h.b16 %v627
    %v1316 = vunpack.c.l.b16 %v628
    %v1317 = vunpack.c.h.b16 %v628
    %v1318 = vunpack.c.l.b16 %v629
    %v1319 = vunpack.c.h.b16 %v629
    %v1320 = vunpack.c.l.b16 %v630
    %v1321 = vunpack.c.h.b16 %v630
    %v1322 = vunpack.c.l.b16 %v631
    %v1323 = vunpack.c.h.b16 %v631
    %v1324 = vunpack.c.l.b16 %v632
    %v1325 = vunpack.c.h.b16 %v632
    %v1326 = vunpack.c.l.b16 %v633
    %v1327 = vunpack.c.h.b16 %v633
    %v1328 = vunpack.c.l.b16 %v634
    %v1329 = vunpack.c.h.b16 %v634
    %v1330 = vunpack.c.l.b16 %v635
    %v1331 = vunpack.c.h.b16 %v635
    %v1332 = vunpack.c.l.b16 %v636
    %v1333 = vunpack.c.h.b16 %v636
    %v1334 = vunpack.c.l.b16 %v637
    %v1335 = vunpack.c.h.b16 %v637
    %v1336 = vunpack.c.l.b16 %v638
    %v1337 = vunpack.c.h.b16 %v638
    %v1338 = vunpack.c.l.b16 %v639
    %v1339 = vunpack.c.h.b16 %v639
    %v1340 = vunpack.c.l.b16 %v640
    %v1341 = vunpack.c.h.b16 %v640
    %v1342 = vunpack.c.l.b16 %v641
    %v1343 = vunpack.c.h.b16 %v641
    %v1344 = vunpack.c.l.b16 %v642
    %v1345 = vunpack.c.h.b16 %v642
    %v1346 = vunpack.c.l.b16 %v643
    %v1347 = vunpack.c.h.b16 %v643
    %v1348 = vunpack.c.l.b16 %v644
    %v1349 = vunpack.c.h.b16 %v644
    %v1350 = vunpack.c.l.b16 %v645
    %v1351 = vunpack.c.h.b16 %v645
    %v1352 = vunpack.c.l.b16 %v646
    %v1353 = vunpack.c.h.b16 %v646
    %v1354 = vunpack.c.l.b16 %v647
    %v1355 = vunpack.c.h.b16 %v647
    %v1356 = vunpack.c.l.b16 %v648
    %v1357 = vunpack.c.h.b16 %v648
    %v1358 = vunpack.c.l.b16 %v649
    %v1359 = vunpack.c.h.b16 %v649
    %v1360 = vunpack.c.l.b16 %v650
    %v1361 = vunpack.c.h.b16 %v650
    %v1362 = vunpack.c.l.b16 %v651
    %v1363 = vunpack.c.h.b16 %v651
    %v1364 = vunpack.c.l.b16 %v652
    %v1365 = vunpack.c.h.b16 %v652
    %v1366 = vunpack.c.l.b16 %v653
    %v1367 = vunpack.c.h.b16 %v653
    %v1368 = vunpack.c.l.b16 %v654
    %v1369 = vunpack.c.h.b16 %v654
    %v1370 = vunpack.c.l.b16 %v655
    %v1371 = vunpack.c.h.b16 %v655
    %v1372 = vunpack.c.l.b16 %v656
    %v1373 = vunpack.c.h.b16 %v656
    %v1374 = vunpack.c.l.b16 %v657
    %v1375 = vunpack.c.h.b16 %v657
    %v1376 = vunpack.c.l.b16 %v658
    %v1377 = vunpack.c.h.b16 %v658
    %v1378 = vunpack.c.l.b16 %v659
    %v1379 = vunpack.c.h.b16 %v659
    %v1380 = vunpack.c.l.b16 %v660
    %v1381 = vunpack.c.h.b16 %v660
    %v1382 = vunpack.c.l.b16 %v661
    %v1383 = vunpack.c.h.b16 %v661
    %v1384 = vunpack.c.l.b16 %v662
    %v1385 = vunpack.c.h.b16 %v662
    %v1386 = vunpack.c.l.b16 %v663
    %v1387 = vunpack.c.h.b16 %v663
    %v1388 = vunpack.c.l.b16 %v664
    %v1389 = vunpack.c.h.b16 %v664
    %v1390 = vunpack.c.l.b16 %v665
    %v1391 = vunpack.c.h.b16 %v665
    %v1392 = vunpack.c.l.b16 %v666
    %v1393 = vunpack.c.h.b16 %v666
    %v1394 = vunpack.c.l.b16 %v667
    %v1395 = vunpack.c.h.b16 %v667
    %v1396 = vunpack.c.l.b16 %v668
    %v1397 = vunpack.c.h.b16 %v668
    %v1398 = vunpack.c.l.b16 %v669
    %v1399 = vunpack.c.h.b16 %v669
    %v1400 = vunpack.c.l.b16 %v670
    %v1401 = vunpack.c.h.b16 %v670
    %v1402 = vunpack.c.l.b16 %v671
    %v1403 = vunpack.c.h.b16 %v671
    %v1404 = vunpack.c.l.b16 %v672
    %v1405 = vunpack.c.h.b16 %v672
    %v1406 = vunpack.c.l.b16 %v673
    %v1407 = vunpack.c.h.b16 %v673
    %v1408 = vunpack.c.l.b16 %v674
    %v1409 = vunpack.c.h.b16 %v674
    %v1410 = vunpack.c.l.b16 %v675
    %v1411 = vunpack.c.h.b16 %v675
    %v1412 = vunpack.c.l.b16 %v676
    %v1413 = vunpack.c.h.b16 %v676
    %v1414 = vunpack.c.l.b16 %v677
    %v1415 = vunpack.c.h.b16 %v677
    %v1416 = vunpack.c.l.b16 %v678
    %v1417 = vunpack.c.h.b16 %v678
    %v1418 = vunpack.c.l.b16 %v679
    %v1419 = vunpack.c.h.b16 %v679
    %v1420 = vunpack.c.l.b16 %v680
    %v1421 = vunpack.c.h.b16 %v680
    %v1422 = vunpack.c.l.b16 %v681
    %v1423 = vunpack.c.h.b16 %v681
    %v1424 = vunpack.c.l.b16 %v682
    %v1425 = vunpack.c.h.b16 %v682
    %v1426 = vunpack.c.l.b16 %v683
    %v1427 = vunpack.c.h.b16 %v683
    %v1428 = vunpack.c.l.b16 %v684
    %v1429 = vunpack.c.h.b16 %v684
    %v1430 = vunpack.c.l.b16 %v685
    %v1431 = vunpack.c.h.b16 %v685
    %v1432 = vunpack.c.l.b16 %v686
    %v1433 = vunpack.c.h.b16 %v686
    %v1434 = vunpack.c.l.b16 %v687
    %v1435 = vunpack.c.h.b16 %v687
    %v1436 = vunpack.c.l.b16 %v688
    %v1437 = vunpack.c.h.b16 %v688
    %v1438 = vunpack.c.l.b16 %v689
    %v1439 = vunpack.c.h.b16 %v689
    %v1440 = vunpack.c.l.b16 %v690
    %v1441 = vunpack.c.h.b16 %v690
    %v1442 = vunpack.c.l.b16 %v691
    %v1443 = vunpack.c.h.b16 %v691
    %v1444 = vunpack.c.l.b16 %v692
    %v1445 = vunpack.c.h.b16 %v692
    %v1446 = vunpack.c.l.b16 %v693
    %v1447 = vunpack.c.h.b16 %v693
    %v1448 = vunpack.c.l.b16 %v694
    %v1449 = vunpack.c.h.b16 %v694
    %v1450 = vunpack.c.l.b16 %v695
    %v1451 = vunpack.c.h.b16 %v695
    %v1452 = vunpack.c.l.b16 %v696
    %v1453 = vunpack.c.h.b16 %v696
    %v1454 = vunpack.c.l.b16 %v697
    %v1455 = vunpack.c.h.b16 %v697
    %v1456 = vunpack.c.l.b16 %v698
    %v1457 = vunpack.c.h.b16 %v698
    %v1458 = vunpack.c.l.b16 %v699
    %v1459 = vunpack.c.h.b16 %v699
    %v1460 = vunpack.c.l.b16 %v700
    %v1461 = vunpack.c.h.b16 %v700
    %v1462 = vunpack.c.l.b16 %v701
    %v1463 = vunpack.c.h.b16 %v701
    %v1464 = vunpack.c.l.b16 %v702
    %v1465 = vunpack.c.h.b16 %v702
    %v1466 = vunpack.c.l.b16 %v703
    %v1467 = vunpack.c.h.b16 %v703
    %v1468 = vunpack.c.l.b16 %v704
    %v1469 = vunpack.c.h.b16 %v704
    %v1470 = vunpack.c.l.b16 %v705
    %v1471 = vunpack.c.h.b16 %v705
    %v1472 = vunpack.c.l.b16 %v706
    %v1473 = vunpack.c.h.b16 %v706
    %v1474 = vunpack.c.l.b16 %v707
    %v1475 = vunpack.c.h.b16 %v707
    %v1476 = vunpack.c.l.b16 %v708
    %v1477 = vunpack.c.h.b16 %v708
    %v1478 = vunpack.c.l.b16 %v709
    %v1479 = vunpack.c.h.b16 %v709
    %v1480 = vunpack.c.l.b16 %v710
    %v1481 = vunpack.c.h.b16 %v710
    %v1482 = vunpack.c.l.b16 %v711
    %v1483 = vunpack.c.h.b16 %v711
    %v1484 = vunpack.c.l.b16 %v712
    %v1485 = vunpack.c.h.b16 %v712
    %v1486 = vunpack.c.l.b16 %v713
    %v1487 = vunpack.c.h.b16 %v713
    %v1488 = vunpack.c.l.b16 %v714
    %v1489 = vunpack.c.h.b16 %v714
    %v1490 = vunpack.c.l.b16 %v715
    %v1491 = vunpack.c.h.b16 %v715
    %v1492 = vunpack.c.l.b16 %v716
    %v1493 = vunpack.c.h.b16 %v716
    %v1494 = vunpack.c.l.b16 %v717
    %v1495 = vunpack.c.h.b16 %v717
    %v1496 = vunpack.c.l.b16 %v718
    %v1497 = vunpack.c.h.b16 %v718
    %v1498 = vunpack.c.l.b16 %v719
    %v1499 = vunpack.c.h.b16 %v719
    %v1500 = vunpack.c.l.b16 %v720
    %v1501 = vunpack.c.h.b16 %v720
    %v1502 = vunpack.c.l.b16 %v721
    %v1503 = vunpack.c.h.b16 %v721
    %v1504 = vunpack.c.l.b16 %v722
    %v1505 = vunpack.c.h.b16 %v722
    %v1506 = vunpack.c.l.b16 %v723
    %v1507 = vunpack.c.h.b16 %v723
    %v1508 = vunpack.c.l.b16 %v724
    %v1509 = vunpack.c.h.b16 %v724
    %v1510 = vunpack.c.l.b16 %v725
    %v1511 = vunpack.c.h.b16 %v725
    %v1512 = vunpack.c.l.b16 %v726
    %v1513 = vunpack.c.h.b16 %v726
    %v1514 = vunpack.c.l.b16 %v727
    %v1515 = vunpack.c.h.b16 %v727
    %v1516 = vunpack.c.l.b16 %v728
    %v1517 = vunpack.c.h.b16 %v728
    %v1518 = vunpack.c.l.b16 %v729
    %v1519 = vunpack.c.h.b16 %v729
    %v1520 = vpack.c.b16 %v1012, %v1008
    %v1521 = vpack.c.b16 %v1013, %v1009
    %v1522 = vpack.c.b16 %v1014, %v1010
    %v1523 = vpack.c.b16 %v1015, %v1011
    %v1524 = vpack.c.b16 %v1020, %v1016
    %v1525 = vpack.c.b16 %v1021, %v1017
    %v1526 = vpack.c.b16 %v1022, %v1018
    %v1527 = vpack.c.b16 %v1023, %v1019
    %v1528 = vpack.c.b16 %v1028, %v1024
    %v1529 = vpack.c.b16 %v1029, %v1025
    %v1530 = vpack.c.b16 %v1030, %v1026
    %v1531 = vpack.c.b16 %v1031, %v1027
    %v1532 = vpack.c.b16 %v1036, %v1032
    %v1533 = vpack.c.b16 %v1037, %v1033
    %v1534 = vpack.c.b16 %v1038, %v1034
    %v1535 = vpack.c.b16 %v1039, %v1035
    %v1536 = vpack.c.b16 %v1044, %v1040
    %v1537 = vpack.c.b16 %v1045, %v1041
    %v1538 = vpack.c.b16 %v1046, %v1042
    %v1539 = vpack.c.b16 %v1047, %v1043
    %v1540 = vpack.c.b16 %v1052, %v1048
    %v1541 = vpack.c.b16 %v1053, %v1049
    %v1542 = vpack.c.b16 %v1054, %v1050
    %v1543 = vpack.c.b16 %v1055, %v1051
    %v1544 = vpack.c.b16 %v1060, %v1056
    %v1545 = vpack.c.b16 %v1061, %v1057
    %v1546 = vpack.c.b16 %v1062, %v1058
    %v1547 = vpack.c.b16 %v1063, %v1059
    %v1548 = vpack.c.b16 %v1068, %v1064
    %v1549 = vpack.c.b16 %v1069, %v1065
    %v1550 = vpack.c.b16 %v1070, %v1066
    %v1551 = vpack.c.b16 %v1071, %v1067
    %v1552 = vpack.c.b16 %v1076, %v1072
    %v1553 = vpack.c.b16 %v1077, %v1073
    %v1554 = vpack.c.b16 %v1078, %v1074
    %v1555 = vpack.c.b16 %v1079, %v1075
    %v1556 = vpack.c.b16 %v1084, %v1080
    %v1557 = vpack.c.b16 %v1085, %v1081
    %v1558 = vpack.c.b16 %v1086, %v1082
    %v1559 = vpack.c.b16 %v1087, %v1083
    %v1560 = vpack.c.b16 %v1092, %v1088
    %v1561 = vpack.c.b16 %v1093, %v1089
    %v1562 = vpack.c.b16 %v1094, %v1090
    %v1563 = vpack.c.b16 %v1095, %v1091
    %v1564 = vpack.c.b16 %v1100, %v1096
    %v1565 = vpack.c.b16 %v1101, %v1097
    %v1566 = vpack.c.b16 %v1102, %v1098
    %v1567 = vpack.c.b16 %v1103, %v1099
    %v1568 = vpack.c.b16 %v1108, %v1104
    %v1569 = vpack.c.b16 %v1109, %v1105
    %v1570 = vpack.c.b16 %v1110, %v1106
    %v1571 = vpack.c.b16 %v1111, %v1107
    %v1572 = vpack.c.b16 %v1116, %v1112
    %v1573 = vpack.c.b16 %v1117, %v1113
    %v1574 = vpack.c.b16 %v1118, %v1114
    %v1575 = vpack.c.b16 %v1119, %v1115
    %v1576 = vpack.c.b16 %v1124, %v1120
    %v1577 = vpack.c.b16 %v1125, %v1121
    %v1578 = vpack.c.b16 %v1126, %v1122
    %v1579 = vpack.c.b16 %v1127, %v1123
    %v1580 = vpack.c.b16 %v1132, %v1128
    %v1581 = vpack.c.b16 %v1133, %v1129
    %v1582 = vpack.c.b16 %v1134, %v1130
    %v1583 = vpack.c.b16 %v1135, %v1131
    %v1584 = vpack.c.b16 %v1140, %v1136
    %v1585 = vpack.c.b16 %v1141, %v1137
    %v1586 = vpack.c.b16 %v1142, %v1138
    %v1587 = vpack.c.b16 %v1143, %v1139
    %v1588 = vpack.c.b16 %v1148, %v1144
    %v1589 = vpack.c.b16 %v1149, %v1145
    %v1590 = vpack.c.b16 %v1150, %v1146
    %v1591 = vpack.c.b16 %v1151, %v1147
    %v1592 = vpack.c.b16 %v1156, %v1152
    %v1593 = vpack.c.b16 %v1157, %v1153
    %v1594 = vpack.c.b16 %v1158, %v1154
    %v1595 = vpack.c.b16 %v1159, %v1155
    %v1596 = vpack.c.b16 %v1164, %v1160
    %v1597 = vpack.c.b16 %v1165, %v1161
    %v1598 = vpack.c.b16 %v1166, %v1162
    %v1599 = vpack.c.b16 %v1167, %v1163
    %v1600 = vpack.c.b16 %v1172, %v1168
    %v1601 = vpack.c.b16 %v1173, %v1169
    %v1602 = vpack.c.b16 %v1174, %v1170
    %v1603 = vpack.c.b16 %v1175, %v1171
    %v1604 = vpack.c.b16 %v1180, %v1176
    %v1605 = vpack.c.b16 %v1181, %v1177
    %v1606 = vpack.c.b16 %v1182, %v1178
    %v1607 = vpack.c.b16 %v1183, %v1179
    %v1608 = vpack.c.b16 %v1188, %v1184
    %v1609 = vpack.c.b16 %v1189, %v1185
    %v1610 = vpack.c.b16 %v1190, %v1186
    %v1611 = vpack.c.b16 %v1191, %v1187
    %v1612 = vpack.c.b16 %v1196, %v1192
    %v1613 = vpack.c.b16 %v1197, %v1193
    %v1614 = vpack.c.b16 %v1198, %v1194
    %v1615 = vpack.c.b16 %v1199, %v1195
    %v1616 = vpack.c.b16 %v1204, %v1200
    %v1617 = vpack.c.b16 %v1205, %v1201
    %v1618 = vpack.c.b16 %v1206, %v1202
    %v1619 = vpack.c.b16 %v1207, %v1203
    %v1620 = vpack.c.b16 %v1212, %v1208
    %v1621 = vpack.c.b16 %v1213, %v1209
    %v1622 = vpack.c.b16 %v1214, %v1210
    %v1623 = vpack.c.b16 %v1215, %v1211
    %v1624 = vpack.c.b16 %v1220, %v1216
    %v1625 = vpack.c.b16 %v1221, %v1217
    %v1626 = vpack.c.b16 %v1222, %v1218
    %v1627 = vpack.c.b16 %v1223, %v1219
    %v1628 = vpack.c.b16 %v1228, %v1224
    %v1629 = vpack.c.b16 %v1229, %v1225
    %v1630 = vpack.c.b16 %v1230, %v1226
    %v1631 = vpack.c.b16 %v1231, %v1227
    %v1632 = vpack.c.b16 %v1236, %v1232
    %v1633 = vpack.c.b16 %v1237, %v1233
    %v1634 = vpack.c.b16 %v1238, %v1234
    %v1635 = vpack.c.b16 %v1239, %v1235
    %v1636 = vpack.c.b16 %v1244, %v1240
    %v1637 = vpack.c.b16 %v1245, %v1241
    %v1638 = vpack.c.b16 %v1246, %v1242
    %v1639 = vpack.c.b16 %v1247, %v1243
    %v1640 = vpack.c.b16 %v1252, %v1248
    %v1641 = vpack.c.b16 %v1253, %v1249
    %v1642 = vpack.c.b16 %v1254, %v1250
    %v1643 = vpack.c.b16 %v1255, %v1251
    %v1644 = vpack.c.b16 %v1260, %v1256
    %v1645 = vpack.c.b16 %v1261, %v1257
    %v1646 = vpack.c.b16 %v1262, %v1258
    %v1647 = vpack.c.b16 %v1263, %v1259
    %v1648 = vpack.c.b16 %v1268, %v1264
    %v1649 = vpack.c.b16 %v1269, %v1265
    %v1650 = vpack.c.b16 %v1270, %v1266
    %v1651 = vpack.c.b16 %v1271, %v1267
    %v1652 = vpack.c.b16 %v1276, %v1272
    %v1653 = vpack.c.b16 %v1277, %v1273
    %v1654 = vpack.c.b16 %v1278, %v1274
    %v1655 = vpack.c.b16 %v1279, %v1275
    %v1656 = vpack.c.b16 %v1284, %v1280
    %v1657 = vpack.c.b16 %v1285, %v1281
    %v1658 = vpack.c.b16 %v1286, %v1282
    %v1659 = vpack.c.b16 %v1287, %v1283
    %v1660 = vpack.c.b16 %v1292, %v1288
    %v1661 = vpack.c.b16 %v1293, %v1289
    %v1662 = vpack.c.b16 %v1294, %v1290
    %v1663 = vpack.c.b16 %v1295, %v1291
    %v1664 = vpack.c.b16 %v1300, %v1296
    %v1665 = vpack.c.b16 %v1301, %v1297
    %v1666 = vpack.c.b16 %v1302, %v1298
    %v1667 = vpack.c.b16 %v1303, %v1299
    %v1668 = vpack.c.b16 %v1308, %v1304
    %v1669 = vpack.c.b16 %v1309, %v1305
    %v1670 = vpack.c.b16 %v1310, %v1306
    %v1671 = vpack.c.b16 %v1311, %v1307
    %v1672 = vpack.c.b16 %v1316, %v1312
    %v1673 = vpack.c.b16 %v1317, %v1313
    %v1674 = vpack.c.b16 %v1318, %v1314
    %v1675 = vpack.c.b16 %v1319, %v1315
    %v1676 = vpack.c.b16 %v1324, %v1320
    %v1677 = vpack.c.b16 %v1325, %v1321
    %v1678 = vpack.c.b16 %v1326, %v1322
    %v1679 = vpack.c.b16 %v1327, %v1323
    %v1680 = vpack.c.b16 %v1332, %v1328
    %v1681 = vpack.c.b16 %v1333, %v1329
    %v1682 = vpack.c.b16 %v1334, %v1330
    %v1683 = vpack.c.b16 %v1335, %v1331
    %v1684 = vpack.c.b16 %v1340, %v1336
    %v1685 = vpack.c.b16 %v1341, %v1337
    %v1686 = vpack.c.b16 %v1342, %v1338
    %v1687 = vpack.c.b16 %v1343, %v1339
    %v1688 = vpack.c.b16 %v1348, %v1344
    %v1689 = vpack.c.b16 %v1349, %v1345
    %v1690 = vpack.c.b16 %v1350, %v1346
    %v1691 = vpack.c.b16 %v1351, %v1347
    %v1692 = vpack.c.b16 %v1356, %v1352
    %v1693 = vpack.c.b16 %v1357, %v1353
    %v1694 = vpack.c.b16 %v1358, %v1354
    %v1695 = vpack.c.b16 %v1359, %v1355
    %v1696 = vpack.c.b16 %v1364, %v1360
    %v1697 = vpack.c.b16 %v1365, %v1361
    %v1698 = vpack.c.b16 %v1366, %v1362
    %v1699 = vpack.c.b16 %v1367, %v1363
    %v1700 = vpack.c.b16 %v1372, %v1368
    %v1701 = vpack.c.b16 %v1373, %v1369
    %v1702 = vpack.c.b16 %v1374, %v1370
    %v1703 = vpack.c.b16 %v1375, %v1371
    %v1704 = vpack.c.b16 %v1380, %v1376
    %v1705 = vpack.c.b16 %v1381, %v1377
    %v1706 = vpack.c.b16 %v1382, %v1378
    %v1707 = vpack.c.b16 %v1383, %v1379
    %v1708 = vpack.c.b16 %v1388, %v1384
    %v1709 = vpack.c.b16 %v1389, %v1385
    %v1710 = vpack.c.b16 %v1390, %v1386
    %v1711 = vpack.c.b16 %v1391, %v1387
    %v1712 = vpack.c.b16 %v1396, %v1392
    %v1713 = vpack.c.b16 %v1397, %v1393
    %v1714 = vpack.c.b16 %v1398, %v1394
    %v1715 = vpack.c.b16 %v1399, %v1395
    %v1716 = vpack.c.b16 %v1404, %v1400
    %v1717 = vpack.c.b16 %v1405, %v1401
    %v1718 = vpack.c.b16 %v1406, %v1402
    %v1719 = vpack.c.b16 %v1407, %v1403
    %v1720 = vpack.c.b16 %v1412, %v1408
    %v1721 = vpack.c.b16 %v1413, %v1409
    %v1722 = vpack.c.b16 %v1414, %v1410
    %v1723 = vpack.c.b16 %v1415, %v1411
    %v1724 = vpack.c.b16 %v1420, %v1416
    %v1725 = vpack.c.b16 %v1421, %v1417
    %v1726 = vpack.c.b16 %v1422, %v1418
    %v1727 = vpack.c.b16 %v1423, %v1419
    %v1728 = vpack.c.b16 %v1428, %v1424
    %v1729 = vpack.c.b16 %v1429, %v1425
    %v1730 = vpack.c.b16 %v1430, %v1426
    %v1731 = vpack.c.b16 %v1431, %v1427
    %v1732 = vpack.c.b16 %v1436, %v1432
    %v1733 = vpack.c.b16 %v1437, %v1433
    %v1734 = vpack.c.b16 %v1438, %v1434
    %v1735 = vpack.c.b16 %v1439, %v1435
    %v1736 = vpack.c.b16 %v1444, %v1440
    %v1737 = vpack.c.b16 %v1445, %v1441
    %v1738 = vpack.c.b16 %v1446, %v1442
    %v1739 = vpack.c.b16 %v1447, %v1443
    %v1740 = vpack.c.b16 %v1452, %v1448
    %v1741 = vpack.c.b16 %v1453, %v1449
    %v1742 = vpack.c.b16 %v1454, %v1450
    %v1743 = vpack.c.b16 %v1455, %v1451
    %v1744 = vpack.c.b16 %v1460, %v1456
    %v1745 = vpack.c.b16 %v1461, %v1457
    %v1746 = vpack.c.b16 %v1462, %v1458
    %v1747 = vpack.c.b16 %v1463, %v1459
    %v1748 = vpack.c.b16 %v1468, %v1464
    %v1749 = vpack.c.b16 %v1469, %v1465
    %v1750 = vpack.c.b16 %v1470, %v1466
    %v1751 = vpack.c.b16 %v1471, %v1467
    %v1752 = vpack.c.b16 %v1476, %v1472
    %v1753 = vpack.c.b16 %v1477, %v1473
    %v1754 = vpack.c.b16 %v1478, %v1474
    %v1755 = vpack.c.b16 %v1479, %v1475
    %v1756 = vpack.c.b16 %v1484, %v1480
    %v1757 = vpack.c.b16 %v1485, %v1481
    %v1758 = vpack.c.b16 %v1486, %v1482
    %v1759 = vpack.c.b16 %v1487, %v1483
    %v1760 = vpack.c.b16 %v1492, %v1488
    %v1761 = vpack.c.b16 %v1493, %v1489
    %v1762 = vpack.c.b16 %v1494, %v1490
    %v1763 = vpack.c.b16 %v1495, %v1491
    %v1764 = vpack.c.b16 %v1500, %v1496
    %v1765 = vpack.c.b16 %v1501, %v1497
    %v1766 = vpack.c.b16 %v1502, %v1498
    %v1767 = vpack.c.b16 %v1503, %v1499
    %v1768 = vpack.c.b16 %v1508, %v1504
    %v1769 = vpack.c.b16 %v1509, %v1505
    %v1770 = vpack.c.b16 %v1510, %v1506
    %v1771 = vpack.c.b16 %v1511, %v1507
    %v1772 = vpack.c.b16 %v1516, %v1512
    %v1773 = vpack.c.b16 %v1517, %v1513
    %v1774 = vpack.c.b16 %v1518, %v1514
    %v1775 = vpack.c.b16 %v1519, %v1515
    %2032 = vmatprep.subr.bf16.mxu0 %v1521
    %2033 = vmatpush1.bf16.msra.mxu0 %v1520
    %2034 = vmatprep.subr.bf16.mxu0 %v1525
    %2035 = vmatpush1.bf16.msra.mxu0 %v1524
    %2036 = vmatprep.subr.bf16.mxu0 %v1529
    %2037 = vmatpush1.bf16.msra.mxu0 %v1528
    %2038 = vmatprep.subr.bf16.mxu0 %v1533
    %2039 = vmatpush1.bf16.msra.mxu0 %v1532
    %2040 = vmatprep.subr.bf16.mxu0 %v1537
    %2041 = vmatpush1.bf16.msra.mxu0 %v1536
    %2042 = vmatprep.subr.bf16.mxu0 %v1541
    %2043 = vmatpush1.bf16.msra.mxu0 %v1540
    %2044 = vmatprep.subr.bf16.mxu0 %v1545
    %2045 = vmatpush1.bf16.msra.mxu0 %v1544
    %2046 = vmatprep.subr.bf16.mxu0 %v1549
    %2047 = vmatpush1.bf16.msra.mxu0 %v1548
    %2048 = vmatprep.subr.bf16.mxu0 %v1553
    %2049 = vmatpush1.bf16.msra.mxu0 %v1552
    %2050 = vmatprep.subr.bf16.mxu0 %v1557
    %2051 = vmatpush1.bf16.msra.mxu0 %v1556
    %2052 = vmatprep.subr.bf16.mxu0 %v1561
    %2053 = vmatpush1.bf16.msra.mxu0 %v1560
    %2054 = vmatprep.subr.bf16.mxu0 %v1565
    %2055 = vmatpush1.bf16.msra.mxu0 %v1564
    %2056 = vmatprep.subr.bf16.mxu0 %v1569
    %2057 = vmatpush1.bf16.msra.mxu0 %v1568
    %2058 = vmatprep.subr.bf16.mxu0 %v1573
    %2059 = vmatpush1.bf16.msra.mxu0 %v1572
    %2060 = vmatprep.subr.bf16.mxu0 %v1577
    %2061 = vmatpush1.bf16.msra.mxu0 %v1576
    %2062 = vmatprep.subr.bf16.mxu0 %v1581
    %2063 = vmatpush1.bf16.msra.mxu0 %v1580
    %2064 = vmatprep.mubr.bf16.mxu0 %v467
    %2065 = vmatmul.mubr.bf16.gmra.mrb[0].mxu0 %v466
    %v2066 = vpop.f32.mrb[0].mxu0
    %v2067 = vadd.f32 %v735, %v2066
    %v2068 = vpop.f32.mrb[0].mxu0
    %v2069 = vadd.f32 %v739, %v2068
    %v2070 = vpop.f32.mrb[0].mxu0
    %v2071 = vadd.f32 %v735, %v2070
    %v2072 = vpop.f32.mrb[0].mxu0
    %v2073 = vadd.f32 %v739, %v2072
    %2074 = vdwg.mxu0
    %2075 = vmatprep.subr.bf16.mxu0 %v1585
    %2076 = vmatpush1.bf16.msra.mxu0 %v1584
    %2077 = vmatprep.subr.bf16.mxu0 %v1589
    %2078 = vmatpush1.bf16.msra.mxu0 %v1588
    %2079 = vmatprep.subr.bf16.mxu0 %v1593
    %2080 = vmatpush1.bf16.msra.mxu0 %v1592
    %2081 = vmatprep.subr.bf16.mxu0 %v1597
    %2082 = vmatpush1.bf16.msra.mxu0 %v1596
    %2083 = vmatprep.subr.bf16.mxu0 %v1601
    %2084 = vmatpush1.bf16.msra.mxu0 %v1600
    %2085 = vmatprep.subr.bf16.mxu0 %v1605
    %2086 = vmatpush1.bf16.msra.mxu0 %v1604
    %2087 = vmatprep.subr.bf16.mxu0 %v1609
    %2088 = vmatpush1.bf16.msra.mxu0 %v1608
    %2089 = vmatprep.subr.bf16.mxu0 %v1613
    %2090 = vmatpush1.bf16.msra.mxu0 %v1612
    %2091 = vmatprep.subr.bf16.mxu0 %v1617
    %2092 = vmatpush1.bf16.msra.mxu0 %v1616
    %2093 = vmatprep.subr.bf16.mxu0 %v1621
    %2094 = vmatpush1.bf16.msra.mxu0 %v1620
    %2095 = vmatprep.subr.bf16.mxu0 %v1625
    %2096 = vmatpush1.bf16.msra.mxu0 %v1624
    %2097 = vmatprep.subr.bf16.mxu0 %v1629
    %2098 = vmatpush1.bf16.msra.mxu0 %v1628
    %2099 = vmatprep.subr.bf16.mxu0 %v1633
    %2100 = vmatpush1.bf16.msra.mxu0 %v1632
    %2101 = vmatprep.subr.bf16.mxu0 %v1637
    %2102 = vmatpush1.bf16.msra.mxu0 %v1636
    %2103 = vmatprep.subr.bf16.mxu0 %v1641
    %2104 = vmatpush1.bf16.msra.mxu0 %v1640
    %2105 = vmatprep.subr.bf16.mxu0 %v1645
    %2106 = vmatpush1.bf16.msra.mxu0 %v1644
    %2107 = vmatprep.mubr.bf16.mxu0 %v469
    %2108 = vmatmul.mubr.bf16.gmra.mrb[0].mxu0 %v468
    %v2109 = vpop.f32.mrb[0].mxu0
    %v2110 = vadd.f32 %v2067, %v2109
    %v2111 = vpop.f32.mrb[0].mxu0
    %v2112 = vadd.f32 %v2069, %v2111
    %v2113 = vpop.f32.mrb[0].mxu0
    %v2114 = vadd.f32 %v2071, %v2113
    %v2115 = vpop.f32.mrb[0].mxu0
    %v2116 = vadd.f32 %v2073, %v2115
    %2117 = vdwg.mxu0
    %2118 = vmatprep.subr.bf16.mxu0 %v1649
    %2119 = vmatpush1.bf16.msra.mxu0 %v1648
    %2120 = vmatprep.subr.bf16.mxu0 %v1653
    %2121 = vmatpush1.bf16.msra.mxu0 %v1652
    %2122 = vmatprep.subr.bf16.mxu0 %v1657
    %2123 = vmatpush1.bf16.msra.mxu0 %v1656
    %2124 = vmatprep.subr.bf16.mxu0 %v1661
    %2125 = vmatpush1.bf16.msra.mxu0 %v1660
    %2126 = vmatprep.subr.bf16.mxu0 %v1665
    %2127 = vmatpush1.bf16.msra.mxu0 %v1664
    %2128 = vmatprep.subr.bf16.mxu0 %v1669
    %2129 = vmatpush1.bf16.msra.mxu0 %v1668
    %2130 = vmatprep.subr.bf16.mxu0 %v1673
    %2131 = vmatpush1.bf16.msra.mxu0 %v1672
    %2132 = vmatprep.subr.bf16.mxu0 %v1677
    %2133 = vmatpush1.bf16.msra.mxu0 %v1676
    %2134 = vmatprep.subr.bf16.mxu0 %v1681
    %2135 = vmatpush1.bf16.msra.mxu0 %v1680
    %2136 = vmatprep.subr.bf16.mxu0 %v1685
    %2137 = vmatpush1.bf16.msra.mxu0 %v1684
    %2138 = vmatprep.subr.bf16.mxu0 %v1689
    %2139 = vmatpush1.bf16.msra.mxu0 %v1688
    %2140 = vmatprep.subr.bf16.mxu0 %v1693
    %2141 = vmatpush1.bf16.msra.mxu0 %v1692
    %2142 = vmatprep.subr.bf16.mxu0 %v1697
    %2143 = vmatpush1.bf16.msra.mxu0 %v1696
    %2144 = vmatprep.subr.bf16.mxu0 %v1701
    %2145 = vmatpush1.bf16.msra.mxu0 %v1700
    %2146 = vmatprep.subr.bf16.mxu0 %v1705
    %2147 = vmatpush1.bf16.msra.mxu0 %v1704
    %2148 = vmatprep.subr.bf16.mxu0 %v1709
    %2149 = vmatpush1.bf16.msra.mxu0 %v1708
    %2150 = vmatprep.mubr.bf16.mxu0 %v471
    %2151 = vmatmul.mubr.bf16.gmra.mrb[0].mxu0 %v470
    %v2152 = vpop.f32.mrb[0].mxu0
    %v2153 = vadd.f32 %v2110, %v2152
    %v2154 = vpop.f32.mrb[0].mxu0
    %v2155 = vadd.f32 %v2112, %v2154
    %v2156 = vpop.f32.mrb[0].mxu0
    %v2157 = vadd.f32 %v2114, %v2156
    %v2158 = vpop.f32.mrb[0].mxu0
    %v2159 = vadd.f32 %v2116, %v2158
    %2160 = vdwg.mxu0
    %2161 = vmatprep.subr.bf16.mxu0 %v1713
    %2162 = vmatpush1.bf16.msra.mxu0 %v1712
    %2163 = vmatprep.subr.bf16.mxu0 %v1717
    %2164 = vmatpush1.bf16.msra.mxu0 %v1716
    %2165 = vmatprep.subr.bf16.mxu0 %v1721
    %2166 = vmatpush1.bf16.msra.mxu0 %v1720
    %2167 = vmatprep.subr.bf16.mxu0 %v1725
    %2168 = vmatpush1.bf16.msra.mxu0 %v1724
    %2169 = vmatprep.subr.bf16.mxu0 %v1729
    %2170 = vmatpush1.bf16.msra.mxu0 %v1728
    %2171 = vmatprep.subr.bf16.mxu0 %v1733
    %2172 = vmatpush1.bf16.msra.mxu0 %v1732
    %2173 = vmatprep.subr.bf16.mxu0 %v1737
    %2174 = vmatpush1.bf16.msra.mxu0 %v1736
    %2175 = vmatprep.subr.bf16.mxu0 %v1741
    %2176 = vmatpush1.bf16.msra.mxu0 %v1740
    %2177 = vmatprep.subr.bf16.mxu0 %v1745
    %2178 = vmatpush1.bf16.msra.mxu0 %v1744
    %2179 = vmatprep.subr.bf16.mxu0 %v1749
    %2180 = vmatpush1.bf16.msra.mxu0 %v1748
    %2181 = vmatprep.subr.bf16.mxu0 %v1753
    %2182 = vmatpush1.bf16.msra.mxu0 %v1752
    %2183 = vmatprep.subr.bf16.mxu0 %v1757
    %2184 = vmatpush1.bf16.msra.mxu0 %v1756
    %2185 = vmatprep.subr.bf16.mxu0 %v1761
    %2186 = vmatpush1.bf16.msra.mxu0 %v1760
    %2187 = vmatprep.subr.bf16.mxu0 %v1765
    %2188 = vmatpush1.bf16.msra.mxu0 %v1764
    %2189 = vmatprep.subr.bf16.mxu0 %v1769
    %2190 = vmatpush1.bf16.msra.mxu0 %v1768
    %2191 = vmatprep.subr.bf16.mxu0 %v1773
    %2192 = vmatpush1.bf16.msra.mxu0 %v1772
    %2193 = vmatprep.mubr.bf16.mxu0 %v473
    %2194 = vmatmul.mubr.bf16.gmra.mrb[0].mxu0 %v472
    %v2195 = vpop.f32.mrb[0].mxu0
    %v2196 = vadd.f32 %v2153, %v2195
    %v2197 = vpop.f32.mrb[0].mxu0
    %v2198 = vadd.f32 %v2155, %v2197
    %v2199 = vpop.f32.mrb[0].mxu0
    %v2200 = vadd.f32 %v2157, %v2199
    %v2201 = vpop.f32.mrb[0].mxu0
    %v2202 = vadd.f32 %v2159, %v2201
    %2203 = vdwg.mxu0
    %2204 = vmatprep.subr.bf16.mxu0 %v1523
    %2205 = vmatpush1.bf16.msra.mxu0 %v1522
    %2206 = vmatprep.subr.bf16.mxu0 %v1527
    %2207 = vmatpush1.bf16.msra.mxu0 %v1526
    %2208 = vmatprep.subr.bf16.mxu0 %v1531
    %2209 = vmatpush1.bf16.msra.mxu0 %v1530
    %2210 = vmatprep.subr.bf16.mxu0 %v1535
    %2211 = vmatpush1.bf16.msra.mxu0 %v1534
    %2212 = vmatprep.subr.bf16.mxu0 %v1539
    %2213 = vmatpush1.bf16.msra.mxu0 %v1538
    %2214 = vmatprep.subr.bf16.mxu0 %v1543
    %2215 = vmatpush1.bf16.msra.mxu0 %v1542
    %2216 = vmatprep.subr.bf16.mxu0 %v1547
    %2217 = vmatpush1.bf16.msra.mxu0 %v1546
    %2218 = vmatprep.subr.bf16.mxu0 %v1551
    %2219 = vmatpush1.bf16.msra.mxu0 %v1550
    %2220 = vmatprep.subr.bf16.mxu0 %v1555
    %2221 = vmatpush1.bf16.msra.mxu0 %v1554
    %2222 = vmatprep.subr.bf16.mxu0 %v1559
    %2223 = vmatpush1.bf16.msra.mxu0 %v1558
    %2224 = vmatprep.subr.bf16.mxu0 %v1563
    %2225 = vmatpush1.bf16.msra.mxu0 %v1562
    %2226 = vmatprep.subr.bf16.mxu0 %v1567
    %2227 = vmatpush1.bf16.msra.mxu0 %v1566
    %2228 = vmatprep.subr.bf16.mxu0 %v1571
    %2229 = vmatpush1.bf16.msra.mxu0 %v1570
    %2230 = vmatprep.subr.bf16.mxu0 %v1575
    %2231 = vmatpush1.bf16.msra.mxu0 %v1574
    %2232 = vmatprep.subr.bf16.mxu0 %v1579
    %2233 = vmatpush1.bf16.msra.mxu0 %v1578
    %2234 = vmatprep.subr.bf16.mxu0 %v1583
    %2235 = vmatpush1.bf16.msra.mxu0 %v1582
    %2236 = vmatprep.mubr.bf16.mxu0 %v467
    %2237 = vmatmul.mubr.bf16.gmra.mrb[0].mxu0 %v466
    %v2238 = vpop.f32.mrb[0].mxu0
    %v2239 = vadd.f32 %v743, %v2238
    %v2240 = vpop.f32.mrb[0].mxu0
    %v2241 = vadd.f32 %v747, %v2240
    %v2242 = vpop.f32.mrb[0].mxu0
    %v2243 = vadd.f32 %v743, %v2242
    %v2244 = vpop.f32.mrb[0].mxu0
    %v2245 = vadd.f32 %v747, %v2244
    %2246 = vdwg.mxu0
    %2247 = vmatprep.subr.bf16.mxu0 %v1587
    %2248 = vmatpush1.bf16.msra.mxu0 %v1586
    %2249 = vmatprep.subr.bf16.mxu0 %v1591
    %2250 = vmatpush1.bf16.msra.mxu0 %v1590
    %2251 = vmatprep.subr.bf16.mxu0 %v1595
    %2252 = vmatpush1.bf16.msra.mxu0 %v1594
    %2253 = vmatprep.subr.bf16.mxu0 %v1599
    %2254 = vmatpush1.bf16.msra.mxu0 %v1598
    %2255 = vmatprep.subr.bf16.mxu0 %v1603
    %2256 = vmatpush1.bf16.msra.mxu0 %v1602
    %2257 = vmatprep.subr.bf16.mxu0 %v1607
    %2258 = vmatpush1.bf16.msra.mxu0 %v1606
    %2259 = vmatprep.subr.bf16.mxu0 %v1611
    %2260 = vmatpush1.bf16.msra.mxu0 %v1610
    %2261 = vmatprep.subr.bf16.mxu0 %v1615
    %2262 = vmatpush1.bf16.msra.mxu0 %v1614
    %2263 = vmatprep.subr.bf16.mxu0 %v1619
    %2264 = vmatpush1.bf16.msra.mxu0 %v1618
    %2265 = vmatprep.subr.bf16.mxu0 %v1623
    %2266 = vmatpush1.bf16.msra.mxu0 %v1622
    %2267 = vmatprep.subr.bf16.mxu0 %v1627
    %2268 = vmatpush1.bf16.msra.mxu0 %v1626
    %2269 = vmatprep.subr.bf16.mxu0 %v1631
    %2270 = vmatpush1.bf16.msra.mxu0 %v1630
    %2271 = vmatprep.subr.bf16.mxu0 %v1635
    %2272 = vmatpush1.bf16.msra.mxu0 %v1634
    %2273 = vmatprep.subr.bf16.mxu0 %v1639
    %2274 = vmatpush1.bf16.msra.mxu0 %v1638
    %2275 = vmatprep.subr.bf16.mxu0 %v1643
    %2276 = vmatpush1.bf16.msra.mxu0 %v1642
    %2277 = vmatprep.subr.bf16.mxu0 %v1647
    %2278 = vmatpush1.bf16.msra.mxu0 %v1646
    %2279 = vmatprep.mubr.bf16.mxu0 %v469
    %2280 = vmatmul.mubr.bf16.gmra.mrb[0].mxu0 %v468
    %v2281 = vpop.f32.mrb[0].mxu0
    %v2282 = vadd.f32 %v2239, %v2281
    %v2283 = vpop.f32.mrb[0].mxu0
    %v2284 = vadd.f32 %v2241, %v2283
    %v2285 = vpop.f32.mrb[0].mxu0
    %v2286 = vadd.f32 %v2243, %v2285
    %v2287 = vpop.f32.mrb[0].mxu0
    %v2288 = vadd.f32 %v2245, %v2287
    %2289 = vdwg.mxu0
    %2290 = vmatprep.subr.bf16.mxu0 %v1651
    %2291 = vmatpush1.bf16.msra.mxu0 %v1650
    %2292 = vmatprep.subr.bf16.mxu0 %v1655
    %2293 = vmatpush1.bf16.msra.mxu0 %v1654
    %2294 = vmatprep.subr.bf16.mxu0 %v1659
    %2295 = vmatpush1.bf16.msra.mxu0 %v1658
    %2296 = vmatprep.subr.bf16.mxu0 %v1663
    %2297 = vmatpush1.bf16.msra.mxu0 %v1662
    %2298 = vmatprep.subr.bf16.mxu0 %v1667
    %2299 = vmatpush1.bf16.msra.mxu0 %v1666
    %2300 = vmatprep.subr.bf16.mxu0 %v1671
    %2301 = vmatpush1.bf16.msra.mxu0 %v1670
    %2302 = vmatprep.subr.bf16.mxu0 %v1675
    %2303 = vmatpush1.bf16.msra.mxu0 %v1674
    %2304 = vmatprep.subr.bf16.mxu0 %v1679
    %2305 = vmatpush1.bf16.msra.mxu0 %v1678
    %2306 = vmatprep.subr.bf16.mxu0 %v1683
    %2307 = vmatpush1.bf16.msra.mxu0 %v1682
    %2308 = vmatprep.subr.bf16.mxu0 %v1687
    %2309 = vmatpush1.bf16.msra.mxu0 %v1686
    %2310 = vmatprep.subr.bf16.mxu0 %v1691
    %2311 = vmatpush1.bf16.msra.mxu0 %v1690
    %2312 = vmatprep.subr.bf16.mxu0 %v1695
    %2313 = vmatpush1.bf16.msra.mxu0 %v1694
    %2314 = vmatprep.subr.bf16.mxu0 %v1699
    %2315 = vmatpush1.bf16.msra.mxu0 %v1698
    %2316 = vmatprep.subr.bf16.mxu0 %v1703
    %2317 = vmatpush1.bf16.msra.mxu0 %v1702
    %2318 = vmatprep.subr.bf16.mxu0 %v1707
    %2319 = vmatpush1.bf16.msra.mxu0 %v1706
    %2320 = vmatprep.subr.bf16.mxu0 %v1711
    %2321 = vmatpush1.bf16.msra.mxu0 %v1710
    %2322 = vmatprep.mubr.bf16.mxu0 %v471
    %2323 = vmatmul.mubr.bf16.gmra.mrb[0].mxu0 %v470
    %v2324 = vpop.f32.mrb[0].mxu0
    %v2325 = vadd.f32 %v2282, %v2324
    %v2326 = vpop.f32.mrb[0].mxu0
    %v2327 = vadd.f32 %v2284, %v2326
    %v2328 = vpop.f32.mrb[0].mxu0
    %v2329 = vadd.f32 %v2286, %v2328
    %v2330 = vpop.f32.mrb[0].mxu0
    %v2331 = vadd.f32 %v2288, %v2330
    %2332 = vdwg.mxu0
    %2333 = vmatprep.subr.bf16.mxu0 %v1715
    %2334 = vmatpush1.bf16.msra.mxu0 %v1714
    %2335 = vmatprep.subr.bf16.mxu0 %v1719
    %2336 = vmatpush1.bf16.msra.mxu0 %v1718
    %2337 = vmatprep.subr.bf16.mxu0 %v1723
    %2338 = vmatpush1.bf16.msra.mxu0 %v1722
    %2339 = vmatprep.subr.bf16.mxu0 %v1727
    %2340 = vmatpush1.bf16.msra.mxu0 %v1726
    %2341 = vmatprep.subr.bf16.mxu0 %v1731
    %2342 = vmatpush1.bf16.msra.mxu0 %v1730
    %2343 = vmatprep.subr.bf16.mxu0 %v1735
    %2344 = vmatpush1.bf16.msra.mxu0 %v1734
    %2345 = vmatprep.subr.bf16.mxu0 %v1739
    %2346 = vmatpush1.bf16.msra.mxu0 %v1738
    %2347 = vmatprep.subr.bf16.mxu0 %v1743
    %2348 = vmatpush1.bf16.msra.mxu0 %v1742
    %2349 = vmatprep.subr.bf16.mxu0 %v1747
    %2350 = vmatpush1.bf16.msra.mxu0 %v1746
    %2351 = vmatprep.subr.bf16.mxu0 %v1751
    %2352 = vmatpush1.bf16.msra.mxu0 %v1750
    %2353 = vmatprep.subr.bf16.mxu0 %v1755
    %2354 = vmatpush1.bf16.msra.mxu0 %v1754
    %2355 = vmatprep.subr.bf16.mxu0 %v1759
    %2356 = vmatpush1.bf16.msra.mxu0 %v1758
    %2357 = vmatprep.subr.bf16.mxu0 %v1763
    %2358 = vmatpush1.bf16.msra.mxu0 %v1762
    %2359 = vmatprep.subr.bf16.mxu0 %v1767
    %2360 = vmatpush1.bf16.msra.mxu0 %v1766
    %2361 = vmatprep.subr.bf16.mxu0 %v1771
    %2362 = vmatpush1.bf16.msra.mxu0 %v1770
    %2363 = vmatprep.subr.bf16.mxu0 %v1775
    %2364 = vmatpush1.bf16.msra.mxu0 %v1774
    %2365 = vmatprep.mubr.bf16.mxu0 %v473
    %2366 = vmatmul.mubr.bf16.gmra.mrb[0].mxu0 %v472
    %v2367 = vpop.f32.mrb[0].mxu0
    %v2368 = vadd.f32 %v2325, %v2367
    %v2369 = vpop.f32.mrb[0].mxu0
    %v2370 = vadd.f32 %v2327, %v2369
    %v2371 = vpop.f32.mrb[0].mxu0
    %v2372 = vadd.f32 %v2329, %v2371
    %v2373 = vpop.f32.mrb[0].mxu0
    %v2374 = vadd.f32 %v2331, %v2373
    %2375 = vdwg.mxu0
    %v2376 = vmax.f32 %v2196, 0.0
    %v2377 = vmax.f32 %v2198, 0.0
    %v2378 = vmax.f32 %v2368, 0.0
    %v2379 = vmax.f32 %v2370, 0.0
    %v2380 = vmax.f32 %v2200, 0.0
    %v2381 = vmax.f32 %v2202, 0.0
    %v2382 = vmax.f32 %v2372, 0.0
    %v2383 = vmax.f32 %v2374, 0.0
    %v2384 = vpack.c.bf16 %v2380, %v2376
    %v2385 = vpack.c.bf16 %v2381, %v2377
    %v2386 = vpack.c.bf16 %v2382, %v2378
    %v2387 = vpack.c.bf16 %v2383, %v2379
    %v2388 = vld [vmem:[#allocation10] sm:$0xff]
    %v2389 = vld [vmem:[#allocation10 + $0x8] sm:$0xff]
    %v2390 = vld [vmem:[#allocation10 + $0x10] sm:$0xff]
    %v2391 = vld [vmem:[#allocation10 + $0x18] sm:$0xff]
    %v2392 = vld [vmem:[#allocation10 + $0x20] sm:$0xff]
    %v2393 = vld [vmem:[#allocation10 + $0x28] sm:$0xff]
    %v2394 = vld [vmem:[#allocation10 + $0x30] sm:$0xff]
    %v2395 = vld [vmem:[#allocation10 + $0x38] sm:$0xff]
    %v2396 = vld [vmem:[#allocation10 + $0x40] sm:$0xff]
    %v2397 = vld [vmem:[#allocation10 + $0x48] sm:$0xff]
    %v2398 = vld [vmem:[#allocation10 + $0x50] sm:$0xff]
    %v2399 = vld [vmem:[#allocation10 + $0x58] sm:$0xff]
    %v2400 = vld [vmem:[#allocation10 + $0x60] sm:$0xff]
    %v2401 = vld [vmem:[#allocation10 + $0x68] sm:$0xff]
    %v2402 = vld [vmem:[#allocation10 + $0x70] sm:$0xff]
    %v2403 = vld [vmem:[#allocation10 + $0x78] sm:$0xff]
    %v2404 = vld [vmem:[#allocation10 + $0x80] sm:$0xff]
    %v2405 = vld [vmem:[#allocation10 + $0x88] sm:$0xff]
    %v2406 = vld [vmem:[#allocation10 + $0x90] sm:$0xff]
    %v2407 = vld [vmem:[#allocation10 + $0x98] sm:$0xff]
    %v2408 = vld [vmem:[#allocation10 + $0xa0] sm:$0xff]
    %v2409 = vld [vmem:[#allocation10 + $0xa8] sm:$0xff]
    %v2410 = vld [vmem:[#allocation10 + $0xb0] sm:$0xff]
    %v2411 = vld [vmem:[#allocation10 + $0xb8] sm:$0xff]
    %v2412 = vld [vmem:[#allocation10 + $0xc0] sm:$0xff]
    %v2413 = vld [vmem:[#allocation10 + $0xc8] sm:$0xff]
    %v2414 = vld [vmem:[#allocation10 + $0xd0] sm:$0xff]
    %v2415 = vld [vmem:[#allocation10 + $0xd8] sm:$0xff]
    %v2416 = vld [vmem:[#allocation10 + $0xe0] sm:$0xff]
    %v2417 = vld [vmem:[#allocation10 + $0xe8] sm:$0xff]
    %v2418 = vld [vmem:[#allocation10 + $0xf0] sm:$0xff]
    %v2419 = vld [vmem:[#allocation10 + $0xf8] sm:$0xff]
    %v2420 = vld [vmem:[#allocation10 + $0x100] sm:$0xff]
    %v2421 = vld [vmem:[#allocation10 + $0x108] sm:$0xff]
    %v2422 = vld [vmem:[#allocation10 + $0x110] sm:$0xff]
    %v2423 = vld [vmem:[#allocation10 + $0x118] sm:$0xff]
    %v2424 = vld [vmem:[#allocation10 + $0x120] sm:$0xff]
    %v2425 = vld [vmem:[#allocation10 + $0x128] sm:$0xff]
    %v2426 = vld [vmem:[#allocation10 + $0x130] sm:$0xff]
    %v2427 = vld [vmem:[#allocation10 + $0x138] sm:$0xff]
    %v2428 = vld [vmem:[#allocation10 + $0x140] sm:$0xff]
    %v2429 = vld [vmem:[#allocation10 + $0x148] sm:$0xff]
    %v2430 = vld [vmem:[#allocation10 + $0x150] sm:$0xff]
    %v2431 = vld [vmem:[#allocation10 + $0x158] sm:$0xff]
    %v2432 = vld [vmem:[#allocation10 + $0x160] sm:$0xff]
    %v2433 = vld [vmem:[#allocation10 + $0x168] sm:$0xff]
    %v2434 = vld [vmem:[#allocation10 + $0x170] sm:$0xff]
    %v2435 = vld [vmem:[#allocation10 + $0x178] sm:$0xff]
    %v2436 = vld [vmem:[#allocation10 + $0x180] sm:$0xff]
    %v2437 = vld [vmem:[#allocation10 + $0x188] sm:$0xff]
    %v2438 = vld [vmem:[#allocation10 + $0x190] sm:$0xff]
    %v2439 = vld [vmem:[#allocation10 + $0x198] sm:$0xff]
    %v2440 = vld [vmem:[#allocation10 + $0x1a0] sm:$0xff]
    %v2441 = vld [vmem:[#allocation10 + $0x1a8] sm:$0xff]
    %v2442 = vld [vmem:[#allocation10 + $0x1b0] sm:$0xff]
    %v2443 = vld [vmem:[#allocation10 + $0x1b8] sm:$0xff]
    %v2444 = vld [vmem:[#allocation10 + $0x1c0] sm:$0xff]
    %v2445 = vld [vmem:[#allocation10 + $0x1c8] sm:$0xff]
    %v2446 = vld [vmem:[#allocation10 + $0x1d0] sm:$0xff]
    %v2447 = vld [vmem:[#allocation10 + $0x1d8] sm:$0xff]
    %v2448 = vld [vmem:[#allocation10 + $0x1e0] sm:$0xff]
    %v2449 = vld [vmem:[#allocation10 + $0x1e8] sm:$0xff]
    %v2450 = vld [vmem:[#allocation10 + $0x1f0] sm:$0xff]
    %v2451 = vld [vmem:[#allocation10 + $0x1f8] sm:$0xff]
    %v2452 = vld [vmem:[%s6] sm:$0x3]
    %v2454 = vlaneseq
    %v2455 = vshrl.u32 %v2454, 7
    %v2456 = vsub.s32 0, %v2455
    %v2457 = vrot.slane %v2452, %v2456
    %v2458 = vlaneseq
    %v2459 = vshrl.u32 %v2458, 7
    %v2460 = vsub.s32 1, %v2459
    %v2461 = vrot.slane %v2452, %v2460
    %v2528 = vunpack.c.l.b16 %v2388
    %v2529 = vunpack.c.h.b16 %v2388
    %v2530 = vunpack.c.l.b16 %v2389
    %v2531 = vunpack.c.h.b16 %v2389
    %v2532 = vunpack.c.l.b16 %v2390
    %v2533 = vunpack.c.h.b16 %v2390
    %v2534 = vunpack.c.l.b16 %v2391
    %v2535 = vunpack.c.h.b16 %v2391
    %v2536 = vunpack.c.l.b16 %v2392
    %v2537 = vunpack.c.h.b16 %v2392
    %v2538 = vunpack.c.l.b16 %v2393
    %v2539 = vunpack.c.h.b16 %v2393
    %v2540 = vunpack.c.l.b16 %v2394
    %v2541 = vunpack.c.h.b16 %v2394
    %v2542 = vunpack.c.l.b16 %v2395
    %v2543 = vunpack.c.h.b16 %v2395
    %v2544 = vunpack.c.l.b16 %v2396
    %v2545 = vunpack.c.h.b16 %v2396
    %v2546 = vunpack.c.l.b16 %v2397
    %v2547 = vunpack.c.h.b16 %v2397
    %v2548 = vunpack.c.l.b16 %v2398
    %v2549 = vunpack.c.h.b16 %v2398
    %v2550 = vunpack.c.l.b16 %v2399
    %v2551 = vunpack.c.h.b16 %v2399
    %v2552 = vunpack.c.l.b16 %v2400
    %v2553 = vunpack.c.h.b16 %v2400
    %v2554 = vunpack.c.l.b16 %v2401
    %v2555 = vunpack.c.h.b16 %v2401
    %v2556 = vunpack.c.l.b16 %v2402
    %v2557 = vunpack.c.h.b16 %v2402
    %v2558 = vunpack.c.l.b16 %v2403
    %v2559 = vunpack.c.h.b16 %v2403
    %v2560 = vunpack.c.l.b16 %v2404
    %v2561 = vunpack.c.h.b16 %v2404
    %v2562 = vunpack.c.l.b16 %v2405
    %v2563 = vunpack.c.h.b16 %v2405
    %v2564 = vunpack.c.l.b16 %v2406
    %v2565 = vunpack.c.h.b16 %v2406
    %v2566 = vunpack.c.l.b16 %v2407
    %v2567 = vunpack.c.h.b16 %v2407
    %v2568 = vunpack.c.l.b16 %v2408
    %v2569 = vunpack.c.h.b16 %v2408
    %v2570 = vunpack.c.l.b16 %v2409
    %v2571 = vunpack.c.h.b16 %v2409
    %v2572 = vunpack.c.l.b16 %v2410
    %v2573 = vunpack.c.h.b16 %v2410
    %v2574 = vunpack.c.l.b16 %v2411
    %v2575 = vunpack.c.h.b16 %v2411
    %v2576 = vunpack.c.l.b16 %v2412
    %v2577 = vunpack.c.h.b16 %v2412
    %v2578 = vunpack.c.l.b16 %v2413
    %v2579 = vunpack.c.h.b16 %v2413
    %v2580 = vunpack.c.l.b16 %v2414
    %v2581 = vunpack.c.h.b16 %v2414
    %v2582 = vunpack.c.l.b16 %v2415
    %v2583 = vunpack.c.h.b16 %v2415
    %v2584 = vunpack.c.l.b16 %v2416
    %v2585 = vunpack.c.h.b16 %v2416
    %v2586 = vunpack.c.l.b16 %v2417
    %v2587 = vunpack.c.h.b16 %v2417
    %v2588 = vunpack.c.l.b16 %v2418
    %v2589 = vunpack.c.h.b16 %v2418
    %v2590 = vunpack.c.l.b16 %v2419
    %v2591 = vunpack.c.h.b16 %v2419
    %v2592 = vunpack.c.l.b16 %v2420
    %v2593 = vunpack.c.h.b16 %v2420
    %v2594 = vunpack.c.l.b16 %v2421
    %v2595 = vunpack.c.h.b16 %v2421
    %v2596 = vunpack.c.l.b16 %v2422
    %v2597 = vunpack.c.h.b16 %v2422
    %v2598 = vunpack.c.l.b16 %v2423
    %v2599 = vunpack.c.h.b16 %v2423
    %v2600 = vunpack.c.l.b16 %v2424
    %v2601 = vunpack.c.h.b16 %v2424
    %v2602 = vunpack.c.l.b16 %v2425
    %v2603 = vunpack.c.h.b16 %v2425
    %v2604 = vunpack.c.l.b16 %v2426
    %v2605 = vunpack.c.h.b16 %v2426
    %v2606 = vunpack.c.l.b16 %v2427
    %v2607 = vunpack.c.h.b16 %v2427
    %v2608 = vunpack.c.l.b16 %v2428
    %v2609 = vunpack.c.h.b16 %v2428
    %v2610 = vunpack.c.l.b16 %v2429
    %v2611 = vunpack.c.h.b16 %v2429
    %v2612 = vunpack.c.l.b16 %v2430
    %v2613 = vunpack.c.h.b16 %v2430
    %v2614 = vunpack.c.l.b16 %v2431
    %v2615 = vunpack.c.h.b16 %v2431
    %v2616 = vunpack.c.l.b16 %v2432
    %v2617 = vunpack.c.h.b16 %v2432
    %v2618 = vunpack.c.l.b16 %v2433
    %v2619 = vunpack.c.h.b16 %v2433
    %v2620 = vunpack.c.l.b16 %v2434
    %v2621 = vunpack.c.h.b16 %v2434
    %v2622 = vunpack.c.l.b16 %v2435
    %v2623 = vunpack.c.h.b16 %v2435
    %v2624 = vunpack.c.l.b16 %v2436
    %v2625 = vunpack.c.h.b16 %v2436
    %v2626 = vunpack.c.l.b16 %v2437
    %v2627 = vunpack.c.h.b16 %v2437
    %v2628 = vunpack.c.l.b16 %v2438
    %v2629 = vunpack.c.h.b16 %v2438
    %v2630 = vunpack.c.l.b16 %v2439
    %v2631 = vunpack.c.h.b16 %v2439
    %v2632 = vunpack.c.l.b16 %v2440
    %v2633 = vunpack.c.h.b16 %v2440
    %v2634 = vunpack.c.l.b16 %v2441
    %v2635 = vunpack.c.h.b16 %v2441
    %v2636 = vunpack.c.l.b16 %v2442
    %v2637 = vunpack.c.h.b16 %v2442
    %v2638 = vunpack.c.l.b16 %v2443
    %v2639 = vunpack.c.h.b16 %v2443
    %v2640 = vunpack.c.l.b16 %v2444
    %v2641 = vunpack.c.h.b16 %v2444
    %v2642 = vunpack.c.l.b16 %v2445
    %v2643 = vunpack.c.h.b16 %v2445
    %v2644 = vunpack.c.l.b16 %v2446
    %v2645 = vunpack.c.h.b16 %v2446
    %v2646 = vunpack.c.l.b16 %v2447
    %v2647 = vunpack.c.h.b16 %v2447
    %v2648 = vunpack.c.l.b16 %v2448
    %v2649 = vunpack.c.h.b16 %v2448
    %v2650 = vunpack.c.l.b16 %v2449
    %v2651 = vunpack.c.h.b16 %v2449
    %v2652 = vunpack.c.l.b16 %v2450
    %v2653 = vunpack.c.h.b16 %v2450
    %v2654 = vunpack.c.l.b16 %v2451
    %v2655 = vunpack.c.h.b16 %v2451
    %v2656 = vpack.c.b16 %v2530, %v2528
    %v2657 = vpack.c.b16 %v2531, %v2529
    %v2658 = vpack.c.b16 %v2534, %v2532
    %v2659 = vpack.c.b16 %v2535, %v2533
    %v2660 = vpack.c.b16 %v2538, %v2536
    %v2661 = vpack.c.b16 %v2539, %v2537
    %v2662 = vpack.c.b16 %v2542, %v2540
    %v2663 = vpack.c.b16 %v2543, %v2541
    %v2664 = vpack.c.b16 %v2546, %v2544
    %v2665 = vpack.c.b16 %v2547, %v2545
    %v2666 = vpack.c.b16 %v2550, %v2548
    %v2667 = vpack.c.b16 %v2551, %v2549
    %v2668 = vpack.c.b16 %v2554, %v2552
    %v2669 = vpack.c.b16 %v2555, %v2553
    %v2670 = vpack.c.b16 %v2558, %v2556
    %v2671 = vpack.c.b16 %v2559, %v2557
    %v2672 = vpack.c.b16 %v2562, %v2560
    %v2673 = vpack.c.b16 %v2563, %v2561
    %v2674 = vpack.c.b16 %v2566, %v2564
    %v2675 = vpack.c.b16 %v2567, %v2565
    %v2676 = vpack.c.b16 %v2570, %v2568
    %v2677 = vpack.c.b16 %v2571, %v2569
    %v2678 = vpack.c.b16 %v2574, %v2572
    %v2679 = vpack.c.b16 %v2575, %v2573
    %v2680 = vpack.c.b16 %v2578, %v2576
    %v2681 = vpack.c.b16 %v2579, %v2577
    %v2682 = vpack.c.b16 %v2582, %v2580
    %v2683 = vpack.c.b16 %v2583, %v2581
    %v2684 = vpack.c.b16 %v2586, %v2584
    %v2685 = vpack.c.b16 %v2587, %v2585
    %v2686 = vpack.c.b16 %v2590, %v2588
    %v2687 = vpack.c.b16 %v2591, %v2589
    %v2688 = vpack.c.b16 %v2594, %v2592
    %v2689 = vpack.c.b16 %v2595, %v2593
    %v2690 = vpack.c.b16 %v2598, %v2596
    %v2691 = vpack.c.b16 %v2599, %v2597
    %v2692 = vpack.c.b16 %v2602, %v2600
    %v2693 = vpack.c.b16 %v2603, %v2601
    %v2694 = vpack.c.b16 %v2606, %v2604
    %v2695 = vpack.c.b16 %v2607, %v2605
    %v2696 = vpack.c.b16 %v2610, %v2608
    %v2697 = vpack.c.b16 %v2611, %v2609
    %v2698 = vpack.c.b16 %v2614, %v2612
    %v2699 = vpack.c.b16 %v2615, %v2613
    %v2700 = vpack.c.b16 %v2618, %v2616
    %v2701 = vpack.c.b16 %v2619, %v2617
    %v2702 = vpack.c.b16 %v2622, %v2620
    %v2703 = vpack.c.b16 %v2623, %v2621
    %v2704 = vpack.c.b16 %v2626, %v2624
    %v2705 = vpack.c.b16 %v2627, %v2625
    %v2706 = vpack.c.b16 %v2630, %v2628
    %v2707 = vpack.c.b16 %v2631, %v2629
    %v2708 = vpack.c.b16 %v2634, %v2632
    %v2709 = vpack.c.b16 %v2635, %v2633
    %v2710 = vpack.c.b16 %v2638, %v2636
    %v2711 = vpack.c.b16 %v2639, %v2637
    %v2712 = vpack.c.b16 %v2642, %v2640
    %v2713 = vpack.c.b16 %v2643, %v2641
    %v2714 = vpack.c.b16 %v2646, %v2644
    %v2715 = vpack.c.b16 %v2647, %v2645
    %v2716 = vpack.c.b16 %v2650, %v2648
    %v2717 = vpack.c.b16 %v2651, %v2649
    %v2718 = vpack.c.b16 %v2654, %v2652
    %v2719 = vpack.c.b16 %v2655, %v2653
    %2784 = vmatprep.subr.bf16.mxu0 %v2657
    %2785 = vmatpush1.bf16.msra.mxu0 %v2656
    %2786 = vmatprep.subr.bf16.mxu0 %v2659
    %2787 = vmatpush1.bf16.msra.mxu0 %v2658
    %2788 = vmatprep.subr.bf16.mxu0 %v2661
    %2789 = vmatpush1.bf16.msra.mxu0 %v2660
    %2790 = vmatprep.subr.bf16.mxu0 %v2663
    %2791 = vmatpush1.bf16.msra.mxu0 %v2662
    %2792 = vmatprep.subr.bf16.mxu0 %v2665
    %2793 = vmatpush1.bf16.msra.mxu0 %v2664
    %2794 = vmatprep.subr.bf16.mxu0 %v2667
    %2795 = vmatpush1.bf16.msra.mxu0 %v2666
    %2796 = vmatprep.subr.bf16.mxu0 %v2669
    %2797 = vmatpush1.bf16.msra.mxu0 %v2668
    %2798 = vmatprep.subr.bf16.mxu0 %v2671
    %2799 = vmatpush1.bf16.msra.mxu0 %v2670
    %2800 = vmatprep.subr.bf16.mxu0 %v2673
    %2801 = vmatpush1.bf16.msra.mxu0 %v2672
    %2802 = vmatprep.subr.bf16.mxu0 %v2675
    %2803 = vmatpush1.bf16.msra.mxu0 %v2674
    %2804 = vmatprep.subr.bf16.mxu0 %v2677
    %2805 = vmatpush1.bf16.msra.mxu0 %v2676
    %2806 = vmatprep.subr.bf16.mxu0 %v2679
    %2807 = vmatpush1.bf16.msra.mxu0 %v2678
    %2808 = vmatprep.subr.bf16.mxu0 %v2681
    %2809 = vmatpush1.bf16.msra.mxu0 %v2680
    %2810 = vmatprep.subr.bf16.mxu0 %v2683
    %2811 = vmatpush1.bf16.msra.mxu0 %v2682
    %2812 = vmatprep.subr.bf16.mxu0 %v2685
    %2813 = vmatpush1.bf16.msra.mxu0 %v2684
    %2814 = vmatprep.subr.bf16.mxu0 %v2687
    %2815 = vmatpush1.bf16.msra.mxu0 %v2686
    %2816 = vmatprep.mubr.bf16.mxu0 %v2385
    %2817 = vmatmul.mubr.bf16.gmra.mrb[0].mxu0 %v2384
    %v2818 = vpop.f32.mrb[0].mxu0
    %v2819 = vadd.f32 %v2457, %v2818
    %v2820 = vpop.f32.mrb[0].mxu0
    %v2821 = vadd.f32 %v2461, %v2820
    %v2822 = vpop.f32.mrb[0].mxu0
    %v2823 = vadd.f32 %v2457, %v2822
    %v2824 = vpop.f32.mrb[0].mxu0
    %v2825 = vadd.f32 %v2461, %v2824
    %2826 = vdwg.mxu0
    %2827 = vmatprep.subr.bf16.mxu0 %v2689
    %2828 = vmatpush1.bf16.msra.mxu0 %v2688
    %2829 = vmatprep.subr.bf16.mxu0 %v2691
    %2830 = vmatpush1.bf16.msra.mxu0 %v2690
    %2831 = vmatprep.subr.bf16.mxu0 %v2693
    %2832 = vmatpush1.bf16.msra.mxu0 %v2692
    %2833 = vmatprep.subr.bf16.mxu0 %v2695
    %2834 = vmatpush1.bf16.msra.mxu0 %v2694
    %2835 = vmatprep.subr.bf16.mxu0 %v2697
    %2836 = vmatpush1.bf16.msra.mxu0 %v2696
    %2837 = vmatprep.subr.bf16.mxu0 %v2699
    %2838 = vmatpush1.bf16.msra.mxu0 %v2698
    %2839 = vmatprep.subr.bf16.mxu0 %v2701
    %2840 = vmatpush1.bf16.msra.mxu0 %v2700
    %2841 = vmatprep.subr.bf16.mxu0 %v2703
    %2842 = vmatpush1.bf16.msra.mxu0 %v2702
    %2843 = vmatprep.subr.bf16.mxu0 %v2705
    %2844 = vmatpush1.bf16.msra.mxu0 %v2704
    %2845 = vmatprep.subr.bf16.mxu0 %v2707
    %2846 = vmatpush1.bf16.msra.mxu0 %v2706
    %2847 = vmatprep.subr.bf16.mxu0 %v2709
    %2848 = vmatpush1.bf16.msra.mxu0 %v2708
    %2849 = vmatprep.subr.bf16.mxu0 %v2711
    %2850 = vmatpush1.bf16.msra.mxu0 %v2710
    %2851 = vmatprep.subr.bf16.mxu0 %v2713
    %2852 = vmatpush1.bf16.msra.mxu0 %v2712
    %2853 = vmatprep.subr.bf16.mxu0 %v2715
    %2854 = vmatpush1.bf16.msra.mxu0 %v2714
    %2855 = vmatprep.subr.bf16.mxu0 %v2717
    %2856 = vmatpush1.bf16.msra.mxu0 %v2716
    %2857 = vmatprep.subr.bf16.mxu0 %v2719
    %2858 = vmatpush1.bf16.msra.mxu0 %v2718
    %2859 = vmatprep.mubr.bf16.mxu0 %v2387
    %2860 = vmatmul.mubr.bf16.gmra.mrb[0].mxu0 %v2386
    %v2861 = vpop.f32.mrb[0].mxu0
    %v2862 = vadd.f32 %v2819, %v2861
    %v2863 = vpop.f32.mrb[0].mxu0
    %v2864 = vadd.f32 %v2821, %v2863
    %v2865 = vpop.f32.mrb[0].mxu0
    %v2866 = vadd.f32 %v2823, %v2865
    %v2867 = vpop.f32.mrb[0].mxu0
    %v2868 = vadd.f32 %v2825, %v2867
    %2869 = vdwg.mxu0
    %v2870 = vmax.f32 %v2862, 0.0
    %v2871 = vmax.f32 %v2864, 0.0
    %v2872 = vmax.f32 %v2866, 0.0
    %v2873 = vmax.f32 %v2868, 0.0
    %v2874 = vpack.c.bf16 %v2872, %v2870
    %v2875 = vpack.c.bf16 %v2873, %v2871
    %v2876 = vld [vmem:[#allocation11] sm:$0xf]
    %v2877 = vld [vmem:[#allocation11 + $0x4] sm:$0xf]
    %v2878 = vld [vmem:[#allocation11 + $0x8] sm:$0xf]
    %v2879 = vld [vmem:[#allocation11 + $0xc] sm:$0xf]
    %v2880 = vld [vmem:[#allocation11 + $0x10] sm:$0xf]
    %v2881 = vld [vmem:[#allocation11 + $0x14] sm:$0xf]
    %v2882 = vld [vmem:[#allocation11 + $0x18] sm:$0xf]
    %v2883 = vld [vmem:[#allocation11 + $0x1c] sm:$0xf]
    %v2884 = vld [vmem:[#allocation11 + $0x20] sm:$0xf]
    %v2885 = vld [vmem:[#allocation11 + $0x24] sm:$0xf]
    %v2886 = vld [vmem:[#allocation11 + $0x28] sm:$0xf]
    %v2887 = vld [vmem:[#allocation11 + $0x2c] sm:$0xf]
    %v2888 = vld [vmem:[#allocation11 + $0x30] sm:$0xf]
    %v2889 = vld [vmem:[#allocation11 + $0x34] sm:$0xf]
    %v2890 = vld [vmem:[#allocation11 + $0x38] sm:$0xf]
    %v2891 = vld [vmem:[#allocation11 + $0x3c] sm:$0xf]
    %v2892 = vld [vmem:[#allocation11 + $0x40] sm:$0xf]
    %v2893 = vld [vmem:[#allocation11 + $0x44] sm:$0xf]
    %v2894 = vld [vmem:[#allocation11 + $0x48] sm:$0xf]
    %v2895 = vld [vmem:[#allocation11 + $0x4c] sm:$0xf]
    %v2896 = vld [vmem:[#allocation11 + $0x50] sm:$0xf]
    %v2897 = vld [vmem:[#allocation11 + $0x54] sm:$0xf]
    %v2898 = vld [vmem:[#allocation11 + $0x58] sm:$0xf]
    %v2899 = vld [vmem:[#allocation11 + $0x5c] sm:$0xf]
    %v2900 = vld [vmem:[#allocation11 + $0x60] sm:$0xf]
    %v2901 = vld [vmem:[#allocation11 + $0x64] sm:$0xf]
    %v2902 = vld [vmem:[#allocation11 + $0x68] sm:$0xf]
    %v2903 = vld [vmem:[#allocation11 + $0x6c] sm:$0xf]
    %v2904 = vld [vmem:[#allocation11 + $0x70] sm:$0xf]
    %v2905 = vld [vmem:[#allocation11 + $0x74] sm:$0xf]
    %v2906 = vld [vmem:[#allocation11 + $0x78] sm:$0xf]
    %v2907 = vld [vmem:[#allocation11 + $0x7c] sm:$0xf]
    %v2908 = vld [vmem:[%s8] sm:$0x1]
    %v2910 = vlaneseq
    %v2911 = vshrl.u32 %v2910, 7
    %v2912 = vsub.s32 0, %v2911
    %v2913 = vrot.slane %v2908, %v2912
    %v2947 = vunpack.c.l.b16 %v2876
    %v2948 = vunpack.c.l.b16 %v2877
    %v2949 = vunpack.c.l.b16 %v2878
    %v2950 = vunpack.c.l.b16 %v2879
    %v2951 = vunpack.c.l.b16 %v2880
    %v2952 = vunpack.c.l.b16 %v2881
    %v2953 = vunpack.c.l.b16 %v2882
    %v2954 = vunpack.c.l.b16 %v2883
    %v2955 = vunpack.c.l.b16 %v2884
    %v2956 = vunpack.c.l.b16 %v2885
    %v2957 = vunpack.c.l.b16 %v2886
    %v2958 = vunpack.c.l.b16 %v2887
    %v2959 = vunpack.c.l.b16 %v2888
    %v2960 = vunpack.c.l.b16 %v2889
    %v2961 = vunpack.c.l.b16 %v2890
    %v2962 = vunpack.c.l.b16 %v2891
    %v2963 = vunpack.c.l.b16 %v2892
    %v2964 = vunpack.c.l.b16 %v2893
    %v2965 = vunpack.c.l.b16 %v2894
    %v2966 = vunpack.c.l.b16 %v2895
    %v2967 = vunpack.c.l.b16 %v2896
    %v2968 = vunpack.c.l.b16 %v2897
    %v2969 = vunpack.c.l.b16 %v2898
    %v2970 = vunpack.c.l.b16 %v2899
    %v2971 = vunpack.c.l.b16 %v2900
    %v2972 = vunpack.c.l.b16 %v2901
    %v2973 = vunpack.c.l.b16 %v2902
    %v2974 = vunpack.c.l.b16 %v2903
    %v2975 = vunpack.c.l.b16 %v2904
    %v2976 = vunpack.c.l.b16 %v2905
    %v2977 = vunpack.c.l.b16 %v2906
    %v2978 = vunpack.c.l.b16 %v2907
    %v2979 = vpack.c.b16 %v2948, %v2947
    %v2980 = vpack.c.b16 %v2950, %v2949
    %v2981 = vpack.c.b16 %v2952, %v2951
    %v2982 = vpack.c.b16 %v2954, %v2953
    %v2983 = vpack.c.b16 %v2956, %v2955
    %v2984 = vpack.c.b16 %v2958, %v2957
    %v2985 = vpack.c.b16 %v2960, %v2959
    %v2986 = vpack.c.b16 %v2962, %v2961
    %v2987 = vpack.c.b16 %v2964, %v2963
    %v2988 = vpack.c.b16 %v2966, %v2965
    %v2989 = vpack.c.b16 %v2968, %v2967
    %v2990 = vpack.c.b16 %v2970, %v2969
    %v2991 = vpack.c.b16 %v2972, %v2971
    %v2992 = vpack.c.b16 %v2974, %v2973
    %v2993 = vpack.c.b16 %v2976, %v2975
    %v2994 = vpack.c.b16 %v2978, %v2977
    %3011 = vmatprep.subr.bf16.mxu0 0
    %3012 = vmatpush1.bf16.msra.mxu0 %v2979
    %3013 = vmatprep.subr.bf16.mxu0 0
    %3014 = vmatpush1.bf16.msra.mxu0 %v2980
    %3015 = vmatprep.subr.bf16.mxu0 0
    %3016 = vmatpush1.bf16.msra.mxu0 %v2981
    %3017 = vmatprep.subr.bf16.mxu0 0
    %3018 = vmatpush1.bf16.msra.mxu0 %v2982
    %3019 = vmatprep.subr.bf16.mxu0 0
    %3020 = vmatpush1.bf16.msra.mxu0 %v2983
    %3021 = vmatprep.subr.bf16.mxu0 0
    %3022 = vmatpush1.bf16.msra.mxu0 %v2984
    %3023 = vmatprep.subr.bf16.mxu0 0
    %3024 = vmatpush1.bf16.msra.mxu0 %v2985
    %3025 = vmatprep.subr.bf16.mxu0 0
    %3026 = vmatpush1.bf16.msra.mxu0 %v2986
    %3027 = vmatprep.subr.bf16.mxu0 0
    %3028 = vmatpush1.bf16.msra.mxu0 %v2987
    %3029 = vmatprep.subr.bf16.mxu0 0
    %3030 = vmatpush1.bf16.msra.mxu0 %v2988
    %3031 = vmatprep.subr.bf16.mxu0 0
    %3032 = vmatpush1.bf16.msra.mxu0 %v2989
    %3033 = vmatprep.subr.bf16.mxu0 0
    %3034 = vmatpush1.bf16.msra.mxu0 %v2990
    %3035 = vmatprep.subr.bf16.mxu0 0
    %3036 = vmatpush1.bf16.msra.mxu0 %v2991
    %3037 = vmatprep.subr.bf16.mxu0 0
    %3038 = vmatpush1.bf16.msra.mxu0 %v2992
    %3039 = vmatprep.subr.bf16.mxu0 0
    %3040 = vmatpush1.bf16.msra.mxu0 %v2993
    %3041 = vmatprep.subr.bf16.mxu0 0
    %3042 = vmatpush1.bf16.msra.mxu0 %v2994
    %3043 = vmatprep.mubr.bf16.mxu0 %v2875
    %3044 = vmatmul.mubr.bf16.gmra.mrb[0].mxu0 %v2874
    %v3045 = vpop.f32.mrb[0].mxu0
    %v3046 = vadd.f32 %v2913, %v3045
    %v3047 = vpop.f32.mrb[0].mxu0
    %v3048 = vpop.f32.mrb[0].mxu0
    %v3049 = vadd.f32 %v2913, %v3048
    %v3050 = vpop.f32.mrb[0].mxu0
    %3051 = vdwg.mxu0
    %v3052 = vmax.f32 %v3046, 0.0
    %v3053 = vmax.f32 %v3049, 0.0
    %v3054 = vpack.c.bf16 %v3053, %v3052
    %v3055 = vld [vmem:[#allocation13] sm:$0xf]
    %v3056 = vld [vmem:[#allocation13 + $0x4] sm:$0xf]
    %v3057 = vld [vmem:[#allocation13 + $0x8] sm:$0xf]
    %v3058 = vld [vmem:[#allocation13 + $0xc] sm:$0xf]
    %v3059 = vld [vmem:[#allocation13 + $0x10] sm:$0xf]
    %v3060 = vld [vmem:[#allocation13 + $0x14] sm:$0xf]
    %v3061 = vld [vmem:[#allocation13 + $0x18] sm:$0xf]
    %v3062 = vld [vmem:[#allocation13 + $0x1c] sm:$0xf]
    %v3063 = vld [vmem:[#allocation13 + $0x20] sm:$0xf]
    %v3064 = vld [vmem:[#allocation13 + $0x24] sm:$0xf]
    %v3065 = vld [vmem:[#allocation13 + $0x28] sm:$0xf]
    %v3066 = vld [vmem:[#allocation13 + $0x2c] sm:$0xf]
    %v3067 = vld [vmem:[#allocation13 + $0x30] sm:$0xf]
    %v3068 = vld [vmem:[#allocation13 + $0x34] sm:$0xf]
    %v3069 = vld [vmem:[#allocation13 + $0x38] sm:$0xf]
    %v3070 = vld [vmem:[#allocation13 + $0x3c] sm:$0xf]
    %v3071 = vld [vmem:[%s10] sm:$0x1]
    %v3073 = vlaneseq
    %v3074 = vshrl.u32 %v3073, 7
    %v3075 = vsub.s32 0, %v3074
    %v3076 = vrot.slane %v3071, %v3075
    %v3094 = vunpack.c.l.b16 %v3055
    %v3095 = vunpack.c.l.b16 %v3056
    %v3096 = vunpack.c.l.b16 %v3057
    %v3097 = vunpack.c.l.b16 %v3058
    %v3098 = vunpack.c.l.b16 %v3059
    %v3099 = vunpack.c.l.b16 %v3060
    %v3100 = vunpack.c.l.b16 %v3061
    %v3101 = vunpack.c.l.b16 %v3062
    %v3102 = vunpack.c.l.b16 %v3063
    %v3103 = vunpack.c.l.b16 %v3064
    %v3104 = vunpack.c.l.b16 %v3065
    %v3105 = vunpack.c.l.b16 %v3066
    %v3106 = vunpack.c.l.b16 %v3067
    %v3107 = vunpack.c.l.b16 %v3068
    %v3108 = vunpack.c.l.b16 %v3069
    %v3109 = vunpack.c.l.b16 %v3070
    %v3110 = vpack.c.b16 %v3095, %v3094
    %v3111 = vpack.c.b16 %v3097, %v3096
    %v3112 = vpack.c.b16 %v3099, %v3098
    %v3113 = vpack.c.b16 %v3101, %v3100
    %v3114 = vpack.c.b16 %v3103, %v3102
    %v3115 = vpack.c.b16 %v3105, %v3104
    %v3116 = vpack.c.b16 %v3107, %v3106
    %v3117 = vpack.c.b16 %v3109, %v3108
    %3126 = vmatprep.subr.bf16.mxu0 0
    %3127 = vmatpush1.bf16.msra.mxu0 %v3110
    %3128 = vmatprep.subr.bf16.mxu0 0
    %3129 = vmatpush1.bf16.msra.mxu0 %v3111
    %3130 = vmatprep.subr.bf16.mxu0 0
    %3131 = vmatpush1.bf16.msra.mxu0 %v3112
    %3132 = vmatprep.subr.bf16.mxu0 0
    %3133 = vmatpush1.bf16.msra.mxu0 %v3113
    %3134 = vmatprep.subr.bf16.mxu0 0
    %3135 = vmatpush1.bf16.msra.mxu0 %v3114
    %3136 = vmatprep.subr.bf16.mxu0 0
    %3137 = vmatpush1.bf16.msra.mxu0 %v3115
    %3138 = vmatprep.subr.bf16.mxu0 0
    %3139 = vmatpush1.bf16.msra.mxu0 %v3116
    %3140 = vmatprep.subr.bf16.mxu0 0
    %3141 = vmatpush1.bf16.msra.mxu0 %v3117
    %3142 = vmatprep.subr.bf16.mxu0 0
    %3143 = vmatpush1.bf16.msra.mxu0 0
    %3144 = vmatprep.subr.bf16.mxu0 0
    %3145 = vmatpush1.bf16.msra.mxu0 0
    %3146 = vmatprep.subr.bf16.mxu0 0
    %3147 = vmatpush1.bf16.msra.mxu0 0
    %3148 = vmatprep.subr.bf16.mxu0 0
    %3149 = vmatpush1.bf16.msra.mxu0 0
    %3150 = vmatprep.subr.bf16.mxu0 0
    %3151 = vmatpush1.bf16.msra.mxu0 0
    %3152 = vmatprep.subr.bf16.mxu0 0
    %3153 = vmatpush1.bf16.msra.mxu0 0
    %3154 = vmatprep.subr.bf16.mxu0 0
    %3155 = vmatpush1.bf16.msra.mxu0 0
    %3156 = vmatprep.subr.bf16.mxu0 0
    %3157 = vmatpush1.bf16.msra.mxu0 0
    %3158 = vmatprep.mubr.bf16.mxu0 0
    %3159 = vmatmul.mubr.bf16.gmra.mrb[0].mxu0 %v3054
    %v3160 = vpop.f32.mrb[0].mxu0
    %v3161 = vadd.f32 %v3076, %v3160
    %v3162 = vpop.f32.mrb[0].mxu0
    %v3163 = vpop.f32.mrb[0].mxu0
    %v3164 = vadd.f32 %v3076, %v3163
    %v3165 = vpop.f32.mrb[0].mxu0
    %3166 = vdwg.mxu0
    %3167 = vst [vmem:[#allocation14] sm:$0xff] %v3161
    %3168 = vst [vmem:[#allocation14 + $0x8] sm:$0xff] %v3164
    // Predicated region
    $region74: #{tpu_custom_call.1} parent=1 // pred_check
      _
    $region75: #{tpu_custom_call.1} parent=1 // pred_check_branch
      %3170 = sbr.rel (0) target = $region77
    $region76: #{tpu_custom_call.1} parent=1 // pred_region
      %s3172 = ssub.s32 256, 256
      %3173 = vsyncadd [#allocation4], %s3172
      %s3174 = sshll.u32 [#allocation14], 4
      %s3175 = int_to_ptr.vmem [resolvable:$true] %s3174
      %3180 = dma.vmem_to_hbm [thread:$0]  %s3175, 256, %s11, [#allocation4], 128, 128, 8
    $region77: #{tpu_custom_call.1} parent=1 // pred_fallthru
      _
    // Predicated region
    $region78: #{tpu_custom_call.1} parent=1 // pred_check
      _
    $region79: #{tpu_custom_call.1} parent=1 // pred_check_branch
      %3182 = sbr.rel (0) target = $region81
    $region80: #{tpu_custom_call.1} parent=1 // pred_region
      %3183 = dma.done [#allocation4], 256
    $region81: #{tpu_custom_call.1} parent=1 // pred_fallthru
      _
    %3184 = vsyncpa [#allocation3], 1
    %3185 = vsyncpa [#allocation6], 1
    %3186 = vsyncpa [#allocation9], 1
    %3187 = vsyncpa [#allocation12], 1
    %3188 = vsyncpa [#allocation4], 1

// kernel: tpu_custom_call.1
$region0: #{tpu_custom_call.1}
  #allocation0 [shape = 'u32[]', space=smem, size = 0x4, offset = 0x4, fixed_abs, tag = 'smem constant byte address 0x4 - core index']
  #allocation1 [shape = 'u32[144,128]{1,0:T(1,128)}', space=vmem, size = 0x12000, scoped, tag = 'internal scratch']
  %s0 = inlined_call_operand.hbm [shape: f32[16,32], index: 0, kind: input, shape index: {}]
  %s1 = inlined_call_operand.hbm [shape: bf16[32,1024], index: 1, kind: input, shape index: {}]
  %s2 = inlined_call_operand.hbm [shape: f32[1,1024], index: 2, kind: input, shape index: {}]
  %s3 = inlined_call_operand.hbm [shape: bf16[1024,512], index: 3, kind: input, shape index: {}]
  %s4 = inlined_call_operand.vmem [shape: f32[1,512], index: 4, kind: input, shape index: {}]
  %s5 = inlined_call_operand.hbm [shape: bf16[512,256], index: 5, kind: input, shape index: {}]
  %s6 = inlined_call_operand.vmem [shape: f32[1,256], index: 6, kind: input, shape index: {}]
  %s7 = inlined_call_operand.hbm [shape: bf16[256,128], index: 7, kind: input, shape index: {}]
  %s8 = inlined_call_operand.vmem [shape: f32[1,128], index: 8, kind: input, shape index: {}]
  %s9 = inlined_call_operand.hbm [shape: bf16[128,128], index: 9, kind: input, shape index: {}]
  %s10 = inlined_call_operand.vmem [shape: f32[1,128], index: 10, kind: input, shape index: {}]
  %s11 = inlined_call_operand.hbm [shape: f32[16,128], index: 11, kind: output, shape index: {}]
  %s12 = sld [smem:[#allocation0]]
  $region82: #{tpu_custom_call.1} parent=0
    _
  %s14 = ssub.s32 1, %s12
  %s15 = scalar_select 0, %s14, %s12
  $region1: #{tpu_custom_call.1} parent=0
    #allocation2 [shape = 'u8[8192]{0}', space=vmem, size = 0x2000, scoped, tag = 'input window, operand 0, single buffered']
    #allocation3 [shape = 's32[1]{0}', space=sflag, size = 0x4, scoped, tag = 'scoped memory for tpu_custom_call.1']
    #allocation4 [shape = 's32[1]{0}', space=sflag, size = 0x4, scoped, tag = 'scoped memory for tpu_custom_call.1']
    #allocation5 [shape = 'u8[65536]{0}', space=vmem, size = 0x10000, scoped, tag = 'input window, operand 1, single buffered']
    #allocation6 [shape = 's32[1]{0}', space=sflag, size = 0x4, scoped, tag = 'scoped memory for tpu_custom_call.1']
    #allocation7 [shape = 'u8[4096]{0}', space=vmem, size = 0x1000, scoped, tag = 'input window, operand 2, single buffered']
    #allocation8 [shape = 'u8[1048576]{0}', space=vmem, size = 0x100000, scoped, tag = 'input window, operand 3, single buffered']
    #allocation9 [shape = 's32[1]{0}', space=sflag, size = 0x4, scoped, tag = 'scoped memory for tpu_custom_call.1']
    #allocation10 [shape = 'u8[262144]{0}', space=vmem, size = 0x40000, scoped, tag = 'input window, operand 5, single buffered']
    #allocation11 [shape = 'u8[65536]{0}', space=vmem, size = 0x10000, scoped, tag = 'input window, operand 7, single buffered']
    #allocation12 [shape = 's32[1]{0}', space=sflag, size = 0x4, scoped, tag = 'scoped memory for tpu_custom_call.1']
    #allocation13 [shape = 'u8[32768]{0}', space=vmem, size = 0x8000, scoped, tag = 'input window, operand 9, single buffered']
    #allocation14 [shape = 'u8[8192]{0}', space=vmem, size = 0x2000, scoped, tag = 'output window, operand 0, single buffered']
    %16 = vsyncpa [#allocation3], 0
    %17 = vsyncpa [#allocation6], 0
    %18 = vsyncpa [#allocation9], 0
    %19 = vsyncpa [#allocation12], 0
    %20 = vsyncpa [#allocation4], 0
    // Predicated region
    $region2: #{tpu_custom_call.1} parent=1 // pred_check
      _
    $region3: #{tpu_custom_call.1} parent=1 // pred_check_branch
      %22 = sbr.rel (0) target = $region5
    $region4: #{tpu_custom_call.1} parent=1 // pred_region
      %s24 = ssub.s32 256, 256
      %25 = vsyncadd [#allocation3], %s24
      %s26 = sshll.u32 [#allocation2], 4
      %s27 = int_to_ptr.vmem [resolvable:$true] %s26
      %32 = dma.hbm_to_vmem [thread:$0]  %s0, 256, %s27, [#allocation3], 128, 128, 8
    $region5: #{tpu_custom_call.1} parent=1 // pred_fallthru
      _
    // Predicated region
    $region6: #{tpu_custom_call.1} parent=1 // pred_check
      _
    $region7: #{tpu_custom_call.1} parent=1 // pred_check_branch
      %34 = sbr.rel (0) target = $region9
    $region8: #{tpu_custom_call.1} parent=1 // pred_region
      %s36 = ssub.s32 2048, 2048
      %37 = vsyncadd [#allocation6], %s36
      %s38 = sshll.u32 [#allocation5], 4
      %s39 = int_to_ptr.vmem [resolvable:$true] %s38
      %44 = dma.hbm_to_vmem [thread:$0]  %s1, 2048, %s39, [#allocation6], 512, 512, 32
    $region9: #{tpu_custom_call.1} parent=1 // pred_fallthru
      _
    // Predicated region
    $region10: #{tpu_custom_call.1} parent=1 // pred_check
      _
    $region11: #{tpu_custom_call.1} parent=1 // pred_check_branch
      %46 = sbr.rel (0) target = $region13
    $region12: #{tpu_custom_call.1} parent=1 // pred_region
      %s48 = ssub.s32 128, 128
      %49 = vsyncadd [#allocation6], %s48
      %s51 = sshll.u32 [#allocation7], 4
      %s52 = int_to_ptr.vmem [resolvable:$true] %s51
      %54 = dma.hbm_to_vmem [thread:$0]  %s2, 128, %s52, [#allocation6]
    $region13: #{tpu_custom_call.1} parent=1 // pred_fallthru
      _
    // Predicated region
    $region14: #{tpu_custom_call.1} parent=1 // pred_check
      _
    $region15: #{tpu_custom_call.1} parent=1 // pred_check_branch
      %56 = sbr.rel (0) target = $region17
    $region16: #{tpu_custom_call.1} parent=1 // pred_region
      %s58 = ssub.s32 32768, 32768
      %59 = vsyncadd [#allocation9], %s58
      %s60 = sshll.u32 [#allocation8], 4
      %s61 = int_to_ptr.vmem [resolvable:$true] %s60
      %66 = dma.hbm_to_vmem [thread:$0]  %s3, 32768, %s61, [#allocation9], 256, 256, 16
    $region17: #{tpu_custom_call.1} parent=1 // pred_fallthru
      _
    // Predicated region
    $region18: #{tpu_custom_call.1} parent=1 // pred_check
      _
    $region19: #{tpu_custom_call.1} parent=1 // pred_check_branch
      %68 = sbr.rel (0) target = $region21
    $region20: #{tpu_custom_call.1} parent=1 // pred_region
      _
    $region21: #{tpu_custom_call.1} parent=1 // pred_fallthru
      _
    // Predicated region
    $region22: #{tpu_custom_call.1} parent=1 // pred_check
      _
    $region23: #{tpu_custom_call.1} parent=1 // pred_check_branch
      %70 = sbr.rel (0) target = $region25
    $region24: #{tpu_custom_call.1} parent=1 // pred_region
      %s72 = ssub.s32 8192, 8192
      %73 = vsyncadd [#allocation9], %s72
      %s74 = sshll.u32 [#allocation10], 4
      %s75 = int_to_ptr.vmem [resolvable:$true] %s74
      %80 = dma.hbm_to_vmem [thread:$0]  %s5, 8192, %s75, [#allocation9], 128, 128, 8
    $region25: #{tpu_custom_call.1} parent=1 // pred_fallthru
      _
    // Predicated region
    $region26: #{tpu_custom_call.1} parent=1 // pred_check
      _
    $region27: #{tpu_custom_call.1} parent=1 // pred_check_branch
      %82 = sbr.rel (0) target = $region29
    $region28: #{tpu_custom_call.1} parent=1 // pred_region
      _
    $region29: #{tpu_custom_call.1} parent=1 // pred_fallthru
      _
    // Predicated region
    $region30: #{tpu_custom_call.1} parent=1 // pred_check
      _
    $region31: #{tpu_custom_call.1} parent=1 // pred_check_branch
      %84 = sbr.rel (0) target = $region33
    $region32: #{tpu_custom_call.1} parent=1 // pred_region
      %s86 = ssub.s32 2048, 2048
      %87 = vsyncadd [#allocation12], %s86
      %s88 = sshll.u32 [#allocation11], 4
      %s89 = int_to_ptr.vmem [resolvable:$true] %s88
      %94 = dma.hbm_to_vmem [thread:$0]  %s7, 2048, %s89, [#allocation12], 64, 64, 4
    $region33: #{tpu_custom_call.1} parent=1 // pred_fallthru
      _
    // Predicated region
    $region34: #{tpu_custom_call.1} parent=1 // pred_check
      _
    $region35: #{tpu_custom_call.1} parent=1 // pred_check_branch
      %96 = sbr.rel (0) target = $region37
    $region36: #{tpu_custom_call.1} parent=1 // pred_region
      _
    $region37: #{tpu_custom_call.1} parent=1 // pred_fallthru
      _
    // Predicated region
    $region38: #{tpu_custom_call.1} parent=1 // pred_check
      _
    $region39: #{tpu_custom_call.1} parent=1 // pred_check_branch
      %98 = sbr.rel (0) target = $region41
    $region40: #{tpu_custom_call.1} parent=1 // pred_region
      %s100 = ssub.s32 1024, 1024
      %101 = vsyncadd [#allocation12], %s100
      %s102 = sshll.u32 [#allocation13], 4
      %s103 = int_to_ptr.vmem [resolvable:$true] %s102
      %108 = dma.hbm_to_vmem [thread:$0]  %s9, 1024, %s103, [#allocation12], 64, 64, 4
    $region41: #{tpu_custom_call.1} parent=1 // pred_fallthru
      _
    // Predicated region
    $region42: #{tpu_custom_call.1} parent=1 // pred_check
      _
    $region43: #{tpu_custom_call.1} parent=1 // pred_check_branch
      %110 = sbr.rel (0) target = $region45
    $region44: #{tpu_custom_call.1} parent=1 // pred_region
      _
    $region45: #{tpu_custom_call.1} parent=1 // pred_fallthru
      _
    // Predicated region
    $region46: #{tpu_custom_call.1} parent=1 // pred_check
      _
    $region47: #{tpu_custom_call.1} parent=1 // pred_check_branch
      %112 = sbr.rel (0) target = $region49
    $region48: #{tpu_custom_call.1} parent=1 // pred_region
      %113 = dma.done [#allocation3], 256
    $region49: #{tpu_custom_call.1} parent=1 // pred_fallthru
      _
    // Predicated region
    $region50: #{tpu_custom_call.1} parent=1 // pred_check
      _
    $region51: #{tpu_custom_call.1} parent=1 // pred_check_branch
      %115 = sbr.rel (0) target = $region53
    $region52: #{tpu_custom_call.1} parent=1 // pred_region
      %116 = dma.done [#allocation6], 2048
    $region53: #{tpu_custom_call.1} parent=1 // pred_fallthru
      _
    // Predicated region
    $region54: #{tpu_custom_call.1} parent=1 // pred_check
      _
    $region55: #{tpu_custom_call.1} parent=1 // pred_check_branch
      %118 = sbr.rel (0) target = $region57
    $region56: #{tpu_custom_call.1} parent=1 // pred_region
      %119 = dma.done [#allocation6], 128
    $region57: #{tpu_custom_call.1} parent=1 // pred_fallthru
      _
    // Predicated region
    $region58: #{tpu_custom_call.1} parent=1 // pred_check
      _
    $region59: #{tpu_custom_call.1} parent=1 // pred_check_branch
      %121 = sbr.rel (0) target = $region61
    $region60: #{tpu_custom_call.1} parent=1 // pred_region
      %122 = dma.done [#allocation9], 32768
    $region61: #{tpu_custom_call.1} parent=1 // pred_fallthru
      _
    // Predicated region
    $region62: #{tpu_custom_call.1} parent=1 // pred_check
      _
    $region63: #{tpu_custom_call.1} parent=1 // pred_check_branch
      %124 = sbr.rel (0) target = $region65
    $region64: #{tpu_custom_call.1} parent=1 // pred_region
      %125 = dma.done [#allocation9], 8192
    $region65: #{tpu_custom_call.1} parent=1 // pred_fallthru
      _
    // Predicated region
    $region66: #{tpu_custom_call.1} parent=1 // pred_check
      _
    $region67: #{tpu_custom_call.1} parent=1 // pred_check_branch
      %127 = sbr.rel (0) target = $region69
    $region68: #{tpu_custom_call.1} parent=1 // pred_region
      %128 = dma.done [#allocation12], 2048
    $region69: #{tpu_custom_call.1} parent=1 // pred_fallthru
      _
    // Predicated region
    $region70: #{tpu_custom_call.1} parent=1 // pred_check
      _
    $region71: #{tpu_custom_call.1} parent=1 // pred_check_branch
      %130 = sbr.rel (0) target = $region73
    $region72: #{tpu_custom_call.1} parent=1 // pred_region
      %131 = dma.done [#allocation12], 1024
    $region73: #{tpu_custom_call.1} parent=1 // pred_fallthru
      _
    %v133 = vld [vmem:[#allocation2] sm:$0xff]
    %v134 = vld [vmem:[#allocation2 + $0x8] sm:$0xff]
    %v135 = vpack.c.bf16 %v134, %v133
    %v136 = vld [vmem:[#allocation5] sm:$0xff]
    %v137 = vld [vmem:[#allocation5 + $0x8] sm:$0xff]
    %v138 = vld [vmem:[#allocation5 + $0x10] sm:$0xff]
    %v139 = vld [vmem:[#allocation5 + $0x18] sm:$0xff]
    %v140 = vld [vmem:[#allocation5 + $0x20] sm:$0xff]
    %v141 = vld [vmem:[#allocation5 + $0x28] sm:$0xff]
    %v142 = vld [vmem:[#allocation5 + $0x30] sm:$0xff]
    %v143 = vld [vmem:[#allocation5 + $0x38] sm:$0xff]
    %v144 = vld [vmem:[#allocation5 + $0x40] sm:$0xff]
    %v145 = vld [vmem:[#allocation5 + $0x48] sm:$0xff]
    %v146 = vld [vmem:[#allocation5 + $0x50] sm:$0xff]
    %v147 = vld [vmem:[#allocation5 + $0x58] sm:$0xff]
    %v148 = vld [vmem:[#allocation5 + $0x60] sm:$0xff]
    %v149 = vld [vmem:[#allocation5 + $0x68] sm:$0xff]
    %v150 = vld [vmem:[#allocation5 + $0x70] sm:$0xff]
    %v151 = vld [vmem:[#allocation5 + $0x78] sm:$0xff]
    %v152 = vld [vmem:[#allocation7] sm:$0xff]
    %v154 = vlaneseq
    %v155 = vshrl.u32 %v154, 7
    %v156 = vsub.s32 0, %v155
    %v157 = vrot.slane %v152, %v156
    %v158 = vlaneseq
    %v159 = vshrl.u32 %v158, 7
    %v160 = vsub.s32 1, %v159
    %v161 = vrot.slane %v152, %v160
    %v162 = vlaneseq
    %v163 = vshrl.u32 %v162, 7
    %v164 = vsub.s32 2, %v163
    %v165 = vrot.slane %v152, %v164
    %v166 = vlaneseq
    %v167 = vshrl.u32 %v166, 7
    %v168 = vsub.s32 3, %v167
    %v169 = vrot.slane %v152, %v168
    %v170 = vlaneseq
    %v171 = vshrl.u32 %v170, 7
    %v172 = vsub.s32 4, %v171
    %v173 = vrot.slane %v152, %v172
    %v174 = vlaneseq
    %v175 = vshrl.u32 %v174, 7
    %v176 = vsub.s32 5, %v175
    %v177 = vrot.slane %v152, %v176
    %v178 = vlaneseq
    %v179 = vshrl.u32 %v178, 7
    %v180 = vsub.s32 6, %v179
    %v181 = vrot.slane %v152, %v180
    %v182 = vlaneseq
    %v183 = vshrl.u32 %v182, 7
    %v184 = vsub.s32 7, %v183
    %v185 = vrot.slane %v152, %v184
    %v210 = vunpack.c.l.b16 %v136
    %v211 = vunpack.c.h.b16 %v136
    %v212 = vunpack.c.l.b16 %v137
    %v213 = vunpack.c.h.b16 %v137
    %v214 = vunpack.c.l.b16 %v138
    %v215 = vunpack.c.h.b16 %v138
    %v216 = vunpack.c.l.b16 %v139
    %v217 = vunpack.c.h.b16 %v139
    %v218 = vunpack.c.l.b16 %v140
    %v219 = vunpack.c.h.b16 %v140
    %v220 = vunpack.c.l.b16 %v141
    %v221 = vunpack.c.h.b16 %v141
    %v222 = vunpack.c.l.b16 %v142
    %v223 = vunpack.c.h.b16 %v142
    %v224 = vunpack.c.l.b16 %v143
    %v225 = vunpack.c.h.b16 %v143
    %v226 = vunpack.c.l.b16 %v144
    %v227 = vunpack.c.h.b16 %v144
    %v228 = vunpack.c.l.b16 %v145
    %v229 = vunpack.c.h.b16 %v145
    %v230 = vunpack.c.l.b16 %v146
    %v231 = vunpack.c.h.b16 %v146
    %v232 = vunpack.c.l.b16 %v147
    %v233 = vunpack.c.h.b16 %v147
    %v234 = vunpack.c.l.b16 %v148
    %v235 = vunpack.c.h.b16 %v148
    %v236 = vunpack.c.l.b16 %v149
    %v237 = vunpack.c.h.b16 %v149
    %v238 = vunpack.c.l.b16 %v150
    %v239 = vunpack.c.h.b16 %v150
    %v240 = vunpack.c.l.b16 %v151
    %v241 = vunpack.c.h.b16 %v151
    %v242 = vpack.c.b16 %v218, %v210
    %v243 = vpack.c.b16 %v219, %v211
    %v244 = vpack.c.b16 %v220, %v212
    %v245 = vpack.c.b16 %v221, %v213
    %v246 = vpack.c.b16 %v222, %v214
    %v247 = vpack.c.b16 %v223, %v215
    %v248 = vpack.c.b16 %v224, %v216
    %v249 = vpack.c.b16 %v225, %v217
    %v250 = vpack.c.b16 %v234, %v226
    %v251 = vpack.c.b16 %v235, %v227
    %v252 = vpack.c.b16 %v236, %v228
    %v253 = vpack.c.b16 %v237, %v229
    %v254 = vpack.c.b16 %v238, %v230
    %v255 = vpack.c.b16 %v239, %v231
    %v256 = vpack.c.b16 %v240, %v232
    %v257 = vpack.c.b16 %v241, %v233
    %vm274 = vcmask 261120
    %v276 = vsel %vm274, %v135, 0
    %278 = vmatprep.subr.bf16.mxu0 %v243
    %279 = vmatpush1.bf16.msra.mxu0 %v242
    %280 = vmatprep.subr.bf16.mxu0 %v251
    %281 = vmatpush1.bf16.msra.mxu0 %v250
    %282 = vmatprep.subr.bf16.mxu0 0
    %283 = vmatpush1.bf16.msra.mxu0 0
    %284 = vmatprep.subr.bf16.mxu0 0
    %285 = vmatpush1.bf16.msra.mxu0 0
    %286 = vmatprep.subr.bf16.mxu0 0
    %287 = vmatpush1.bf16.msra.mxu0 0
    %288 = vmatprep.subr.bf16.mxu0 0
    %289 = vmatpush1.bf16.msra.mxu0 0
    %290 = vmatprep.subr.bf16.mxu0 0
    %291 = vmatpush1.bf16.msra.mxu0 0
    %292 = vmatprep.subr.bf16.mxu0 0
    %293 = vmatpush1.bf16.msra.mxu0 0
    %294 = vmatprep.subr.bf16.mxu0 0
    %295 = vmatpush1.bf16.msra.mxu0 0
    %296 = vmatprep.subr.bf16.mxu0 0
    %297 = vmatpush1.bf16.msra.mxu0 0
    %298 = vmatprep.subr.bf16.mxu0 0
    %299 = vmatpush1.bf16.msra.mxu0 0
    %300 = vmatprep.subr.bf16.mxu0 0
    %301 = vmatpush1.bf16.msra.mxu0 0
    %302 = vmatprep.subr.bf16.mxu0 0
    %303 = vmatpush1.bf16.msra.mxu0 0
    %304 = vmatprep.subr.bf16.mxu0 0
    %305 = vmatpush1.bf16.msra.mxu0 0
    %306 = vmatprep.subr.bf16.mxu0 0
    %307 = vmatpush1.bf16.msra.mxu0 0
    %308 = vmatprep.subr.bf16.mxu0 0
    %309 = vmatpush1.bf16.msra.mxu0 0
    %310 = vmatprep.mubr.bf16.mxu0 0
    %311 = vmatmul.mubr.bf16.gmra.mrb[0].mxu0 %v276
    %v312 = vpop.f32.mrb[0].mxu0
    %v313 = vadd.f32 %v157, %v312
    %v314 = vpop.f32.mrb[0].mxu0
    %v315 = vadd.f32 %v161, %v314
    %v316 = vpop.f32.mrb[0].mxu0
    %v317 = vadd.f32 %v157, %v316
    %v318 = vpop.f32.mrb[0].mxu0
    %v319 = vadd.f32 %v161, %v318
    %320 = vdwg.mxu0
    %321 = vmatprep.subr.bf16.mxu0 %v245
    %322 = vmatpush1.bf16.msra.mxu0 %v244
    %323 = vmatprep.subr.bf16.mxu0 %v253
    %324 = vmatpush1.bf16.msra.mxu0 %v252
    %325 = vmatprep.subr.bf16.mxu0 0
    %326 = vmatpush1.bf16.msra.mxu0 0
    %327 = vmatprep.subr.bf16.mxu0 0
    %328 = vmatpush1.bf16.msra.mxu0 0
    %329 = vmatprep.subr.bf16.mxu0 0
    %330 = vmatpush1.bf16.msra.mxu0 0
    %331 = vmatprep.subr.bf16.mxu0 0
    %332 = vmatpush1.bf16.msra.mxu0 0
    %333 = vmatprep.subr.bf16.mxu0 0
    %334 = vmatpush1.bf16.msra.mxu0 0
    %335 = vmatprep.subr.bf16.mxu0 0
    %336 = vmatpush1.bf16.msra.mxu0 0
    %337 = vmatprep.subr.bf16.mxu0 0
    %338 = vmatpush1.bf16.msra.mxu0 0
    %339 = vmatprep.subr.bf16.mxu0 0
    %340 = vmatpush1.bf16.msra.mxu0 0
    %341 = vmatprep.subr.bf16.mxu0 0
    %342 = vmatpush1.bf16.msra.mxu0 0
    %343 = vmatprep.subr.bf16.mxu0 0
    %344 = vmatpush1.bf16.msra.mxu0 0
    %345 = vmatprep.subr.bf16.mxu0 0
    %346 = vmatpush1.bf16.msra.mxu0 0
    %347 = vmatprep.subr.bf16.mxu0 0
    %348 = vmatpush1.bf16.msra.mxu0 0
    %349 = vmatprep.subr.bf16.mxu0 0
    %350 = vmatpush1.bf16.msra.mxu0 0
    %351 = vmatprep.subr.bf16.mxu0 0
    %352 = vmatpush1.bf16.msra.mxu0 0
    %353 = vmatprep.mubr.bf16.mxu0 0
    %354 = vmatmul.mubr.bf16.gmra.mrb[0].mxu0 %v276
    %v355 = vpop.f32.mrb[0].mxu0
    %v356 = vadd.f32 %v165, %v355
    %v357 = vpop.f32.mrb[0].mxu0
    %v358 = vadd.f32 %v169, %v357
    %v359 = vpop.f32.mrb[0].mxu0
    %v360 = vadd.f32 %v165, %v359
    %v361 = vpop.f32.mrb[0].mxu0
    %v362 = vadd.f32 %v169, %v361
    %363 = vdwg.mxu0
    %364 = vmatprep.subr.bf16.mxu0 %v247
    %365 = vmatpush1.bf16.msra.mxu0 %v246
    %366 = vmatprep.subr.bf16.mxu0 %v255
    %367 = vmatpush1.bf16.msra.mxu0 %v254
    %368 = vmatprep.subr.bf16.mxu0 0
    %369 = vmatpush1.bf16.msra.mxu0 0
    %370 = vmatprep.subr.bf16.mxu0 0
    %371 = vmatpush1.bf16.msra.mxu0 0
    %372 = vmatprep.subr.bf16.mxu0 0
    %373 = vmatpush1.bf16.msra.mxu0 0
    %374 = vmatprep.subr.bf16.mxu0 0
    %375 = vmatpush1.bf16.msra.mxu0 0
    %376 = vmatprep.subr.bf16.mxu0 0
    %377 = vmatpush1.bf16.msra.mxu0 0
    %378 = vmatprep.subr.bf16.mxu0 0
    %379 = vmatpush1.bf16.msra.mxu0 0
    %380 = vmatprep.subr.bf16.mxu0 0
    %381 = vmatpush1.bf16.msra.mxu0 0
    %382 = vmatprep.subr.bf16.mxu0 0
    %383 = vmatpush1.bf16.msra.mxu0 0
    %384 = vmatprep.subr.bf16.mxu0 0
    %385 = vmatpush1.bf16.msra.mxu0 0
    %386 = vmatprep.subr.bf16.mxu0 0
    %387 = vmatpush1.bf16.msra.mxu0 0
    %388 = vmatprep.subr.bf16.mxu0 0
    %389 = vmatpush1.bf16.msra.mxu0 0
    %390 = vmatprep.subr.bf16.mxu0 0
    %391 = vmatpush1.bf16.msra.mxu0 0
    %392 = vmatprep.subr.bf16.mxu0 0
    %393 = vmatpush1.bf16.msra.mxu0 0
    %394 = vmatprep.subr.bf16.mxu0 0
    %395 = vmatpush1.bf16.msra.mxu0 0
    %396 = vmatprep.mubr.bf16.mxu0 0
    %397 = vmatmul.mubr.bf16.gmra.mrb[0].mxu0 %v276
    %v398 = vpop.f32.mrb[0].mxu0
    %v399 = vadd.f32 %v173, %v398
    %v400 = vpop.f32.mrb[0].mxu0
    %v401 = vadd.f32 %v177, %v400
    %v402 = vpop.f32.mrb[0].mxu0
    %v403 = vadd.f32 %v173, %v402
    %v404 = vpop.f32.mrb[0].mxu0
    %v405 = vadd.f32 %v177, %v404
    %406 = vdwg.mxu0
    %407 = vmatprep.subr.bf16.mxu0 %v249
    %408 = vmatpush1.bf16.msra.mxu0 %v248
    %409 = vmatprep.subr.bf16.mxu0 %v257
    %410 = vmatpush1.bf16.msra.mxu0 %v256
    %411 = vmatprep.subr.bf16.mxu0 0
    %412 = vmatpush1.bf16.msra.mxu0 0
    %413 = vmatprep.subr.bf16.mxu0 0
    %414 = vmatpush1.bf16.msra.mxu0 0
    %415 = vmatprep.subr.bf16.mxu0 0
    %416 = vmatpush1.bf16.msra.mxu0 0
    %417 = vmatprep.subr.bf16.mxu0 0
    %418 = vmatpush1.bf16.msra.mxu0 0
    %419 = vmatprep.subr.bf16.mxu0 0
    %420 = vmatpush1.bf16.msra.mxu0 0
    %421 = vmatprep.subr.bf16.mxu0 0
    %422 = vmatpush1.bf16.msra.mxu0 0
    %423 = vmatprep.subr.bf16.mxu0 0
    %424 = vmatpush1.bf16.msra.mxu0 0
    %425 = vmatprep.subr.bf16.mxu0 0
    %426 = vmatpush1.bf16.msra.mxu0 0
    %427 = vmatprep.subr.bf16.mxu0 0
    %428 = vmatpush1.bf16.msra.mxu0 0
    %429 = vmatprep.subr.bf16.mxu0 0
    %430 = vmatpush1.bf16.msra.mxu0 0
    %431 = vmatprep.subr.bf16.mxu0 0
    %432 = vmatpush1.bf16.msra.mxu0 0
    %433 = vmatprep.subr.bf16.mxu0 0
    %434 = vmatpush1.bf16.msra.mxu0 0
    %435 = vmatprep.subr.bf16.mxu0 0
    %436 = vmatpush1.bf16.msra.mxu0 0
    %437 = vmatprep.subr.bf16.mxu0 0
    %438 = vmatpush1.bf16.msra.mxu0 0
    %439 = vmatprep.mubr.bf16.mxu0 0
    %440 = vmatmul.mubr.bf16.gmra.mrb[0].mxu0 %v276
    %v441 = vpop.f32.mrb[0].mxu0
    %v442 = vadd.f32 %v181, %v441
    %v443 = vpop.f32.mrb[0].mxu0
    %v444 = vadd.f32 %v185, %v443
    %v445 = vpop.f32.mrb[0].mxu0
    %v446 = vadd.f32 %v181, %v445
    %v447 = vpop.f32.mrb[0].mxu0
    %v448 = vadd.f32 %v185, %v447
    %449 = vdwg.mxu0
    %v450 = vmax.f32 %v313, 0.0
    %v451 = vmax.f32 %v315, 0.0
    %v452 = vmax.f32 %v356, 0.0
    %v453 = vmax.f32 %v358, 0.0
    %v454 = vmax.f32 %v399, 0.0
    %v455 = vmax.f32 %v401, 0.0
    %v456 = vmax.f32 %v442, 0.0
    %v457 = vmax.f32 %v444, 0.0
    %v458 = vmax.f32 %v317, 0.0
    %v459 = vmax.f32 %v319, 0.0
    %v460 = vmax.f32 %v360, 0.0
    %v461 = vmax.f32 %v362, 0.0
    %v462 = vmax.f32 %v403, 0.0
    %v463 = vmax.f32 %v405, 0.0
    %v464 = vmax.f32 %v446, 0.0
    %v465 = vmax.f32 %v448, 0.0
    %v466 = vpack.c.bf16 %v458, %v450
    %v467 = vpack.c.bf16 %v459, %v451
    %v468 = vpack.c.bf16 %v460, %v452
    %v469 = vpack.c.bf16 %v461, %v453
    %v470 = vpack.c.bf16 %v462, %v454
    %v471 = vpack.c.bf16 %v463, %v455
    %v472 = vpack.c.bf16 %v464, %v456
    %v473 = vpack.c.bf16 %v465, %v457
    %v474 = vld [vmem:[#allocation8] sm:$0xff]
    %v475 = vld [vmem:[#allocation8 + $0x8] sm:$0xff]
    %v476 = vld [vmem:[#allocation8 + $0x10] sm:$0xff]
    %v477 = vld [vmem:[#allocation8 + $0x18] sm:$0xff]
    %v478 = vld [vmem:[#allocation8 + $0x20] sm:$0xff]
    %v479 = vld [vmem:[#allocation8 + $0x28] sm:$0xff]
    %v480 = vld [vmem:[#allocation8 + $0x30] sm:$0xff]
    %v481 = vld [vmem:[#allocation8 + $0x38] sm:$0xff]
    %v482 = vld [vmem:[#allocation8 + $0x40] sm:$0xff]
    %v483 = vld [vmem:[#allocation8 + $0x48] sm:$0xff]
    %v484 = vld [vmem:[#allocation8 + $0x50] sm:$0xff]
    %v485 = vld [vmem:[#allocation8 + $0x58] sm:$0xff]
    %v486 = vld [vmem:[#allocation8 + $0x60] sm:$0xff]
    %v487 = vld [vmem:[#allocation8 + $0x68] sm:$0xff]
    %v488 = vld [vmem:[#allocation8 + $0x70] sm:$0xff]
    %v489 = vld [vmem:[#allocation8 + $0x78] sm:$0xff]
    %v490 = vld [vmem:[#allocation8 + $0x80] sm:$0xff]
    %v491 = vld [vmem:[#allocation8 + $0x88] sm:$0xff]
    %v492 = vld [vmem:[#allocation8 + $0x90] sm:$0xff]
    %v493 = vld [vmem:[#allocation8 + $0x98] sm:$0xff]
    %v494 = vld [vmem:[#allocation8 + $0xa0] sm:$0xff]
    %v495 = vld [vmem:[#allocation8 + $0xa8] sm:$0xff]
    %v496 = vld [vmem:[#allocation8 + $0xb0] sm:$0xff]
    %v497 = vld [vmem:[#allocation8 + $0xb8] sm:$0xff]
    %v498 = vld [vmem:[#allocation8 + $0xc0] sm:$0xff]
    %v499 = vld [vmem:[#allocation8 + $0xc8] sm:$0xff]
    %v500 = vld [vmem:[#allocation8 + $0xd0] sm:$0xff]
    %v501 = vld [vmem:[#allocation8 + $0xd8] sm:$0xff]
    %v502 = vld [vmem:[#allocation8 + $0xe0] sm:$0xff]
    %v503 = vld [vmem:[#allocation8 + $0xe8] sm:$0xff]
    %v504 = vld [vmem:[#allocation8 + $0xf0] sm:$0xff]
    %v505 = vld [vmem:[#allocation8 + $0xf8] sm:$0xff]
    %v506 = vld [vmem:[#allocation8 + $0x100] sm:$0xff]
    %v507 = vld [vmem:[#allocation8 + $0x108] sm:$0xff]
    %v508 = vld [vmem:[#allocation8 + $0x110] sm:$0xff]
    %v509 = vld [vmem:[#allocation8 + $0x118] sm:$0xff]
    %v510 = vld [vmem:[#allocation8 + $0x120] sm:$0xff]
    %v511 = vld [vmem:[#allocation8 + $0x128] sm:$0xff]
    %v512 = vld [vmem:[#allocation8 + $0x130] sm:$0xff]
    %v513 = vld [vmem:[#allocation8 + $0x138] sm:$0xff]
    %v514 = vld [vmem:[#allocation8 + $0x140] sm:$0xff]
    %v515 = vld [vmem:[#allocation8 + $0x148] sm:$0xff]
    %v516 = vld [vmem:[#allocation8 + $0x150] sm:$0xff]
    %v517 = vld [vmem:[#allocation8 + $0x158] sm:$0xff]
    %v518 = vld [vmem:[#allocation8 + $0x160] sm:$0xff]
    %v519 = vld [vmem:[#allocation8 + $0x168] sm:$0xff]
    %v520 = vld [vmem:[#allocation8 + $0x170] sm:$0xff]
    %v521 = vld [vmem:[#allocation8 + $0x178] sm:$0xff]
    %v522 = vld [vmem:[#allocation8 + $0x180] sm:$0xff]
    %v523 = vld [vmem:[#allocation8 + $0x188] sm:$0xff]
    %v524 = vld [vmem:[#allocation8 + $0x190] sm:$0xff]
    %v525 = vld [vmem:[#allocation8 + $0x198] sm:$0xff]
    %v526 = vld [vmem:[#allocation8 + $0x1a0] sm:$0xff]
    %v527 = vld [vmem:[#allocation8 + $0x1a8] sm:$0xff]
    %v528 = vld [vmem:[#allocation8 + $0x1b0] sm:$0xff]
    %v529 = vld [vmem:[#allocation8 + $0x1b8] sm:$0xff]
    %v530 = vld [vmem:[#allocation8 + $0x1c0] sm:$0xff]
    %v531 = vld [vmem:[#allocation8 + $0x1c8] sm:$0xff]
    %v532 = vld [vmem:[#allocation8 + $0x1d0] sm:$0xff]
    %v533 = vld [vmem:[#allocation8 + $0x1d8] sm:$0xff]
    %v534 = vld [vmem:[#allocation8 + $0x1e0] sm:$0xff]
    %v535 = vld [vmem:[#allocation8 + $0x1e8] sm:$0xff]
    %v536 = vld [vmem:[#allocation8 + $0x1f0] sm:$0xff]
    %v537 = vld [vmem:[#allocation8 + $0x1f8] sm:$0xff]
    %v538 = vld [vmem:[#allocation8 + $0x200] sm:$0xff]
    %v539 = vld [vmem:[#allocation8 + $0x208] sm:$0xff]
    %v540 = vld [vmem:[#allocation8 + $0x210] sm:$0xff]
    %v541 = vld [vmem:[#allocation8 + $0x218] sm:$0xff]
    %v542 = vld [vmem:[#allocation8 + $0x220] sm:$0xff]
    %v543 = vld [vmem:[#allocation8 + $0x228] sm:$0xff]
    %v544 = vld [vmem:[#allocation8 + $0x230] sm:$0xff]
    %v545 = vld [vmem:[#allocation8 + $0x238] sm:$0xff]
    %v546 = vld [vmem:[#allocation8 + $0x240] sm:$0xff]
    %v547 = vld [vmem:[#allocation8 + $0x248] sm:$0xff]
    %v548 = vld [vmem:[#allocation8 + $0x250] sm:$0xff]
    %v549 = vld [vmem:[#allocation8 + $0x258] sm:$0xff]
    %v550 = vld [vmem:[#allocation8 + $0x260] sm:$0xff]
    %v551 = vld [vmem:[#allocation8 + $0x268] sm:$0xff]
    %v552 = vld [vmem:[#allocation8 + $0x270] sm:$0xff]
    %v553 = vld [vmem:[#allocation8 + $0x278] sm:$0xff]
    %v554 = vld [vmem:[#allocation8 + $0x280] sm:$0xff]
    %v555 = vld [vmem:[#allocation8 + $0x288] sm:$0xff]
    %v556 = vld [vmem:[#allocation8 + $0x290] sm:$0xff]
    %v557 = vld [vmem:[#allocation8 + $0x298] sm:$0xff]
    %v558 = vld [vmem:[#allocation8 + $0x2a0] sm:$0xff]
    %v559 = vld [vmem:[#allocation8 + $0x2a8] sm:$0xff]
    %v560 = vld [vmem:[#allocation8 + $0x2b0] sm:$0xff]
    %v561 = vld [vmem:[#allocation8 + $0x2b8] sm:$0xff]
    %v562 = vld [vmem:[#allocation8 + $0x2c0] sm:$0xff]
    %v563 = vld [vmem:[#allocation8 + $0x2c8] sm:$0xff]
    %v564 = vld [vmem:[#allocation8 + $0x2d0] sm:$0xff]
    %v565 = vld [vmem:[#allocation8 + $0x2d8] sm:$0xff]
    %v566 = vld [vmem:[#allocation8 + $0x2e0] sm:$0xff]
    %v567 = vld [vmem:[#allocation8 + $0x2e8] sm:$0xff]
    %v568 = vld [vmem:[#allocation8 + $0x2f0] sm:$0xff]
    %v569 = vld [vmem:[#allocation8 + $0x2f8] sm:$0xff]
    %v570 = vld [vmem:[#allocation8 + $0x300] sm:$0xff]
    %v571 = vld [vmem:[#allocation8 + $0x308] sm:$0xff]
    %v572 = vld [vmem:[#allocation8 + $0x310] sm:$0xff]
    %v573 = vld [vmem:[#allocation8 + $0x318] sm:$0xff]
    %v574 = vld [vmem:[#allocation8 + $0x320] sm:$0xff]
    %v575 = vld [vmem:[#allocation8 + $0x328] sm:$0xff]
    %v576 = vld [vmem:[#allocation8 + $0x330] sm:$0xff]
    %v577 = vld [vmem:[#allocation8 + $0x338] sm:$0xff]
    %v578 = vld [vmem:[#allocation8 + $0x340] sm:$0xff]
    %v579 = vld [vmem:[#allocation8 + $0x348] sm:$0xff]
    %v580 = vld [vmem:[#allocation8 + $0x350] sm:$0xff]
    %v581 = vld [vmem:[#allocation8 + $0x358] sm:$0xff]
    %v582 = vld [vmem:[#allocation8 + $0x360] sm:$0xff]
    %v583 = vld [vmem:[#allocation8 + $0x368] sm:$0xff]
    %v584 = vld [vmem:[#allocation8 + $0x370] sm:$0xff]
    %v585 = vld [vmem:[#allocation8 + $0x378] sm:$0xff]
    %v586 = vld [vmem:[#allocation8 + $0x380] sm:$0xff]
    %v587 = vld [vmem:[#allocation8 + $0x388] sm:$0xff]
    %v588 = vld [vmem:[#allocation8 + $0x390] sm:$0xff]
    %v589 = vld [vmem:[#allocation8 + $0x398] sm:$0xff]
    %v590 = vld [vmem:[#allocation8 + $0x3a0] sm:$0xff]
    %v591 = vld [vmem:[#allocation8 + $0x3a8] sm:$0xff]
    %v592 = vld [vmem:[#allocation8 + $0x3b0] sm:$0xff]
    %v593 = vld [vmem:[#allocation8 + $0x3b8] sm:$0xff]
    %v594 = vld [vmem:[#allocation8 + $0x3c0] sm:$0xff]
    %v595 = vld [vmem:[#allocation8 + $0x3c8] sm:$0xff]
    %v596 = vld [vmem:[#allocation8 + $0x3d0] sm:$0xff]
    %v597 = vld [vmem:[#allocation8 + $0x3d8] sm:$0xff]
    %v598 = vld [vmem:[#allocation8 + $0x3e0] sm:$0xff]
    %v599 = vld [vmem:[#allocation8 + $0x3e8] sm:$0xff]
    %v600 = vld [vmem:[#allocation8 + $0x3f0] sm:$0xff]
    %v601 = vld [vmem:[#allocation8 + $0x3f8] sm:$0xff]
    %v602 = vld [vmem:[#allocation8 + $0x400] sm:$0xff]
    %v603 = vld [vmem:[#allocation8 + $0x408] sm:$0xff]
    %v604 = vld [vmem:[#allocation8 + $0x410] sm:$0xff]
    %v605 = vld [vmem:[#allocation8 + $0x418] sm:$0xff]
    %v606 = vld [vmem:[#allocation8 + $0x420] sm:$0xff]
    %v607 = vld [vmem:[#allocation8 + $0x428] sm:$0xff]
    %v608 = vld [vmem:[#allocation8 + $0x430] sm:$0xff]
    %v609 = vld [vmem:[#allocation8 + $0x438] sm:$0xff]
    %v610 = vld [vmem:[#allocation8 + $0x440] sm:$0xff]
    %v611 = vld [vmem:[#allocation8 + $0x448] sm:$0xff]
    %v612 = vld [vmem:[#allocation8 + $0x450] sm:$0xff]
    %v613 = vld [vmem:[#allocation8 + $0x458] sm:$0xff]
    %v614 = vld [vmem:[#allocation8 + $0x460] sm:$0xff]
    %v615 = vld [vmem:[#allocation8 + $0x468] sm:$0xff]
    %v616 = vld [vmem:[#allocation8 + $0x470] sm:$0xff]
    %v617 = vld [vmem:[#allocation8 + $0x478] sm:$0xff]
    %v618 = vld [vmem:[#allocation8 + $0x480] sm:$0xff]
    %v619 = vld [vmem:[#allocation8 + $0x488] sm:$0xff]
    %v620 = vld [vmem:[#allocation8 + $0x490] sm:$0xff]
    %v621 = vld [vmem:[#allocation8 + $0x498] sm:$0xff]
    %v622 = vld [vmem:[#allocation8 + $0x4a0] sm:$0xff]
    %v623 = vld [vmem:[#allocation8 + $0x4a8] sm:$0xff]
    %v624 = vld [vmem:[#allocation8 + $0x4b0] sm:$0xff]
    %v625 = vld [vmem:[#allocation8 + $0x4b8] sm:$0xff]
    %v626 = vld [vmem:[#allocation8 + $0x4c0] sm:$0xff]
    %v627 = vld [vmem:[#allocation8 + $0x4c8] sm:$0xff]
    %v628 = vld [vmem:[#allocation8 + $0x4d0] sm:$0xff]
    %v629 = vld [vmem:[#allocation8 + $0x4d8] sm:$0xff]
    %v630 = vld [vmem:[#allocation8 + $0x4e0] sm:$0xff]
    %v631 = vld [vmem:[#allocation8 + $0x4e8] sm:$0xff]
    %v632 = vld [vmem:[#allocation8 + $0x4f0] sm:$0xff]
    %v633 = vld [vmem:[#allocation8 + $0x4f8] sm:$0xff]
    %v634 = vld [vmem:[#allocation8 + $0x500] sm:$0xff]
    %v635 = vld [vmem:[#allocation8 + $0x508] sm:$0xff]
    %v636 = vld [vmem:[#allocation8 + $0x510] sm:$0xff]
    %v637 = vld [vmem:[#allocation8 + $0x518] sm:$0xff]
    %v638 = vld [vmem:[#allocation8 + $0x520] sm:$0xff]
    %v639 = vld [vmem:[#allocation8 + $0x528] sm:$0xff]
    %v640 = vld [vmem:[#allocation8 + $0x530] sm:$0xff]
    %v641 = vld [vmem:[#allocation8 + $0x538] sm:$0xff]
    %v642 = vld [vmem:[#allocation8 + $0x540] sm:$0xff]
    %v643 = vld [vmem:[#allocation8 + $0x548] sm:$0xff]
    %v644 = vld [vmem:[#allocation8 + $0x550] sm:$0xff]
    %v645 = vld [vmem:[#allocation8 + $0x558] sm:$0xff]
    %v646 = vld [vmem:[#allocation8 + $0x560] sm:$0xff]
    %v647 = vld [vmem:[#allocation8 + $0x568] sm:$0xff]
    %v648 = vld [vmem:[#allocation8 + $0x570] sm:$0xff]
    %v649 = vld [vmem:[#allocation8 + $0x578] sm:$0xff]
    %v650 = vld [vmem:[#allocation8 + $0x580] sm:$0xff]
    %v651 = vld [vmem:[#allocation8 + $0x588] sm:$0xff]
    %v652 = vld [vmem:[#allocation8 + $0x590] sm:$0xff]
    %v653 = vld [vmem:[#allocation8 + $0x598] sm:$0xff]
    %v654 = vld [vmem:[#allocation8 + $0x5a0] sm:$0xff]
    %v655 = vld [vmem:[#allocation8 + $0x5a8] sm:$0xff]
    %v656 = vld [vmem:[#allocation8 + $0x5b0] sm:$0xff]
    %v657 = vld [vmem:[#allocation8 + $0x5b8] sm:$0xff]
    %v658 = vld [vmem:[#allocation8 + $0x5c0] sm:$0xff]
    %v659 = vld [vmem:[#allocation8 + $0x5c8] sm:$0xff]
    %v660 = vld [vmem:[#allocation8 + $0x5d0] sm:$0xff]
    %v661 = vld [vmem:[#allocation8 + $0x5d8] sm:$0xff]
    %v662 = vld [vmem:[#allocation8 + $0x5e0] sm:$0xff]
    %v663 = vld [vmem:[#allocation8 + $0x5e8] sm:$0xff]
    %v664 = vld [vmem:[#allocation8 + $0x5f0] sm:$0xff]
    %v665 = vld [vmem:[#allocation8 + $0x5f8] sm:$0xff]
    %v666 = vld [vmem:[#allocation8 + $0x600] sm:$0xff]
    %v667 = vld [vmem:[#allocation8 + $0x608] sm:$0xff]
    %v668 = vld [vmem:[#allocation8 + $0x610] sm:$0xff]
    %v669 = vld [vmem:[#allocation8 + $0x618] sm:$0xff]
    %v670 = vld [vmem:[#allocation8 + $0x620] sm:$0xff]
    %v671 = vld [vmem:[#allocation8 + $0x628] sm:$0xff]
    %v672 = vld [vmem:[#allocation8 + $0x630] sm:$0xff]
    %v673 = vld [vmem:[#allocation8 + $0x638] sm:$0xff]
    %v674 = vld [vmem:[#allocation8 + $0x640] sm:$0xff]
    %v675 = vld [vmem:[#allocation8 + $0x648] sm:$0xff]
    %v676 = vld [vmem:[#allocation8 + $0x650] sm:$0xff]
    %v677 = vld [vmem:[#allocation8 + $0x658] sm:$0xff]
    %v678 = vld [vmem:[#allocation8 + $0x660] sm:$0xff]
    %v679 = vld [vmem:[#allocation8 + $0x668] sm:$0xff]
    %v680 = vld [vmem:[#allocation8 + $0x670] sm:$0xff]
    %v681 = vld [vmem:[#allocation8 + $0x678] sm:$0xff]
    %v682 = vld [vmem:[#allocation8 + $0x680] sm:$0xff]
    %v683 = vld [vmem:[#allocation8 + $0x688] sm:$0xff]
    %v684 = vld [vmem:[#allocation8 + $0x690] sm:$0xff]
    %v685 = vld [vmem:[#allocation8 + $0x698] sm:$0xff]
    %v686 = vld [vmem:[#allocation8 + $0x6a0] sm:$0xff]
    %v687 = vld [vmem:[#allocation8 + $0x6a8] sm:$0xff]
    %v688 = vld [vmem:[#allocation8 + $0x6b0] sm:$0xff]
    %v689 = vld [vmem:[#allocation8 + $0x6b8] sm:$0xff]
    %v690 = vld [vmem:[#allocation8 + $0x6c0] sm:$0xff]
    %v691 = vld [vmem:[#allocation8 + $0x6c8] sm:$0xff]
    %v692 = vld [vmem:[#allocation8 + $0x6d0] sm:$0xff]
    %v693 = vld [vmem:[#allocation8 + $0x6d8] sm:$0xff]
    %v694 = vld [vmem:[#allocation8 + $0x6e0] sm:$0xff]
    %v695 = vld [vmem:[#allocation8 + $0x6e8] sm:$0xff]
    %v696 = vld [vmem:[#allocation8 + $0x6f0] sm:$0xff]
    %v697 = vld [vmem:[#allocation8 + $0x6f8] sm:$0xff]
    %v698 = vld [vmem:[#allocation8 + $0x700] sm:$0xff]
    %v699 = vld [vmem:[#allocation8 + $0x708] sm:$0xff]
    %v700 = vld [vmem:[#allocation8 + $0x710] sm:$0xff]
    %v701 = vld [vmem:[#allocation8 + $0x718] sm:$0xff]
    %v702 = vld [vmem:[#allocation8 + $0x720] sm:$0xff]
    %v703 = vld [vmem:[#allocation8 + $0x728] sm:$0xff]
    %v704 = vld [vmem:[#allocation8 + $0x730] sm:$0xff]
    %v705 = vld [vmem:[#allocation8 + $0x738] sm:$0xff]
    %v706 = vld [vmem:[#allocation8 + $0x740] sm:$0xff]
    %v707 = vld [vmem:[#allocation8 + $0x748] sm:$0xff]
    %v708 = vld [vmem:[#allocation8 + $0x750] sm:$0xff]
    %v709 = vld [vmem:[#allocation8 + $0x758] sm:$0xff]
    %v710 = vld [vmem:[#allocation8 + $0x760] sm:$0xff]
    %v711 = vld [vmem:[#allocation8 + $0x768] sm:$0xff]
    %v712 = vld [vmem:[#allocation8 + $0x770] sm:$0xff]
    %v713 = vld [vmem:[#allocation8 + $0x778] sm:$0xff]
    %v714 = vld [vmem:[#allocation8 + $0x780] sm:$0xff]
    %v715 = vld [vmem:[#allocation8 + $0x788] sm:$0xff]
    %v716 = vld [vmem:[#allocation8 + $0x790] sm:$0xff]
    %v717 = vld [vmem:[#allocation8 + $0x798] sm:$0xff]
    %v718 = vld [vmem:[#allocation8 + $0x7a0] sm:$0xff]
    %v719 = vld [vmem:[#allocation8 + $0x7a8] sm:$0xff]
    %v720 = vld [vmem:[#allocation8 + $0x7b0] sm:$0xff]
    %v721 = vld [vmem:[#allocation8 + $0x7b8] sm:$0xff]
    %v722 = vld [vmem:[#allocation8 + $0x7c0] sm:$0xff]
    %v723 = vld [vmem:[#allocation8 + $0x7c8] sm:$0xff]
    %v724 = vld [vmem:[#allocation8 + $0x7d0] sm:$0xff]
    %v725 = vld [vmem:[#allocation8 + $0x7d8] sm:$0xff]
    %v726 = vld [vmem:[#allocation8 + $0x7e0] sm:$0xff]
    %v727 = vld [vmem:[#allocation8 + $0x7e8] sm:$0xff]
    %v728 = vld [vmem:[#allocation8 + $0x7f0] sm:$0xff]
    %v729 = vld [vmem:[#allocation8 + $0x7f8] sm:$0xff]
    %v730 = vld [vmem:[%s4] sm:$0xf]
    %v732 = vlaneseq
    %v733 = vshrl.u32 %v732, 7
    %v734 = vsub.s32 0, %v733
    %v735 = vrot.slane %v730, %v734
    %v736 = vlaneseq
    %v737 = vshrl.u32 %v736, 7
    %v738 = vsub.s32 1, %v737
    %v739 = vrot.slane %v730, %v738
    %v740 = vlaneseq
    %v741 = vshrl.u32 %v740, 7
    %v742 = vsub.s32 2, %v741
    %v743 = vrot.slane %v730, %v742
    %v744 = vlaneseq
    %v745 = vshrl.u32 %v744, 7
    %v746 = vsub.s32 3, %v745
    %v747 = vrot.slane %v730, %v746
    %v1008 = vunpack.c.l.b16 %v474
    %v1009 = vunpack.c.h.b16 %v474
    %v1010 = vunpack.c.l.b16 %v475
    %v1011 = vunpack.c.h.b16 %v475
    %v1012 = vunpack.c.l.b16 %v476
    %v1013 = vunpack.c.h.b16 %v476
    %v1014 = vunpack.c.l.b16 %v477
    %v1015 = vunpack.c.h.b16 %v477
    %v1016 = vunpack.c.l.b16 %v478
    %v1017 = vunpack.c.h.b16 %v478
    %v1018 = vunpack.c.l.b16 %v479
    %v1019 = vunpack.c.h.b16 %v479
    %v1020 = vunpack.c.l.b16 %v480
    %v1021 = vunpack.c.h.b16 %v480
    %v1022 = vunpack.c.l.b16 %v481
    %v1023 = vunpack.c.h.b16 %v481
    %v1024 = vunpack.c.l.b16 %v482
    %v1025 = vunpack.c.h.b16 %v482
    %v1026 = vunpack.c.l.b16 %v483
    %v1027 = vunpack.c.h.b16 %v483
    %v1028 = vunpack.c.l.b16 %v484
    %v1029 = vunpack.c.h.b16 %v484
    %v1030 = vunpack.c.l.b16 %v485
    %v1031 = vunpack.c.h.b16 %v485
    %v1032 = vunpack.c.l.b16 %v486
    %v1033 = vunpack.c.h.b16 %v486
    %v1034 = vunpack.c.l.b16 %v487
    %v1035 = vunpack.c.h.b16 %v487
    %v1036 = vunpack.c.l.b16 %v488
    %v1037 = vunpack.c.h.b16 %v488
    %v1038 = vunpack.c.l.b16 %v489
    %v1039 = vunpack.c.h.b16 %v489
    %v1040 = vunpack.c.l.b16 %v490
    %v1041 = vunpack.c.h.b16 %v490
    %v1042 = vunpack.c.l.b16 %v491
    %v1043 = vunpack.c.h.b16 %v491
    %v1044 = vunpack.c.l.b16 %v492
    %v1045 = vunpack.c.h.b16 %v492
    %v1046 = vunpack.c.l.b16 %v493
    %v1047 = vunpack.c.h.b16 %v493
    %v1048 = vunpack.c.l.b16 %v494
    %v1049 = vunpack.c.h.b16 %v494
    %v1050 = vunpack.c.l.b16 %v495
    %v1051 = vunpack.c.h.b16 %v495
    %v1052 = vunpack.c.l.b16 %v496
    %v1053 = vunpack.c.h.b16 %v496
    %v1054 = vunpack.c.l.b16 %v497
    %v1055 = vunpack.c.h.b16 %v497
    %v1056 = vunpack.c.l.b16 %v498
    %v1057 = vunpack.c.h.b16 %v498
    %v1058 = vunpack.c.l.b16 %v499
    %v1059 = vunpack.c.h.b16 %v499
    %v1060 = vunpack.c.l.b16 %v500
    %v1061 = vunpack.c.h.b16 %v500
    %v1062 = vunpack.c.l.b16 %v501
    %v1063 = vunpack.c.h.b16 %v501
    %v1064 = vunpack.c.l.b16 %v502
    %v1065 = vunpack.c.h.b16 %v502
    %v1066 = vunpack.c.l.b16 %v503
    %v1067 = vunpack.c.h.b16 %v503
    %v1068 = vunpack.c.l.b16 %v504
    %v1069 = vunpack.c.h.b16 %v504
    %v1070 = vunpack.c.l.b16 %v505
    %v1071 = vunpack.c.h.b16 %v505
    %v1072 = vunpack.c.l.b16 %v506
    %v1073 = vunpack.c.h.b16 %v506
    %v1074 = vunpack.c.l.b16 %v507
    %v1075 = vunpack.c.h.b16 %v507
    %v1076 = vunpack.c.l.b16 %v508
    %v1077 = vunpack.c.h.b16 %v508
    %v1078 = vunpack.c.l.b16 %v509
    %v1079 = vunpack.c.h.b16 %v509
    %v1080 = vunpack.c.l.b16 %v510
    %v1081 = vunpack.c.h.b16 %v510
    %v1082 = vunpack.c.l.b16 %v511
    %v1083 = vunpack.c.h.b16 %v511
    %v1084 = vunpack.c.l.b16 %v512
    %v1085 = vunpack.c.h.b16 %v512
    %v1086 = vunpack.c.l.b16 %v513
    %v1087 = vunpack.c.h.b16 %v513
    %v1088 = vunpack.c.l.b16 %v514
    %v1089 = vunpack.c.h.b16 %v514
    %v1090 = vunpack.c.l.b16 %v515
    %v1091 = vunpack.c.h.b16 %v515
    %v1092 = vunpack.c.l.b16 %v516
    %v1093 = vunpack.c.h.b16 %v516
    %v1094 = vunpack.c.l.b16 %v517
    %v1095 = vunpack.c.h.b16 %v517
    %v1096 = vunpack.c.l.b16 %v518
    %v1097 = vunpack.c.h.b16 %v518
    %v1098 = vunpack.c.l.b16 %v519
    %v1099 = vunpack.c.h.b16 %v519
    %v1100 = vunpack.c.l.b16 %v520
    %v1101 = vunpack.c.h.b16 %v520
    %v1102 = vunpack.c.l.b16 %v521
    %v1103 = vunpack.c.h.b16 %v521
    %v1104 = vunpack.c.l.b16 %v522
    %v1105 = vunpack.c.h.b16 %v522
    %v1106 = vunpack.c.l.b16 %v523
    %v1107 = vunpack.c.h.b16 %v523
    %v1108 = vunpack.c.l.b16 %v524
    %v1109 = vunpack.c.h.b16 %v524
    %v1110 = vunpack.c.l.b16 %v525
    %v1111 = vunpack.c.h.b16 %v525
    %v1112 = vunpack.c.l.b16 %v526
    %v1113 = vunpack.c.h.b16 %v526
    %v1114 = vunpack.c.l.b16 %v527
    %v1115 = vunpack.c.h.b16 %v527
    %v1116 = vunpack.c.l.b16 %v528
    %v1117 = vunpack.c.h.b16 %v528
    %v1118 = vunpack.c.l.b16 %v529
    %v1119 = vunpack.c.h.b16 %v529
    %v1120 = vunpack.c.l.b16 %v530
    %v1121 = vunpack.c.h.b16 %v530
    %v1122 = vunpack.c.l.b16 %v531
    %v1123 = vunpack.c.h.b16 %v531
    %v1124 = vunpack.c.l.b16 %v532
    %v1125 = vunpack.c.h.b16 %v532
    %v1126 = vunpack.c.l.b16 %v533
    %v1127 = vunpack.c.h.b16 %v533
    %v1128 = vunpack.c.l.b16 %v534
    %v1129 = vunpack.c.h.b16 %v534
    %v1130 = vunpack.c.l.b16 %v535
    %v1131 = vunpack.c.h.b16 %v535
    %v1132 = vunpack.c.l.b16 %v536
    %v1133 = vunpack.c.h.b16 %v536
    %v1134 = vunpack.c.l.b16 %v537
    %v1135 = vunpack.c.h.b16 %v537
    %v1136 = vunpack.c.l.b16 %v538
    %v1137 = vunpack.c.h.b16 %v538
    %v1138 = vunpack.c.l.b16 %v539
    %v1139 = vunpack.c.h.b16 %v539
    %v1140 = vunpack.c.l.b16 %v540
    %v1141 = vunpack.c.h.b16 %v540
    %v1142 = vunpack.c.l.b16 %v541
    %v1143 = vunpack.c.h.b16 %v541
    %v1144 = vunpack.c.l.b16 %v542
    %v1145 = vunpack.c.h.b16 %v542
    %v1146 = vunpack.c.l.b16 %v543
    %v1147 = vunpack.c.h.b16 %v543
    %v1148 = vunpack.c.l.b16 %v544
    %v1149 = vunpack.c.h.b16 %v544
    %v1150 = vunpack.c.l.b16 %v545
    %v1151 = vunpack.c.h.b16 %v545
    %v1152 = vunpack.c.l.b16 %v546
    %v1153 = vunpack.c.h.b16 %v546
    %v1154 = vunpack.c.l.b16 %v547
    %v1155 = vunpack.c.h.b16 %v547
    %v1156 = vunpack.c.l.b16 %v548
    %v1157 = vunpack.c.h.b16 %v548
    %v1158 = vunpack.c.l.b16 %v549
    %v1159 = vunpack.c.h.b16 %v549
    %v1160 = vunpack.c.l.b16 %v550
    %v1161 = vunpack.c.h.b16 %v550
    %v1162 = vunpack.c.l.b16 %v551
    %v1163 = vunpack.c.h.b16 %v551
    %v1164 = vunpack.c.l.b16 %v552
    %v1165 = vunpack.c.h.b16 %v552
    %v1166 = vunpack.c.l.b16 %v553
    %v1167 = vunpack.c.h.b16 %v553
    %v1168 = vunpack.c.l.b16 %v554
    %v1169 = vunpack.c.h.b16 %v554
    %v1170 = vunpack.c.l.b16 %v555
    %v1171 = vunpack.c.h.b16 %v555
    %v1172 = vunpack.c.l.b16 %v556
    %v1173 = vunpack.c.h.b16 %v556
    %v1174 = vunpack.c.l.b16 %v557
    %v1175 = vunpack.c.h.b16 %v557
    %v1176 = vunpack.c.l.b16 %v558
    %v1177 = vunpack.c.h.b16 %v558
    %v1178 = vunpack.c.l.b16 %v559
    %v1179 = vunpack.c.h.b16 %v559
    %v1180 = vunpack.c.l.b16 %v560
    %v1181 = vunpack.c.h.b16 %v560
    %v1182 = vunpack.c.l.b16 %v561
    %v1183 = vunpack.c.h.b16 %v561
    %v1184 = vunpack.c.l.b16 %v562
    %v1185 = vunpack.c.h.b16 %v562
    %v1186 = vunpack.c.l.b16 %v563
    %v1187 = vunpack.c.h.b16 %v563
    %v1188 = vunpack.c.l.b16 %v564
    %v1189 = vunpack.c.h.b16 %v564
    %v1190 = vunpack.c.l.b16 %v565
    %v1191 = vunpack.c.h.b16 %v565
    %v1192 = vunpack.c.l.b16 %v566
    %v1193 = vunpack.c.h.b16 %v566
    %v1194 = vunpack.c.l.b16 %v567
    %v1195 = vunpack.c.h.b16 %v567
    %v1196 = vunpack.c.l.b16 %v568
    %v1197 = vunpack.c.h.b16 %v568
    %v1198 = vunpack.c.l.b16 %v569
    %v1199 = vunpack.c.h.b16 %v569
    %v1200 = vunpack.c.l.b16 %v570
    %v1201 = vunpack.c.h.b16 %v570
    %v1202 = vunpack.c.l.b16 %v571
    %v1203 = vunpack.c.h.b16 %v571
    %v1204 = vunpack.c.l.b16 %v572
    %v1205 = vunpack.c.h.b16 %v572
    %v1206 = vunpack.c.l.b16 %v573
    %v1207 = vunpack.c.h.b16 %v573
    %v1208 = vunpack.c.l.b16 %v574
    %v1209 = vunpack.c.h.b16 %v574
    %v1210 = vunpack.c.l.b16 %v575
    %v1211 = vunpack.c.h.b16 %v575
    %v1212 = vunpack.c.l.b16 %v576
    %v1213 = vunpack.c.h.b16 %v576
    %v1214 = vunpack.c.l.b16 %v577
    %v1215 = vunpack.c.h.b16 %v577
    %v1216 = vunpack.c.l.b16 %v578
    %v1217 = vunpack.c.h.b16 %v578
    %v1218 = vunpack.c.l.b16 %v579
    %v1219 = vunpack.c.h.b16 %v579
    %v1220 = vunpack.c.l.b16 %v580
    %v1221 = vunpack.c.h.b16 %v580
    %v1222 = vunpack.c.l.b16 %v581
    %v1223 = vunpack.c.h.b16 %v581
    %v1224 = vunpack.c.l.b16 %v582
    %v1225 = vunpack.c.h.b16 %v582
    %v1226 = vunpack.c.l.b16 %v583
    %v1227 = vunpack.c.h.b16 %v583
    %v1228 = vunpack.c.l.b16 %v584
    %v1229 = vunpack.c.h.b16 %v584
    %v1230 = vunpack.c.l.b16 %v585
    %v1231 = vunpack.c.h.b16 %v585
    %v1232 = vunpack.c.l.b16 %v586
    %v1233 = vunpack.c.h.b16 %v586
    %v1234 = vunpack.c.l.b16 %v587
    %v1235 = vunpack.c.h.b16 %v587
    %v1236 = vunpack.c.l.b16 %v588
    %v1237 = vunpack.c.h.b16 %v588
    %v1238 = vunpack.c.l.b16 %v589
    %v1239 = vunpack.c.h.b16 %v589
    %v1240 = vunpack.c.l.b16 %v590
    %v1241 = vunpack.c.h.b16 %v590
    %v1242 = vunpack.c.l.b16 %v591
    %v1243 = vunpack.c.h.b16 %v591
    %v1244 = vunpack.c.l.b16 %v592
    %v1245 = vunpack.c.h.b16 %v592
    %v1246 = vunpack.c.l.b16 %v593
    %v1247 = vunpack.c.h.b16 %v593
    %v1248 = vunpack.c.l.b16 %v594
    %v1249 = vunpack.c.h.b16 %v594
    %v1250 = vunpack.c.l.b16 %v595
    %v1251 = vunpack.c.h.b16 %v595
    %v1252 = vunpack.c.l.b16 %v596
    %v1253 = vunpack.c.h.b16 %v596
    %v1254 = vunpack.c.l.b16 %v597
    %v1255 = vunpack.c.h.b16 %v597
    %v1256 = vunpack.c.l.b16 %v598
    %v1257 = vunpack.c.h.b16 %v598
    %v1258 = vunpack.c.l.b16 %v599
    %v1259 = vunpack.c.h.b16 %v599
    %v1260 = vunpack.c.l.b16 %v600
    %v1261 = vunpack.c.h.b16 %v600
    %v1262 = vunpack.c.l.b16 %v601
    %v1263 = vunpack.c.h.b16 %v601
    %v1264 = vunpack.c.l.b16 %v602
    %v1265 = vunpack.c.h.b16 %v602
    %v1266 = vunpack.c.l.b16 %v603
    %v1267 = vunpack.c.h.b16 %v603
    %v1268 = vunpack.c.l.b16 %v604
    %v1269 = vunpack.c.h.b16 %v604
    %v1270 = vunpack.c.l.b16 %v605
    %v1271 = vunpack.c.h.b16 %v605
    %v1272 = vunpack.c.l.b16 %v606
    %v1273 = vunpack.c.h.b16 %v606
    %v1274 = vunpack.c.l.b16 %v607
    %v1275 = vunpack.c.h.b16 %v607
    %v1276 = vunpack.c.l.b16 %v608
    %v1277 = vunpack.c.h.b16 %v608
    %v1278 = vunpack.c.l.b16 %v609
    %v1279 = vunpack.c.h.b16 %v609
    %v1280 = vunpack.c.l.b16 %v610
    %v1281 = vunpack.c.h.b16 %v610
    %v1282 = vunpack.c.l.b16 %v611
    %v1283 = vunpack.c.h.b16 %v611
    %v1284 = vunpack.c.l.b16 %v612
    %v1285 = vunpack.c.h.b16 %v612
    %v1286 = vunpack.c.l.b16 %v613
    %v1287 = vunpack.c.h.b16 %v613
    %v1288 = vunpack.c.l.b16 %v614
    %v1289 = vunpack.c.h.b16 %v614
    %v1290 = vunpack.c.l.b16 %v615
    %v1291 = vunpack.c.h.b16 %v615
    %v1292 = vunpack.c.l.b16 %v616
    %v1293 = vunpack.c.h.b16 %v616
    %v1294 = vunpack.c.l.b16 %v617
    %v1295 = vunpack.c.h.b16 %v617
    %v1296 = vunpack.c.l.b16 %v618
    %v1297 = vunpack.c.h.b16 %v618
    %v1298 = vunpack.c.l.b16 %v619
    %v1299 = vunpack.c.h.b16 %v619
    %v1300 = vunpack.c.l.b16 %v620
    %v1301 = vunpack.c.h.b16 %v620
    %v1302 = vunpack.c.l.b16 %v621
    %v1303 = vunpack.c.h.b16 %v621
    %v1304 = vunpack.c.l.b16 %v622
    %v1305 = vunpack.c.h.b16 %v622
    %v1306 = vunpack.c.l.b16 %v623
    %v1307 = vunpack.c.h.b16 %v623
    %v1308 = vunpack.c.l.b16 %v624
    %v1309 = vunpack.c.h.b16 %v624
    %v1310 = vunpack.c.l.b16 %v625
    %v1311 = vunpack.c.h.b16 %v625
    %v1312 = vunpack.c.l.b16 %v626
    %v1313 = vunpack.c.h.b16 %v626
    %v1314 = vunpack.c.l.b16 %v627
    %v1315 = vunpack.c.h.b16 %v627
    %v1316 = vunpack.c.l.b16 %v628
    %v1317 = vunpack.c.h.b16 %v628
    %v1318 = vunpack.c.l.b16 %v629
    %v1319 = vunpack.c.h.b16 %v629
    %v1320 = vunpack.c.l.b16 %v630
    %v1321 = vunpack.c.h.b16 %v630
    %v1322 = vunpack.c.l.b16 %v631
    %v1323 = vunpack.c.h.b16 %v631
    %v1324 = vunpack.c.l.b16 %v632
    %v1325 = vunpack.c.h.b16 %v632
    %v1326 = vunpack.c.l.b16 %v633
    %v1327 = vunpack.c.h.b16 %v633
    %v1328 = vunpack.c.l.b16 %v634
    %v1329 = vunpack.c.h.b16 %v634
    %v1330 = vunpack.c.l.b16 %v635
    %v1331 = vunpack.c.h.b16 %v635
    %v1332 = vunpack.c.l.b16 %v636
    %v1333 = vunpack.c.h.b16 %v636
    %v1334 = vunpack.c.l.b16 %v637
    %v1335 = vunpack.c.h.b16 %v637
    %v1336 = vunpack.c.l.b16 %v638
    %v1337 = vunpack.c.h.b16 %v638
    %v1338 = vunpack.c.l.b16 %v639
    %v1339 = vunpack.c.h.b16 %v639
    %v1340 = vunpack.c.l.b16 %v640
    %v1341 = vunpack.c.h.b16 %v640
    %v1342 = vunpack.c.l.b16 %v641
    %v1343 = vunpack.c.h.b16 %v641
    %v1344 = vunpack.c.l.b16 %v642
    %v1345 = vunpack.c.h.b16 %v642
    %v1346 = vunpack.c.l.b16 %v643
    %v1347 = vunpack.c.h.b16 %v643
    %v1348 = vunpack.c.l.b16 %v644
    %v1349 = vunpack.c.h.b16 %v644
    %v1350 = vunpack.c.l.b16 %v645
    %v1351 = vunpack.c.h.b16 %v645
    %v1352 = vunpack.c.l.b16 %v646
    %v1353 = vunpack.c.h.b16 %v646
    %v1354 = vunpack.c.l.b16 %v647
    %v1355 = vunpack.c.h.b16 %v647
    %v1356 = vunpack.c.l.b16 %v648
    %v1357 = vunpack.c.h.b16 %v648
    %v1358 = vunpack.c.l.b16 %v649
    %v1359 = vunpack.c.h.b16 %v649
    %v1360 = vunpack.c.l.b16 %v650
    %v1361 = vunpack.c.h.b16 %v650
    %v1362 = vunpack.c.l.b16 %v651
    %v1363 = vunpack.c.h.b16 %v651
    %v1364 = vunpack.c.l.b16 %v652
    %v1365 = vunpack.c.h.b16 %v652
    %v1366 = vunpack.c.l.b16 %v653
    %v1367 = vunpack.c.h.b16 %v653
    %v1368 = vunpack.c.l.b16 %v654
    %v1369 = vunpack.c.h.b16 %v654
    %v1370 = vunpack.c.l.b16 %v655
    %v1371 = vunpack.c.h.b16 %v655
    %v1372 = vunpack.c.l.b16 %v656
    %v1373 = vunpack.c.h.b16 %v656
    %v1374 = vunpack.c.l.b16 %v657
    %v1375 = vunpack.c.h.b16 %v657
    %v1376 = vunpack.c.l.b16 %v658
    %v1377 = vunpack.c.h.b16 %v658
    %v1378 = vunpack.c.l.b16 %v659
    %v1379 = vunpack.c.h.b16 %v659
    %v1380 = vunpack.c.l.b16 %v660
    %v1381 = vunpack.c.h.b16 %v660
    %v1382 = vunpack.c.l.b16 %v661
    %v1383 = vunpack.c.h.b16 %v661
    %v1384 = vunpack.c.l.b16 %v662
    %v1385 = vunpack.c.h.b16 %v662
    %v1386 = vunpack.c.l.b16 %v663
    %v1387 = vunpack.c.h.b16 %v663
    %v1388 = vunpack.c.l.b16 %v664
    %v1389 = vunpack.c.h.b16 %v664
    %v1390 = vunpack.c.l.b16 %v665
    %v1391 = vunpack.c.h.b16 %v665
    %v1392 = vunpack.c.l.b16 %v666
    %v1393 = vunpack.c.h.b16 %v666
    %v1394 = vunpack.c.l.b16 %v667
    %v1395 = vunpack.c.h.b16 %v667
    %v1396 = vunpack.c.l.b16 %v668
    %v1397 = vunpack.c.h.b16 %v668
    %v1398 = vunpack.c.l.b16 %v669
    %v1399 = vunpack.c.h.b16 %v669
    %v1400 = vunpack.c.l.b16 %v670
    %v1401 = vunpack.c.h.b16 %v670
    %v1402 = vunpack.c.l.b16 %v671
    %v1403 = vunpack.c.h.b16 %v671
    %v1404 = vunpack.c.l.b16 %v672
    %v1405 = vunpack.c.h.b16 %v672
    %v1406 = vunpack.c.l.b16 %v673
    %v1407 = vunpack.c.h.b16 %v673
    %v1408 = vunpack.c.l.b16 %v674
    %v1409 = vunpack.c.h.b16 %v674
    %v1410 = vunpack.c.l.b16 %v675
    %v1411 = vunpack.c.h.b16 %v675
    %v1412 = vunpack.c.l.b16 %v676
    %v1413 = vunpack.c.h.b16 %v676
    %v1414 = vunpack.c.l.b16 %v677
    %v1415 = vunpack.c.h.b16 %v677
    %v1416 = vunpack.c.l.b16 %v678
    %v1417 = vunpack.c.h.b16 %v678
    %v1418 = vunpack.c.l.b16 %v679
    %v1419 = vunpack.c.h.b16 %v679
    %v1420 = vunpack.c.l.b16 %v680
    %v1421 = vunpack.c.h.b16 %v680
    %v1422 = vunpack.c.l.b16 %v681
    %v1423 = vunpack.c.h.b16 %v681
    %v1424 = vunpack.c.l.b16 %v682
    %v1425 = vunpack.c.h.b16 %v682
    %v1426 = vunpack.c.l.b16 %v683
    %v1427 = vunpack.c.h.b16 %v683
    %v1428 = vunpack.c.l.b16 %v684
    %v1429 = vunpack.c.h.b16 %v684
    %v1430 = vunpack.c.l.b16 %v685
    %v1431 = vunpack.c.h.b16 %v685
    %v1432 = vunpack.c.l.b16 %v686
    %v1433 = vunpack.c.h.b16 %v686
    %v1434 = vunpack.c.l.b16 %v687
    %v1435 = vunpack.c.h.b16 %v687
    %v1436 = vunpack.c.l.b16 %v688
    %v1437 = vunpack.c.h.b16 %v688
    %v1438 = vunpack.c.l.b16 %v689
    %v1439 = vunpack.c.h.b16 %v689
    %v1440 = vunpack.c.l.b16 %v690
    %v1441 = vunpack.c.h.b16 %v690
    %v1442 = vunpack.c.l.b16 %v691
    %v1443 = vunpack.c.h.b16 %v691
    %v1444 = vunpack.c.l.b16 %v692
    %v1445 = vunpack.c.h.b16 %v692
    %v1446 = vunpack.c.l.b16 %v693
    %v1447 = vunpack.c.h.b16 %v693
    %v1448 = vunpack.c.l.b16 %v694
    %v1449 = vunpack.c.h.b16 %v694
    %v1450 = vunpack.c.l.b16 %v695
    %v1451 = vunpack.c.h.b16 %v695
    %v1452 = vunpack.c.l.b16 %v696
    %v1453 = vunpack.c.h.b16 %v696
    %v1454 = vunpack.c.l.b16 %v697
    %v1455 = vunpack.c.h.b16 %v697
    %v1456 = vunpack.c.l.b16 %v698
    %v1457 = vunpack.c.h.b16 %v698
    %v1458 = vunpack.c.l.b16 %v699
    %v1459 = vunpack.c.h.b16 %v699
    %v1460 = vunpack.c.l.b16 %v700
    %v1461 = vunpack.c.h.b16 %v700
    %v1462 = vunpack.c.l.b16 %v701
    %v1463 = vunpack.c.h.b16 %v701
    %v1464 = vunpack.c.l.b16 %v702
    %v1465 = vunpack.c.h.b16 %v702
    %v1466 = vunpack.c.l.b16 %v703
    %v1467 = vunpack.c.h.b16 %v703
    %v1468 = vunpack.c.l.b16 %v704
    %v1469 = vunpack.c.h.b16 %v704
    %v1470 = vunpack.c.l.b16 %v705
    %v1471 = vunpack.c.h.b16 %v705
    %v1472 = vunpack.c.l.b16 %v706
    %v1473 = vunpack.c.h.b16 %v706
    %v1474 = vunpack.c.l.b16 %v707
    %v1475 = vunpack.c.h.b16 %v707
    %v1476 = vunpack.c.l.b16 %v708
    %v1477 = vunpack.c.h.b16 %v708
    %v1478 = vunpack.c.l.b16 %v709
    %v1479 = vunpack.c.h.b16 %v709
    %v1480 = vunpack.c.l.b16 %v710
    %v1481 = vunpack.c.h.b16 %v710
    %v1482 = vunpack.c.l.b16 %v711
    %v1483 = vunpack.c.h.b16 %v711
    %v1484 = vunpack.c.l.b16 %v712
    %v1485 = vunpack.c.h.b16 %v712
    %v1486 = vunpack.c.l.b16 %v713
    %v1487 = vunpack.c.h.b16 %v713
    %v1488 = vunpack.c.l.b16 %v714
    %v1489 = vunpack.c.h.b16 %v714
    %v1490 = vunpack.c.l.b16 %v715
    %v1491 = vunpack.c.h.b16 %v715
    %v1492 = vunpack.c.l.b16 %v716
    %v1493 = vunpack.c.h.b16 %v716
    %v1494 = vunpack.c.l.b16 %v717
    %v1495 = vunpack.c.h.b16 %v717
    %v1496 = vunpack.c.l.b16 %v718
    %v1497 = vunpack.c.h.b16 %v718
    %v1498 = vunpack.c.l.b16 %v719
    %v1499 = vunpack.c.h.b16 %v719
    %v1500 = vunpack.c.l.b16 %v720
    %v1501 = vunpack.c.h.b16 %v720
    %v1502 = vunpack.c.l.b16 %v721
    %v1503 = vunpack.c.h.b16 %v721
    %v1504 = vunpack.c.l.b16 %v722
    %v1505 = vunpack.c.h.b16 %v722
    %v1506 = vunpack.c.l.b16 %v723
    %v1507 = vunpack.c.h.b16 %v723
    %v1508 = vunpack.c.l.b16 %v724
    %v1509 = vunpack.c.h.b16 %v724
    %v1510 = vunpack.c.l.b16 %v725
    %v1511 = vunpack.c.h.b16 %v725
    %v1512 = vunpack.c.l.b16 %v726
    %v1513 = vunpack.c.h.b16 %v726
    %v1514 = vunpack.c.l.b16 %v727
    %v1515 = vunpack.c.h.b16 %v727
    %v1516 = vunpack.c.l.b16 %v728
    %v1517 = vunpack.c.h.b16 %v728
    %v1518 = vunpack.c.l.b16 %v729
    %v1519 = vunpack.c.h.b16 %v729
    %v1520 = vpack.c.b16 %v1012, %v1008
    %v1521 = vpack.c.b16 %v1013, %v1009
    %v1522 = vpack.c.b16 %v1014, %v1010
    %v1523 = vpack.c.b16 %v1015, %v1011
    %v1524 = vpack.c.b16 %v1020, %v1016
    %v1525 = vpack.c.b16 %v1021, %v1017
    %v1526 = vpack.c.b16 %v1022, %v1018
    %v1527 = vpack.c.b16 %v1023, %v1019
    %v1528 = vpack.c.b16 %v1028, %v1024
    %v1529 = vpack.c.b16 %v1029, %v1025
    %v1530 = vpack.c.b16 %v1030, %v1026
    %v1531 = vpack.c.b16 %v1031, %v1027
    %v1532 = vpack.c.b16 %v1036, %v1032
    %v1533 = vpack.c.b16 %v1037, %v1033
    %v1534 = vpack.c.b16 %v1038, %v1034
    %v1535 = vpack.c.b16 %v1039, %v1035
    %v1536 = vpack.c.b16 %v1044, %v1040
    %v1537 = vpack.c.b16 %v1045, %v1041
    %v1538 = vpack.c.b16 %v1046, %v1042
    %v1539 = vpack.c.b16 %v1047, %v1043
    %v1540 = vpack.c.b16 %v1052, %v1048
    %v1541 = vpack.c.b16 %v1053, %v1049
    %v1542 = vpack.c.b16 %v1054, %v1050
    %v1543 = vpack.c.b16 %v1055, %v1051
    %v1544 = vpack.c.b16 %v1060, %v1056
    %v1545 = vpack.c.b16 %v1061, %v1057
    %v1546 = vpack.c.b16 %v1062, %v1058
    %v1547 = vpack.c.b16 %v1063, %v1059
    %v1548 = vpack.c.b16 %v1068, %v1064
    %v1549 = vpack.c.b16 %v1069, %v1065
    %v1550 = vpack.c.b16 %v1070, %v1066
    %v1551 = vpack.c.b16 %v1071, %v1067
    %v1552 = vpack.c.b16 %v1076, %v1072
    %v1553 = vpack.c.b16 %v1077, %v1073
    %v1554 = vpack.c.b16 %v1078, %v1074
    %v1555 = vpack.c.b16 %v1079, %v1075
    %v1556 = vpack.c.b16 %v1084, %v1080
    %v1557 = vpack.c.b16 %v1085, %v1081
    %v1558 = vpack.c.b16 %v1086, %v1082
    %v1559 = vpack.c.b16 %v1087, %v1083
    %v1560 = vpack.c.b16 %v1092, %v1088
    %v1561 = vpack.c.b16 %v1093, %v1089
    %v1562 = vpack.c.b16 %v1094, %v1090
    %v1563 = vpack.c.b16 %v1095, %v1091
    %v1564 = vpack.c.b16 %v1100, %v1096
    %v1565 = vpack.c.b16 %v1101, %v1097
    %v1566 = vpack.c.b16 %v1102, %v1098
    %v1567 = vpack.c.b16 %v1103, %v1099
    %v1568 = vpack.c.b16 %v1108, %v1104
    %v1569 = vpack.c.b16 %v1109, %v1105
    %v1570 = vpack.c.b16 %v1110, %v1106
    %v1571 = vpack.c.b16 %v1111, %v1107
    %v1572 = vpack.c.b16 %v1116, %v1112
    %v1573 = vpack.c.b16 %v1117, %v1113
    %v1574 = vpack.c.b16 %v1118, %v1114
    %v1575 = vpack.c.b16 %v1119, %v1115
    %v1576 = vpack.c.b16 %v1124, %v1120
    %v1577 = vpack.c.b16 %v1125, %v1121
    %v1578 = vpack.c.b16 %v1126, %v1122
    %v1579 = vpack.c.b16 %v1127, %v1123
    %v1580 = vpack.c.b16 %v1132, %v1128
    %v1581 = vpack.c.b16 %v1133, %v1129
    %v1582 = vpack.c.b16 %v1134, %v1130
    %v1583 = vpack.c.b16 %v1135, %v1131
    %v1584 = vpack.c.b16 %v1140, %v1136
    %v1585 = vpack.c.b16 %v1141, %v1137
    %v1586 = vpack.c.b16 %v1142, %v1138
    %v1587 = vpack.c.b16 %v1143, %v1139
    %v1588 = vpack.c.b16 %v1148, %v1144
    %v1589 = vpack.c.b16 %v1149, %v1145
    %v1590 = vpack.c.b16 %v1150, %v1146
    %v1591 = vpack.c.b16 %v1151, %v1147
    %v1592 = vpack.c.b16 %v1156, %v1152
    %v1593 = vpack.c.b16 %v1157, %v1153
    %v1594 = vpack.c.b16 %v1158, %v1154
    %v1595 = vpack.c.b16 %v1159, %v1155
    %v1596 = vpack.c.b16 %v1164, %v1160
    %v1597 = vpack.c.b16 %v1165, %v1161
    %v1598 = vpack.c.b16 %v1166, %v1162
    %v1599 = vpack.c.b16 %v1167, %v1163
    %v1600 = vpack.c.b16 %v1172, %v1168
    %v1601 = vpack.c.b16 %v1173, %v1169
    %v1602 = vpack.c.b16 %v1174, %v1170
    %v1603 = vpack.c.b16 %v1175, %v1171
    %v1604 = vpack.c.b16 %v1180, %v1176
    %v1605 = vpack.c.b16 %v1181, %v1177
    %v1606 = vpack.c.b16 %v1182, %v1178
    %v1607 = vpack.c.b16 %v1183, %v1179
    %v1608 = vpack.c.b16 %v1188, %v1184
    %v1609 = vpack.c.b16 %v1189, %v1185
    %v1610 = vpack.c.b16 %v1190, %v1186
    %v1611 = vpack.c.b16 %v1191, %v1187
    %v1612 = vpack.c.b16 %v1196, %v1192
    %v1613 = vpack.c.b16 %v1197, %v1193
    %v1614 = vpack.c.b16 %v1198, %v1194
    %v1615 = vpack.c.b16 %v1199, %v1195
    %v1616 = vpack.c.b16 %v1204, %v1200
    %v1617 = vpack.c.b16 %v1205, %v1201
    %v1618 = vpack.c.b16 %v1206, %v1202
    %v1619 = vpack.c.b16 %v1207, %v1203
    %v1620 = vpack.c.b16 %v1212, %v1208
    %v1621 = vpack.c.b16 %v1213, %v1209
    %v1622 = vpack.c.b16 %v1214, %v1210
    %v1623 = vpack.c.b16 %v1215, %v1211
    %v1624 = vpack.c.b16 %v1220, %v1216
    %v1625 = vpack.c.b16 %v1221, %v1217
    %v1626 = vpack.c.b16 %v1222, %v1218
    %v1627 = vpack.c.b16 %v1223, %v1219
    %v1628 = vpack.c.b16 %v1228, %v1224
    %v1629 = vpack.c.b16 %v1229, %v1225
    %v1630 = vpack.c.b16 %v1230, %v1226
    %v1631 = vpack.c.b16 %v1231, %v1227
    %v1632 = vpack.c.b16 %v1236, %v1232
    %v1633 = vpack.c.b16 %v1237, %v1233
    %v1634 = vpack.c.b16 %v1238, %v1234
    %v1635 = vpack.c.b16 %v1239, %v1235
    %v1636 = vpack.c.b16 %v1244, %v1240
    %v1637 = vpack.c.b16 %v1245, %v1241
    %v1638 = vpack.c.b16 %v1246, %v1242
    %v1639 = vpack.c.b16 %v1247, %v1243
    %v1640 = vpack.c.b16 %v1252, %v1248
    %v1641 = vpack.c.b16 %v1253, %v1249
    %v1642 = vpack.c.b16 %v1254, %v1250
    %v1643 = vpack.c.b16 %v1255, %v1251
    %v1644 = vpack.c.b16 %v1260, %v1256
    %v1645 = vpack.c.b16 %v1261, %v1257
    %v1646 = vpack.c.b16 %v1262, %v1258
    %v1647 = vpack.c.b16 %v1263, %v1259
    %v1648 = vpack.c.b16 %v1268, %v1264
    %v1649 = vpack.c.b16 %v1269, %v1265
    %v1650 = vpack.c.b16 %v1270, %v1266
    %v1651 = vpack.c.b16 %v1271, %v1267
    %v1652 = vpack.c.b16 %v1276, %v1272
    %v1653 = vpack.c.b16 %v1277, %v1273
    %v1654 = vpack.c.b16 %v1278, %v1274
    %v1655 = vpack.c.b16 %v1279, %v1275
    %v1656 = vpack.c.b16 %v1284, %v1280
    %v1657 = vpack.c.b16 %v1285, %v1281
    %v1658 = vpack.c.b16 %v1286, %v1282
    %v1659 = vpack.c.b16 %v1287, %v1283
    %v1660 = vpack.c.b16 %v1292, %v1288
    %v1661 = vpack.c.b16 %v1293, %v1289
    %v1662 = vpack.c.b16 %v1294, %v1290
    %v1663 = vpack.c.b16 %v1295, %v1291
    %v1664 = vpack.c.b16 %v1300, %v1296
    %v1665 = vpack.c.b16 %v1301, %v1297
    %v1666 = vpack.c.b16 %v1302, %v1298
    %v1667 = vpack.c.b16 %v1303, %v1299
    %v1668 = vpack.c.b16 %v1308, %v1304
    %v1669 = vpack.c.b16 %v1309, %v1305
    %v1670 = vpack.c.b16 %v1310, %v1306
    %v1671 = vpack.c.b16 %v1311, %v1307
    %v1672 = vpack.c.b16 %v1316, %v1312
    %v1673 = vpack.c.b16 %v1317, %v1313
    %v1674 = vpack.c.b16 %v1318, %v1314
    %v1675 = vpack.c.b16 %v1319, %v1315
    %v1676 = vpack.c.b16 %v1324, %v1320
    %v1677 = vpack.c.b16 %v1325, %v1321
    %v1678 = vpack.c.b16 %v1326, %v1322
    %v1679 = vpack.c.b16 %v1327, %v1323
    %v1680 = vpack.c.b16 %v1332, %v1328
    %v1681 = vpack.c.b16 %v1333, %v1329
    %v1682 = vpack.c.b16 %v1334, %v1330
    %v1683 = vpack.c.b16 %v1335, %v1331
    %v1684 = vpack.c.b16 %v1340, %v1336
    %v1685 = vpack.c.b16 %v1341, %v1337
    %v1686 = vpack.c.b16 %v1342, %v1338
    %v1687 = vpack.c.b16 %v1343, %v1339
    %v1688 = vpack.c.b16 %v1348, %v1344
    %v1689 = vpack.c.b16 %v1349, %v1345
    %v1690 = vpack.c.b16 %v1350, %v1346
    %v1691 = vpack.c.b16 %v1351, %v1347
    %v1692 = vpack.c.b16 %v1356, %v1352
    %v1693 = vpack.c.b16 %v1357, %v1353
    %v1694 = vpack.c.b16 %v1358, %v1354
    %v1695 = vpack.c.b16 %v1359, %v1355
    %v1696 = vpack.c.b16 %v1364, %v1360
    %v1697 = vpack.c.b16 %v1365, %v1361
    %v1698 = vpack.c.b16 %v1366, %v1362
    %v1699 = vpack.c.b16 %v1367, %v1363
    %v1700 = vpack.c.b16 %v1372, %v1368
    %v1701 = vpack.c.b16 %v1373, %v1369
    %v1702 = vpack.c.b16 %v1374, %v1370
    %v1703 = vpack.c.b16 %v1375, %v1371
    %v1704 = vpack.c.b16 %v1380, %v1376
    %v1705 = vpack.c.b16 %v1381, %v1377
    %v1706 = vpack.c.b16 %v1382, %v1378
    %v1707 = vpack.c.b16 %v1383, %v1379
    %v1708 = vpack.c.b16 %v1388, %v1384
    %v1709 = vpack.c.b16 %v1389, %v1385
    %v1710 = vpack.c.b16 %v1390, %v1386
    %v1711 = vpack.c.b16 %v1391, %v1387
    %v1712 = vpack.c.b16 %v1396, %v1392
    %v1713 = vpack.c.b16 %v1397, %v1393
    %v1714 = vpack.c.b16 %v1398, %v1394
    %v1715 = vpack.c.b16 %v1399, %v1395
    %v1716 = vpack.c.b16 %v1404, %v1400
    %v1717 = vpack.c.b16 %v1405, %v1401
    %v1718 = vpack.c.b16 %v1406, %v1402
    %v1719 = vpack.c.b16 %v1407, %v1403
    %v1720 = vpack.c.b16 %v1412, %v1408
    %v1721 = vpack.c.b16 %v1413, %v1409
    %v1722 = vpack.c.b16 %v1414, %v1410
    %v1723 = vpack.c.b16 %v1415, %v1411
    %v1724 = vpack.c.b16 %v1420, %v1416
    %v1725 = vpack.c.b16 %v1421, %v1417
    %v1726 = vpack.c.b16 %v1422, %v1418
    %v1727 = vpack.c.b16 %v1423, %v1419
    %v1728 = vpack.c.b16 %v1428, %v1424
    %v1729 = vpack.c.b16 %v1429, %v1425
    %v1730 = vpack.c.b16 %v1430, %v1426
    %v1731 = vpack.c.b16 %v1431, %v1427
    %v1732 = vpack.c.b16 %v1436, %v1432
    %v1733 = vpack.c.b16 %v1437, %v1433
    %v1734 = vpack.c.b16 %v1438, %v1434
    %v1735 = vpack.c.b16 %v1439, %v1435
    %v1736 = vpack.c.b16 %v1444, %v1440
    %v1737 = vpack.c.b16 %v1445, %v1441
    %v1738 = vpack.c.b16 %v1446, %v1442
    %v1739 = vpack.c.b16 %v1447, %v1443
    %v1740 = vpack.c.b16 %v1452, %v1448
    %v1741 = vpack.c.b16 %v1453, %v1449
    %v1742 = vpack.c.b16 %v1454, %v1450
    %v1743 = vpack.c.b16 %v1455, %v1451
    %v1744 = vpack.c.b16 %v1460, %v1456
    %v1745 = vpack.c.b16 %v1461, %v1457
    %v1746 = vpack.c.b16 %v1462, %v1458
    %v1747 = vpack.c.b16 %v1463, %v1459
    %v1748 = vpack.c.b16 %v1468, %v1464
    %v1749 = vpack.c.b16 %v1469, %v1465
    %v1750 = vpack.c.b16 %v1470, %v1466
    %v1751 = vpack.c.b16 %v1471, %v1467
    %v1752 = vpack.c.b16 %v1476, %v1472
    %v1753 = vpack.c.b16 %v1477, %v1473
    %v1754 = vpack.c.b16 %v1478, %v1474
    %v1755 = vpack.c.b16 %v1479, %v1475
    %v1756 = vpack.c.b16 %v1484, %v1480
    %v1757 = vpack.c.b16 %v1485, %v1481
    %v1758 = vpack.c.b16 %v1486, %v1482
    %v1759 = vpack.c.b16 %v1487, %v1483
    %v1760 = vpack.c.b16 %v1492, %v1488
    %v1761 = vpack.c.b16 %v1493, %v1489
    %v1762 = vpack.c.b16 %v1494, %v1490
    %v1763 = vpack.c.b16 %v1495, %v1491
    %v1764 = vpack.c.b16 %v1500, %v1496
    %v1765 = vpack.c.b16 %v1501, %v1497
    %v1766 = vpack.c.b16 %v1502, %v1498
    %v1767 = vpack.c.b16 %v1503, %v1499
    %v1768 = vpack.c.b16 %v1508, %v1504
    %v1769 = vpack.c.b16 %v1509, %v1505
    %v1770 = vpack.c.b16 %v1510, %v1506
    %v1771 = vpack.c.b16 %v1511, %v1507
    %v1772 = vpack.c.b16 %v1516, %v1512
    %v1773 = vpack.c.b16 %v1517, %v1513
    %v1774 = vpack.c.b16 %v1518, %v1514
    %v1775 = vpack.c.b16 %v1519, %v1515
    %2032 = vmatprep.subr.bf16.mxu0 %v1521
    %2033 = vmatpush1.bf16.msra.mxu0 %v1520
    %2034 = vmatprep.subr.bf16.mxu0 %v1525
    %2035 = vmatpush1.bf16.msra.mxu0 %v1524
    %2036 = vmatprep.subr.bf16.mxu0 %v1529
    %2037 = vmatpush1.bf16.msra.mxu0 %v1528
    %2038 = vmatprep.subr.bf16.mxu0 %v1533
    %2039 = vmatpush1.bf16.msra.mxu0 %v1532
    %2040 = vmatprep.subr.bf16.mxu0 %v1537
    %2041 = vmatpush1.bf16.msra.mxu0 %v1536
    %2042 = vmatprep.subr.bf16.mxu0 %v1541
    %2043 = vmatpush1.bf16.msra.mxu0 %v1540
    %2044 = vmatprep.subr.bf16.mxu0 %v1545
    %2045 = vmatpush1.bf16.msra.mxu0 %v1544
    %2046 = vmatprep.subr.bf16.mxu0 %v1549
    %2047 = vmatpush1.bf16.msra.mxu0 %v1548
    %2048 = vmatprep.subr.bf16.mxu0 %v1553
    %2049 = vmatpush1.bf16.msra.mxu0 %v1552
    %2050 = vmatprep.subr.bf16.mxu0 %v1557
    %2051 = vmatpush1.bf16.msra.mxu0 %v1556
    %2052 = vmatprep.subr.bf16.mxu0 %v1561
    %2053 = vmatpush1.bf16.msra.mxu0 %v1560
    %2054 = vmatprep.subr.bf16.mxu0 %v1565
    %2055 = vmatpush1.bf16.msra.mxu0 %v1564
    %2056 = vmatprep.subr.bf16.mxu0 %v1569
    %2057 = vmatpush1.bf16.msra.mxu0 %v1568
    %2058 = vmatprep.subr.bf16.mxu0 %v1573
    %2059 = vmatpush1.bf16.msra.mxu0 %v1572
    %2060 = vmatprep.subr.bf16.mxu0 %v1577
    %2061 = vmatpush1.bf16.msra.mxu0 %v1576
    %2062 = vmatprep.subr.bf16.mxu0 %v1581
    %2063 = vmatpush1.bf16.msra.mxu0 %v1580
    %2064 = vmatprep.mubr.bf16.mxu0 %v467
    %2065 = vmatmul.mubr.bf16.gmra.mrb[0].mxu0 %v466
    %v2066 = vpop.f32.mrb[0].mxu0
    %v2067 = vadd.f32 %v735, %v2066
    %v2068 = vpop.f32.mrb[0].mxu0
    %v2069 = vadd.f32 %v739, %v2068
    %v2070 = vpop.f32.mrb[0].mxu0
    %v2071 = vadd.f32 %v735, %v2070
    %v2072 = vpop.f32.mrb[0].mxu0
    %v2073 = vadd.f32 %v739, %v2072
    %2074 = vdwg.mxu0
    %2075 = vmatprep.subr.bf16.mxu0 %v1585
    %2076 = vmatpush1.bf16.msra.mxu0 %v1584
    %2077 = vmatprep.subr.bf16.mxu0 %v1589
    %2078 = vmatpush1.bf16.msra.mxu0 %v1588
    %2079 = vmatprep.subr.bf16.mxu0 %v1593
    %2080 = vmatpush1.bf16.msra.mxu0 %v1592
    %2081 = vmatprep.subr.bf16.mxu0 %v1597
    %2082 = vmatpush1.bf16.msra.mxu0 %v1596
    %2083 = vmatprep.subr.bf16.mxu0 %v1601
    %2084 = vmatpush1.bf16.msra.mxu0 %v1600
    %2085 = vmatprep.subr.bf16.mxu0 %v1605
    %2086 = vmatpush1.bf16.msra.mxu0 %v1604
    %2087 = vmatprep.subr.bf16.mxu0 %v1609
    %2088 = vmatpush1.bf16.msra.mxu0 %v1608
    %2089 = vmatprep.subr.bf16.mxu0 %v1613
    %2090 = vmatpush1.bf16.msra.mxu0 %v1612
    %2091 = vmatprep.subr.bf16.mxu0 %v1617
    %2092 = vmatpush1.bf16.msra.mxu0 %v1616
    %2093 = vmatprep.subr.bf16.mxu0 %v1621
    %2094 = vmatpush1.bf16.msra.mxu0 %v1620
    %2095 = vmatprep.subr.bf16.mxu0 %v1625
    %2096 = vmatpush1.bf16.msra.mxu0 %v1624
    %2097 = vmatprep.subr.bf16.mxu0 %v1629
    %2098 = vmatpush1.bf16.msra.mxu0 %v1628
    %2099 = vmatprep.subr.bf16.mxu0 %v1633
    %2100 = vmatpush1.bf16.msra.mxu0 %v1632
    %2101 = vmatprep.subr.bf16.mxu0 %v1637
    %2102 = vmatpush1.bf16.msra.mxu0 %v1636
    %2103 = vmatprep.subr.bf16.mxu0 %v1641
    %2104 = vmatpush1.bf16.msra.mxu0 %v1640
    %2105 = vmatprep.subr.bf16.mxu0 %v1645
    %2106 = vmatpush1.bf16.msra.mxu0 %v1644
    %2107 = vmatprep.mubr.bf16.mxu0 %v469
    %2108 = vmatmul.mubr.bf16.gmra.mrb[0].mxu0 %v468
    %v2109 = vpop.f32.mrb[0].mxu0
    %v2110 = vadd.f32 %v2067, %v2109
    %v2111 = vpop.f32.mrb[0].mxu0
    %v2112 = vadd.f32 %v2069, %v2111
    %v2113 = vpop.f32.mrb[0].mxu0
    %v2114 = vadd.f32 %v2071, %v2113
    %v2115 = vpop.f32.mrb[0].mxu0
    %v2116 = vadd.f32 %v2073, %v2115
    %2117 = vdwg.mxu0
    %2118 = vmatprep.subr.bf16.mxu0 %v1649
    %2119 = vmatpush1.bf16.msra.mxu0 %v1648
    %2120 = vmatprep.subr.bf16.mxu0 %v1653
    %2121 = vmatpush1.bf16.msra.mxu0 %v1652
    %2122 = vmatprep.subr.bf16.mxu0 %v1657
    %2123 = vmatpush1.bf16.msra.mxu0 %v1656
    %2124 = vmatprep.subr.bf16.mxu0 %v1661
    %2125 = vmatpush1.bf16.msra.mxu0 %v1660
    %2126 = vmatprep.subr.bf16.mxu0 %v1665
    %2127 = vmatpush1.bf16.msra.mxu0 %v1664
    %2128 = vmatprep.subr.bf16.mxu0 %v1669
    %2129 = vmatpush1.bf16.msra.mxu0 %v1668
    %2130 = vmatprep.subr.bf16.mxu0 %v1673
    %2131 = vmatpush1.bf16.msra.mxu0 %v1672
    %2132 = vmatprep.subr.bf16.mxu0 %v1677
    %2133 = vmatpush1.bf16.msra.mxu0 %v1676
    %2134 = vmatprep.subr.bf16.mxu0 %v1681
    %2135 = vmatpush1.bf16.msra.mxu0 %v1680
    %2136 = vmatprep.subr.bf16.mxu0 %v1685
    %2137 = vmatpush1.bf16.msra.mxu0 %v1684
    %2138 = vmatprep.subr.bf16.mxu0 %v1689
    %2139 = vmatpush1.bf16.msra.mxu0 %v1688
    %2140 = vmatprep.subr.bf16.mxu0 %v1693
    %2141 = vmatpush1.bf16.msra.mxu0 %v1692
    %2142 = vmatprep.subr.bf16.mxu0 %v1697
    %2143 = vmatpush1.bf16.msra.mxu0 %v1696
    %2144 = vmatprep.subr.bf16.mxu0 %v1701
    %2145 = vmatpush1.bf16.msra.mxu0 %v1700
    %2146 = vmatprep.subr.bf16.mxu0 %v1705
    %2147 = vmatpush1.bf16.msra.mxu0 %v1704
    %2148 = vmatprep.subr.bf16.mxu0 %v1709
    %2149 = vmatpush1.bf16.msra.mxu0 %v1708
    %2150 = vmatprep.mubr.bf16.mxu0 %v471
    %2151 = vmatmul.mubr.bf16.gmra.mrb[0].mxu0 %v470
    %v2152 = vpop.f32.mrb[0].mxu0
    %v2153 = vadd.f32 %v2110, %v2152
    %v2154 = vpop.f32.mrb[0].mxu0
    %v2155 = vadd.f32 %v2112, %v2154
    %v2156 = vpop.f32.mrb[0].mxu0
    %v2157 = vadd.f32 %v2114, %v2156
    %v2158 = vpop.f32.mrb[0].mxu0
    %v2159 = vadd.f32 %v2116, %v2158
    %2160 = vdwg.mxu0
    %2161 = vmatprep.subr.bf16.mxu0 %v1713
    %2162 = vmatpush1.bf16.msra.mxu0 %v1712
    %2163 = vmatprep.subr.bf16.mxu0 %v1717
    %2164 = vmatpush1.bf16.msra.mxu0 %v1716
    %2165 = vmatprep.subr.bf16.mxu0 %v1721
    %2166 = vmatpush1.bf16.msra.mxu0 %v1720
    %2167 = vmatprep.subr.bf16.mxu0 %v1725
    %2168 = vmatpush1.bf16.msra.mxu0 %v1724
    %2169 = vmatprep.subr.bf16.mxu0 %v1729
    %2170 = vmatpush1.bf16.msra.mxu0 %v1728
    %2171 = vmatprep.subr.bf16.mxu0 %v1733
    %2172 = vmatpush1.bf16.msra.mxu0 %v1732
    %2173 = vmatprep.subr.bf16.mxu0 %v1737
    %2174 = vmatpush1.bf16.msra.mxu0 %v1736
    %2175 = vmatprep.subr.bf16.mxu0 %v1741
    %2176 = vmatpush1.bf16.msra.mxu0 %v1740
    %2177 = vmatprep.subr.bf16.mxu0 %v1745
    %2178 = vmatpush1.bf16.msra.mxu0 %v1744
    %2179 = vmatprep.subr.bf16.mxu0 %v1749
    %2180 = vmatpush1.bf16.msra.mxu0 %v1748
    %2181 = vmatprep.subr.bf16.mxu0 %v1753
    %2182 = vmatpush1.bf16.msra.mxu0 %v1752
    %2183 = vmatprep.subr.bf16.mxu0 %v1757
    %2184 = vmatpush1.bf16.msra.mxu0 %v1756
    %2185 = vmatprep.subr.bf16.mxu0 %v1761
    %2186 = vmatpush1.bf16.msra.mxu0 %v1760
    %2187 = vmatprep.subr.bf16.mxu0 %v1765
    %2188 = vmatpush1.bf16.msra.mxu0 %v1764
    %2189 = vmatprep.subr.bf16.mxu0 %v1769
    %2190 = vmatpush1.bf16.msra.mxu0 %v1768
    %2191 = vmatprep.subr.bf16.mxu0 %v1773
    %2192 = vmatpush1.bf16.msra.mxu0 %v1772
    %2193 = vmatprep.mubr.bf16.mxu0 %v473
    %2194 = vmatmul.mubr.bf16.gmra.mrb[0].mxu0 %v472
    %v2195 = vpop.f32.mrb[0].mxu0
    %v2196 = vadd.f32 %v2153, %v2195
    %v2197 = vpop.f32.mrb[0].mxu0
    %v2198 = vadd.f32 %v2155, %v2197
    %v2199 = vpop.f32.mrb[0].mxu0
    %v2200 = vadd.f32 %v2157, %v2199
    %v2201 = vpop.f32.mrb[0].mxu0
    %v2202 = vadd.f32 %v2159, %v2201
    %2203 = vdwg.mxu0
    %2204 = vmatprep.subr.bf16.mxu0 %v1523
    %2205 = vmatpush1.bf16.msra.mxu0 %v1522
    %2206 = vmatprep.subr.bf16.mxu0 %v1527
    %2207 = vmatpush1.bf16.msra.mxu0 %v1526
    %2208 = vmatprep.subr.bf16.mxu0 %v1531
    %2209 = vmatpush1.bf16.msra.mxu0 %v1530
    %2210 = vmatprep.subr.bf16.mxu0 %v1535
    %2211 = vmatpush1.bf16.msra.mxu0 %v1534
    %2212 = vmatprep.subr.bf16.mxu0 %v1539
    %2213 = vmatpush1.bf16.msra.mxu0 %v1538
    %2214 = vmatprep.subr.bf16.mxu0 %v1543
    %2215 = vmatpush1.bf16.msra.mxu0 %v1542
    %2216 = vmatprep.subr.bf16.mxu0 %v1547
    %2217 = vmatpush1.bf16.msra.mxu0 %v1546
    %2218 = vmatprep.subr.bf16.mxu0 %v1551
    %2219 = vmatpush1.bf16.msra.mxu0 %v1550
    %2220 = vmatprep.subr.bf16.mxu0 %v1555
    %2221 = vmatpush1.bf16.msra.mxu0 %v1554
    %2222 = vmatprep.subr.bf16.mxu0 %v1559
    %2223 = vmatpush1.bf16.msra.mxu0 %v1558
    %2224 = vmatprep.subr.bf16.mxu0 %v1563
    %2225 = vmatpush1.bf16.msra.mxu0 %v1562
    %2226 = vmatprep.subr.bf16.mxu0 %v1567
    %2227 = vmatpush1.bf16.msra.mxu0 %v1566
    %2228 = vmatprep.subr.bf16.mxu0 %v1571
    %2229 = vmatpush1.bf16.msra.mxu0 %v1570
    %2230 = vmatprep.subr.bf16.mxu0 %v1575
    %2231 = vmatpush1.bf16.msra.mxu0 %v1574
    %2232 = vmatprep.subr.bf16.mxu0 %v1579
    %2233 = vmatpush1.bf16.msra.mxu0 %v1578
    %2234 = vmatprep.subr.bf16.mxu0 %v1583
    %2235 = vmatpush1.bf16.msra.mxu0 %v1582
    %2236 = vmatprep.mubr.bf16.mxu0 %v467
    %2237 = vmatmul.mubr.bf16.gmra.mrb[0].mxu0 %v466
    %v2238 = vpop.f32.mrb[0].mxu0
    %v2239 = vadd.f32 %v743, %v2238
    %v2240 = vpop.f32.mrb[0].mxu0
    %v2241 = vadd.f32 %v747, %v2240
    %v2242 = vpop.f32.mrb[0].mxu0
    %v2243 = vadd.f32 %v743, %v2242
    %v2244 = vpop.f32.mrb[0].mxu0
    %v2245 = vadd.f32 %v747, %v2244
    %2246 = vdwg.mxu0
    %2247 = vmatprep.subr.bf16.mxu0 %v1587
    %2248 = vmatpush1.bf16.msra.mxu0 %v1586
    %2249 = vmatprep.subr.bf16.mxu0 %v1591
    %2250 = vmatpush1.bf16.msra.mxu0 %v1590
    %2251 = vmatprep.subr.bf16.mxu0 %v1595
    %2252 = vmatpush1.bf16.msra.mxu0 %v1594
    %2253 = vmatprep.subr.bf16.mxu0 %v1599
    %2254 = vmatpush1.bf16.msra.mxu0 %v1598
    %2255 = vmatprep.subr.bf16.mxu0 %v1603
    %2256 = vmatpush1.bf16.msra.mxu0 %v1602
    %2257 = vmatprep.subr.bf16.mxu0 %v1607
    %2258 = vmatpush1.bf16.msra.mxu0 %v1606
    %2259 = vmatprep.subr.bf16.mxu0 %v1611
    %2260 = vmatpush1.bf16.msra.mxu0 %v1610
    %2261 = vmatprep.subr.bf16.mxu0 %v1615
    %2262 = vmatpush1.bf16.msra.mxu0 %v1614
    %2263 = vmatprep.subr.bf16.mxu0 %v1619
    %2264 = vmatpush1.bf16.msra.mxu0 %v1618
    %2265 = vmatprep.subr.bf16.mxu0 %v1623
    %2266 = vmatpush1.bf16.msra.mxu0 %v1622
    %2267 = vmatprep.subr.bf16.mxu0 %v1627
    %2268 = vmatpush1.bf16.msra.mxu0 %v1626
    %2269 = vmatprep.subr.bf16.mxu0 %v1631
    %2270 = vmatpush1.bf16.msra.mxu0 %v1630
    %2271 = vmatprep.subr.bf16.mxu0 %v1635
    %2272 = vmatpush1.bf16.msra.mxu0 %v1634
    %2273 = vmatprep.subr.bf16.mxu0 %v1639
    %2274 = vmatpush1.bf16.msra.mxu0 %v1638
    %2275 = vmatprep.subr.bf16.mxu0 %v1643
    %2276 = vmatpush1.bf16.msra.mxu0 %v1642
    %2277 = vmatprep.subr.bf16.mxu0 %v1647
    %2278 = vmatpush1.bf16.msra.mxu0 %v1646
    %2279 = vmatprep.mubr.bf16.mxu0 %v469
    %2280 = vmatmul.mubr.bf16.gmra.mrb[0].mxu0 %v468
    %v2281 = vpop.f32.mrb[0].mxu0
    %v2282 = vadd.f32 %v2239, %v2281
    %v2283 = vpop.f32.mrb[0].mxu0
    %v2284 = vadd.f32 %v2241, %v2283
    %v2285 = vpop.f32.mrb[0].mxu0
    %v2286 = vadd.f32 %v2243, %v2285
    %v2287 = vpop.f32.mrb[0].mxu0
    %v2288 = vadd.f32 %v2245, %v2287
    %2289 = vdwg.mxu0
    %2290 = vmatprep.subr.bf16.mxu0 %v1651
    %2291 = vmatpush1.bf16.msra.mxu0 %v1650
    %2292 = vmatprep.subr.bf16.mxu0 %v1655
    %2293 = vmatpush1.bf16.msra.mxu0 %v1654
    %2294 = vmatprep.subr.bf16.mxu0 %v1659
    %2295 = vmatpush1.bf16.msra.mxu0 %v1658
    %2296 = vmatprep.subr.bf16.mxu0 %v1663
    %2297 = vmatpush1.bf16.msra.mxu0 %v1662
    %2298 = vmatprep.subr.bf16.mxu0 %v1667
    %2299 = vmatpush1.bf16.msra.mxu0 %v1666
    %2300 = vmatprep.subr.bf16.mxu0 %v1671
    %2301 = vmatpush1.bf16.msra.mxu0 %v1670
    %2302 = vmatprep.subr.bf16.mxu0 %v1675
    %2303 = vmatpush1.bf16.msra.mxu0 %v1674
    %2304 = vmatprep.subr.bf16.mxu0 %v1679
    %2305 = vmatpush1.bf16.msra.mxu0 %v1678
    %2306 = vmatprep.subr.bf16.mxu0 %v1683
    %2307 = vmatpush1.bf16.msra.mxu0 %v1682
    %2308 = vmatprep.subr.bf16.mxu0 %v1687
    %2309 = vmatpush1.bf16.msra.mxu0 %v1686
    %2310 = vmatprep.subr.bf16.mxu0 %v1691
    %2311 = vmatpush1.bf16.msra.mxu0 %v1690
    %2312 = vmatprep.subr.bf16.mxu0 %v1695
    %2313 = vmatpush1.bf16.msra.mxu0 %v1694
    %2314 = vmatprep.subr.bf16.mxu0 %v1699
    %2315 = vmatpush1.bf16.msra.mxu0 %v1698
    %2316 = vmatprep.subr.bf16.mxu0 %v1703
    %2317 = vmatpush1.bf16.msra.mxu0 %v1702
    %2318 = vmatprep.subr.bf16.mxu0 %v1707
    %2319 = vmatpush1.bf16.msra.mxu0 %v1706
    %2320 = vmatprep.subr.bf16.mxu0 %v1711
    %2321 = vmatpush1.bf16.msra.mxu0 %v1710
    %2322 = vmatprep.mubr.bf16.mxu0 %v471
    %2323 = vmatmul.mubr.bf16.gmra.mrb[0].mxu0 %v470
    %v2324 = vpop.f32.mrb[0].mxu0
    %v2325 = vadd.f32 %v2282, %v2324
    %v2326 = vpop.f32.mrb[0].mxu0
    %v2327 = vadd.f32 %v2284, %v2326
    %v2328 = vpop.f32.mrb[0].mxu0
    %v2329 = vadd.f32 %v2286, %v2328
    %v2330 = vpop.f32.mrb[0].mxu0
    %v2331 = vadd.f32 %v2288, %v2330
    %2332 = vdwg.mxu0
    %2333 = vmatprep.subr.bf16.mxu0 %v1715
    %2334 = vmatpush1.bf16.msra.mxu0 %v1714
    %2335 = vmatprep.subr.bf16.mxu0 %v1719
    %2336 = vmatpush1.bf16.msra.mxu0 %v1718
    %2337 = vmatprep.subr.bf16.mxu0 %v1723
    %2338 = vmatpush1.bf16.msra.mxu0 %v1722
    %2339 = vmatprep.subr.bf16.mxu0 %v1727
    %2340 = vmatpush1.bf16.msra.mxu0 %v1726
    %2341 = vmatprep.subr.bf16.mxu0 %v1731
    %2342 = vmatpush1.bf16.msra.mxu0 %v1730
    %2343 = vmatprep.subr.bf16.mxu0 %v1735
    %2344 = vmatpush1.bf16.msra.mxu0 %v1734
    %2345 = vmatprep.subr.bf16.mxu0 %v1739
    %2346 = vmatpush1.bf16.msra.mxu0 %v1738
    %2347 = vmatprep.subr.bf16.mxu0 %v1743
    %2348 = vmatpush1.bf16.msra.mxu0 %v1742
    %2349 = vmatprep.subr.bf16.mxu0 %v1747
    %2350 = vmatpush1.bf16.msra.mxu0 %v1746
    %2351 = vmatprep.subr.bf16.mxu0 %v1751
    %2352 = vmatpush1.bf16.msra.mxu0 %v1750
    %2353 = vmatprep.subr.bf16.mxu0 %v1755
    %2354 = vmatpush1.bf16.msra.mxu0 %v1754
    %2355 = vmatprep.subr.bf16.mxu0 %v1759
    %2356 = vmatpush1.bf16.msra.mxu0 %v1758
    %2357 = vmatprep.subr.bf16.mxu0 %v1763
    %2358 = vmatpush1.bf16.msra.mxu0 %v1762
    %2359 = vmatprep.subr.bf16.mxu0 %v1767
    %2360 = vmatpush1.bf16.msra.mxu0 %v1766
    %2361 = vmatprep.subr.bf16.mxu0 %v1771
    %2362 = vmatpush1.bf16.msra.mxu0 %v1770
    %2363 = vmatprep.subr.bf16.mxu0 %v1775
    %2364 = vmatpush1.bf16.msra.mxu0 %v1774
    %2365 = vmatprep.mubr.bf16.mxu0 %v473
    %2366 = vmatmul.mubr.bf16.gmra.mrb[0].mxu0 %v472
    %v2367 = vpop.f32.mrb[0].mxu0
    %v2368 = vadd.f32 %v2325, %v2367
    %v2369 = vpop.f32.mrb[0].mxu0
    %v2370 = vadd.f32 %v2327, %v2369
    %v2371 = vpop.f32.mrb[0].mxu0
    %v2372 = vadd.f32 %v2329, %v2371
    %v2373 = vpop.f32.mrb[0].mxu0
    %v2374 = vadd.f32 %v2331, %v2373
    %2375 = vdwg.mxu0
    %v2376 = vmax.f32 %v2196, 0.0
    %v2377 = vmax.f32 %v2198, 0.0
    %v2378 = vmax.f32 %v2368, 0.0
    %v2379 = vmax.f32 %v2370, 0.0
    %v2380 = vmax.f32 %v2200, 0.0
    %v2381 = vmax.f32 %v2202, 0.0
    %v2382 = vmax.f32 %v2372, 0.0
    %v2383 = vmax.f32 %v2374, 0.0
    %v2384 = vpack.c.bf16 %v2380, %v2376
    %v2385 = vpack.c.bf16 %v2381, %v2377
    %v2386 = vpack.c.bf16 %v2382, %v2378
    %v2387 = vpack.c.bf16 %v2383, %v2379
    %v2388 = vld [vmem:[#allocation10] sm:$0xff]
    %v2389 = vld [vmem:[#allocation10 + $0x8] sm:$0xff]
    %v2390 = vld [vmem:[#allocation10 + $0x10] sm:$0xff]
    %v2391 = vld [vmem:[#allocation10 + $0x18] sm:$0xff]
    %v2392 = vld [vmem:[#allocation10 + $0x20] sm:$0xff]
    %v2393 = vld [vmem:[#allocation10 + $0x28] sm:$0xff]
    %v2394 = vld [vmem:[#allocation10 + $0x30] sm:$0xff]
    %v2395 = vld [vmem:[#allocation10 + $0x38] sm:$0xff]
    %v2396 = vld [vmem:[#allocation10 + $0x40] sm:$0xff]
    %v2397 = vld [vmem:[#allocation10 + $0x48] sm:$0xff]
    %v2398 = vld [vmem:[#allocation10 + $0x50] sm:$0xff]
    %v2399 = vld [vmem:[#allocation10 + $0x58] sm:$0xff]
    %v2400 = vld [vmem:[#allocation10 + $0x60] sm:$0xff]
    %v2401 = vld [vmem:[#allocation10 + $0x68] sm:$0xff]
    %v2402 = vld [vmem:[#allocation10 + $0x70] sm:$0xff]
    %v2403 = vld [vmem:[#allocation10 + $0x78] sm:$0xff]
    %v2404 = vld [vmem:[#allocation10 + $0x80] sm:$0xff]
    %v2405 = vld [vmem:[#allocation10 + $0x88] sm:$0xff]
    %v2406 = vld [vmem:[#allocation10 + $0x90] sm:$0xff]
    %v2407 = vld [vmem:[#allocation10 + $0x98] sm:$0xff]
    %v2408 = vld [vmem:[#allocation10 + $0xa0] sm:$0xff]
    %v2409 = vld [vmem:[#allocation10 + $0xa8] sm:$0xff]
    %v2410 = vld [vmem:[#allocation10 + $0xb0] sm:$0xff]
    %v2411 = vld [vmem:[#allocation10 + $0xb8] sm:$0xff]
    %v2412 = vld [vmem:[#allocation10 + $0xc0] sm:$0xff]
    %v2413 = vld [vmem:[#allocation10 + $0xc8] sm:$0xff]
    %v2414 = vld [vmem:[#allocation10 + $0xd0] sm:$0xff]
    %v2415 = vld [vmem:[#allocation10 + $0xd8] sm:$0xff]
    %v2416 = vld [vmem:[#allocation10 + $0xe0] sm:$0xff]
    %v2417 = vld [vmem:[#allocation10 + $0xe8] sm:$0xff]
    %v2418 = vld [vmem:[#allocation10 + $0xf0] sm:$0xff]
    %v2419 = vld [vmem:[#allocation10 + $0xf8] sm:$0xff]
    %v2420 = vld [vmem:[#allocation10 + $0x100] sm:$0xff]
    %v2421 = vld [vmem:[#allocation10 + $0x108] sm:$0xff]
    %v2422 = vld [vmem:[#allocation10 + $0x110] sm:$0xff]
    %v2423 = vld [vmem:[#allocation10 + $0x118] sm:$0xff]
    %v2424 = vld [vmem:[#allocation10 + $0x120] sm:$0xff]
    %v2425 = vld [vmem:[#allocation10 + $0x128] sm:$0xff]
    %v2426 = vld [vmem:[#allocation10 + $0x130] sm:$0xff]
    %v2427 = vld [vmem:[#allocation10 + $0x138] sm:$0xff]
    %v2428 = vld [vmem:[#allocation10 + $0x140] sm:$0xff]
    %v2429 = vld [vmem:[#allocation10 + $0x148] sm:$0xff]
    %v2430 = vld [vmem:[#allocation10 + $0x150] sm:$0xff]
    %v2431 = vld [vmem:[#allocation10 + $0x158] sm:$0xff]
    %v2432 = vld [vmem:[#allocation10 + $0x160] sm:$0xff]
    %v2433 = vld [vmem:[#allocation10 + $0x168] sm:$0xff]
    %v2434 = vld [vmem:[#allocation10 + $0x170] sm:$0xff]
    %v2435 = vld [vmem:[#allocation10 + $0x178] sm:$0xff]
    %v2436 = vld [vmem:[#allocation10 + $0x180] sm:$0xff]
    %v2437 = vld [vmem:[#allocation10 + $0x188] sm:$0xff]
    %v2438 = vld [vmem:[#allocation10 + $0x190] sm:$0xff]
    %v2439 = vld [vmem:[#allocation10 + $0x198] sm:$0xff]
    %v2440 = vld [vmem:[#allocation10 + $0x1a0] sm:$0xff]
    %v2441 = vld [vmem:[#allocation10 + $0x1a8] sm:$0xff]
    %v2442 = vld [vmem:[#allocation10 + $0x1b0] sm:$0xff]
    %v2443 = vld [vmem:[#allocation10 + $0x1b8] sm:$0xff]
    %v2444 = vld [vmem:[#allocation10 + $0x1c0] sm:$0xff]
    %v2445 = vld [vmem:[#allocation10 + $0x1c8] sm:$0xff]
    %v2446 = vld [vmem:[#allocation10 + $0x1d0] sm:$0xff]
    %v2447 = vld [vmem:[#allocation10 + $0x1d8] sm:$0xff]
    %v2448 = vld [vmem:[#allocation10 + $0x1e0] sm:$0xff]
    %v2449 = vld [vmem:[#allocation10 + $0x1e8] sm:$0xff]
    %v2450 = vld [vmem:[#allocation10 + $0x1f0] sm:$0xff]
    %v2451 = vld [vmem:[#allocation10 + $0x1f8] sm:$0xff]
    %v2452 = vld [vmem:[%s6] sm:$0x3]
    %v2454 = vlaneseq
    %v2455 = vshrl.u32 %v2454, 7
    %v2456 = vsub.s32 0, %v2455
    %v2457 = vrot.slane %v2452, %v2456
    %v2458 = vlaneseq
    %v2459 = vshrl.u32 %v2458, 7
    %v2460 = vsub.s32 1, %v2459
    %v2461 = vrot.slane %v2452, %v2460
    %v2528 = vunpack.c.l.b16 %v2388
    %v2529 = vunpack.c.h.b16 %v2388
    %v2530 = vunpack.c.l.b16 %v2389
    %v2531 = vunpack.c.h.b16 %v2389
    %v2532 = vunpack.c.l.b16 %v2390
    %v2533 = vunpack.c.h.b16 %v2390
    %v2534 = vunpack.c.l.b16 %v2391
    %v2535 = vunpack.c.h.b16 %v2391
    %v2536 = vunpack.c.l.b16 %v2392
    %v2537 = vunpack.c.h.b16 %v2392
    %v2538 = vunpack.c.l.b16 %v2393
    %v2539 = vunpack.c.h.b16 %v2393
    %v2540 = vunpack.c.l.b16 %v2394
    %v2541 = vunpack.c.h.b16 %v2394
    %v2542 = vunpack.c.l.b16 %v2395
    %v2543 = vunpack.c.h.b16 %v2395
    %v2544 = vunpack.c.l.b16 %v2396
    %v2545 = vunpack.c.h.b16 %v2396
    %v2546 = vunpack.c.l.b16 %v2397
    %v2547 = vunpack.c.h.b16 %v2397
    %v2548 = vunpack.c.l.b16 %v2398
    %v2549 = vunpack.c.h.b16 %v2398
    %v2550 = vunpack.c.l.b16 %v2399
    %v2551 = vunpack.c.h.b16 %v2399
    %v2552 = vunpack.c.l.b16 %v2400
    %v2553 = vunpack.c.h.b16 %v2400
    %v2554 = vunpack.c.l.b16 %v2401
    %v2555 = vunpack.c.h.b16 %v2401
    %v2556 = vunpack.c.l.b16 %v2402
    %v2557 = vunpack.c.h.b16 %v2402
    %v2558 = vunpack.c.l.b16 %v2403
    %v2559 = vunpack.c.h.b16 %v2403
    %v2560 = vunpack.c.l.b16 %v2404
    %v2561 = vunpack.c.h.b16 %v2404
    %v2562 = vunpack.c.l.b16 %v2405
    %v2563 = vunpack.c.h.b16 %v2405
    %v2564 = vunpack.c.l.b16 %v2406
    %v2565 = vunpack.c.h.b16 %v2406
    %v2566 = vunpack.c.l.b16 %v2407
    %v2567 = vunpack.c.h.b16 %v2407
    %v2568 = vunpack.c.l.b16 %v2408
    %v2569 = vunpack.c.h.b16 %v2408
    %v2570 = vunpack.c.l.b16 %v2409
    %v2571 = vunpack.c.h.b16 %v2409
    %v2572 = vunpack.c.l.b16 %v2410
    %v2573 = vunpack.c.h.b16 %v2410
    %v2574 = vunpack.c.l.b16 %v2411
    %v2575 = vunpack.c.h.b16 %v2411
    %v2576 = vunpack.c.l.b16 %v2412
    %v2577 = vunpack.c.h.b16 %v2412
    %v2578 = vunpack.c.l.b16 %v2413
    %v2579 = vunpack.c.h.b16 %v2413
    %v2580 = vunpack.c.l.b16 %v2414
    %v2581 = vunpack.c.h.b16 %v2414
    %v2582 = vunpack.c.l.b16 %v2415
    %v2583 = vunpack.c.h.b16 %v2415
    %v2584 = vunpack.c.l.b16 %v2416
    %v2585 = vunpack.c.h.b16 %v2416
    %v2586 = vunpack.c.l.b16 %v2417
    %v2587 = vunpack.c.h.b16 %v2417
    %v2588 = vunpack.c.l.b16 %v2418
    %v2589 = vunpack.c.h.b16 %v2418
    %v2590 = vunpack.c.l.b16 %v2419
    %v2591 = vunpack.c.h.b16 %v2419
    %v2592 = vunpack.c.l.b16 %v2420
    %v2593 = vunpack.c.h.b16 %v2420
    %v2594 = vunpack.c.l.b16 %v2421
    %v2595 = vunpack.c.h.b16 %v2421
    %v2596 = vunpack.c.l.b16 %v2422
    %v2597 = vunpack.c.h.b16 %v2422
    %v2598 = vunpack.c.l.b16 %v2423
    %v2599 = vunpack.c.h.b16 %v2423
    %v2600 = vunpack.c.l.b16 %v2424
    %v2601 = vunpack.c.h.b16 %v2424
    %v2602 = vunpack.c.l.b16 %v2425
    %v2603 = vunpack.c.h.b16 %v2425
    %v2604 = vunpack.c.l.b16 %v2426
    %v2605 = vunpack.c.h.b16 %v2426
    %v2606 = vunpack.c.l.b16 %v2427
    %v2607 = vunpack.c.h.b16 %v2427
    %v2608 = vunpack.c.l.b16 %v2428
    %v2609 = vunpack.c.h.b16 %v2428
    %v2610 = vunpack.c.l.b16 %v2429
    %v2611 = vunpack.c.h.b16 %v2429
    %v2612 = vunpack.c.l.b16 %v2430
    %v2613 = vunpack.c.h.b16 %v2430
    %v2614 = vunpack.c.l.b16 %v2431
    %v2615 = vunpack.c.h.b16 %v2431
    %v2616 = vunpack.c.l.b16 %v2432
    %v2617 = vunpack.c.h.b16 %v2432
    %v2618 = vunpack.c.l.b16 %v2433
    %v2619 = vunpack.c.h.b16 %v2433
    %v2620 = vunpack.c.l.b16 %v2434
    %v2621 = vunpack.c.h.b16 %v2434
    %v2622 = vunpack.c.l.b16 %v2435
    %v2623 = vunpack.c.h.b16 %v2435
    %v2624 = vunpack.c.l.b16 %v2436
    %v2625 = vunpack.c.h.b16 %v2436
    %v2626 = vunpack.c.l.b16 %v2437
    %v2627 = vunpack.c.h.b16 %v2437
    %v2628 = vunpack.c.l.b16 %v2438
    %v2629 = vunpack.c.h.b16 %v2438
    %v2630 = vunpack.c.l.b16 %v2439
    %v2631 = vunpack.c.h.b16 %v2439
    %v2632 = vunpack.c.l.b16 %v2440
    %v2633 = vunpack.c.h.b16 %v2440
    %v2634 = vunpack.c.l.b16 %v2441
    %v2635 = vunpack.c.h.b16 %v2441
    %v2636 = vunpack.c.l.b16 %v2442
    %v2637 = vunpack.c.h.b16 %v2442
    %v2638 = vunpack.c.l.b16 %v2443
    %v2639 = vunpack.c.h.b16 %v2443
    %v2640 = vunpack.c.l.b16 %v2444
    %v2641 = vunpack.c.h.b16 %v2444
    %v2642 = vunpack.c.l.b16 %v2445
    %v2643 = vunpack.c.h.b16 %v2445
    %v2644 = vunpack.c.l.b16 %v2446
    %v2645 = vunpack.c.h.b16 %v2446
    %v2646 = vunpack.c.l.b16 %v2447
    %v2647 = vunpack.c.h.b16 %v2447
    %v2648 = vunpack.c.l.b16 %v2448
    %v2649 = vunpack.c.h.b16 %v2448
    %v2650 = vunpack.c.l.b16 %v2449
    %v2651 = vunpack.c.h.b16 %v2449
    %v2652 = vunpack.c.l.b16 %v2450
    %v2653 = vunpack.c.h.b16 %v2450
    %v2654 = vunpack.c.l.b16 %v2451
    %v2655 = vunpack.c.h.b16 %v2451
    %v2656 = vpack.c.b16 %v2530, %v2528
    %v2657 = vpack.c.b16 %v2531, %v2529
    %v2658 = vpack.c.b16 %v2534, %v2532
    %v2659 = vpack.c.b16 %v2535, %v2533
    %v2660 = vpack.c.b16 %v2538, %v2536
    %v2661 = vpack.c.b16 %v2539, %v2537
    %v2662 = vpack.c.b16 %v2542, %v2540
    %v2663 = vpack.c.b16 %v2543, %v2541
    %v2664 = vpack.c.b16 %v2546, %v2544
    %v2665 = vpack.c.b16 %v2547, %v2545
    %v2666 = vpack.c.b16 %v2550, %v2548
    %v2667 = vpack.c.b16 %v2551, %v2549
    %v2668 = vpack.c.b16 %v2554, %v2552
    %v2669 = vpack.c.b16 %v2555, %v2553
    %v2670 = vpack.c.b16 %v2558, %v2556
    %v2671 = vpack.c.b16 %v2559, %v2557
    %v2672 = vpack.c.b16 %v2562, %v2560
    %v2673 = vpack.c.b16 %v2563, %v2561
    %v2674 = vpack.c.b16 %v2566, %v2564
    %v2675 = vpack.c.b16 %v2567, %v2565
    %v2676 = vpack.c.b16 %v2570, %v2568
    %v2677 = vpack.c.b16 %v2571, %v2569
    %v2678 = vpack.c.b16 %v2574, %v2572
    %v2679 = vpack.c.b16 %v2575, %v2573
    %v2680 = vpack.c.b16 %v2578, %v2576
    %v2681 = vpack.c.b16 %v2579, %v2577
    %v2682 = vpack.c.b16 %v2582, %v2580
    %v2683 = vpack.c.b16 %v2583, %v2581
    %v2684 = vpack.c.b16 %v2586, %v2584
    %v2685 = vpack.c.b16 %v2587, %v2585
    %v2686 = vpack.c.b16 %v2590, %v2588
    %v2687 = vpack.c.b16 %v2591, %v2589
    %v2688 = vpack.c.b16 %v2594, %v2592
    %v2689 = vpack.c.b16 %v2595, %v2593
    %v2690 = vpack.c.b16 %v2598, %v2596
    %v2691 = vpack.c.b16 %v2599, %v2597
    %v2692 = vpack.c.b16 %v2602, %v2600
    %v2693 = vpack.c.b16 %v2603, %v2601
    %v2694 = vpack.c.b16 %v2606, %v2604
    %v2695 = vpack.c.b16 %v2607, %v2605
    %v2696 = vpack.c.b16 %v2610, %v2608
    %v2697 = vpack.c.b16 %v2611, %v2609
    %v2698 = vpack.c.b16 %v2614, %v2612
    %v2699 = vpack.c.b16 %v2615, %v2613
    %v2700 = vpack.c.b16 %v2618, %v2616
    %v2701 = vpack.c.b16 %v2619, %v2617
    %v2702 = vpack.c.b16 %v2622, %v2620
    %v2703 = vpack.c.b16 %v2623, %v2621
    %v2704 = vpack.c.b16 %v2626, %v2624
    %v2705 = vpack.c.b16 %v2627, %v2625
    %v2706 = vpack.c.b16 %v2630, %v2628
    %v2707 = vpack.c.b16 %v2631, %v2629
    %v2708 = vpack.c.b16 %v2634, %v2632
    %v2709 = vpack.c.b16 %v2635, %v2633
    %v2710 = vpack.c.b16 %v2638, %v2636
    %v2711 = vpack.c.b16 %v2639, %v2637
    %v2712 = vpack.c.b16 %v2642, %v2640
    %v2713 = vpack.c.b16 %v2643, %v2641
    %v2714 = vpack.c.b16 %v2646, %v2644
    %v2715 = vpack.c.b16 %v2647, %v2645
    %v2716 = vpack.c.b16 %v2650, %v2648
    %v2717 = vpack.c.b16 %v2651, %v2649
    %v2718 = vpack.c.b16 %v2654, %v2652
    %v2719 = vpack.c.b16 %v2655, %v2653
    %2784 = vmatprep.subr.bf16.mxu0 %v2657
    %2785 = vmatpush1.bf16.msra.mxu0 %v2656
    %2786 = vmatprep.subr.bf16.mxu0 %v2659
    %2787 = vmatpush1.bf16.msra.mxu0 %v2658
    %2788 = vmatprep.subr.bf16.mxu0 %v2661
    %2789 = vmatpush1.bf16.msra.mxu0 %v2660
    %2790 = vmatprep.subr.bf16.mxu0 %v2663
    %2791 = vmatpush1.bf16.msra.mxu0 %v2662
    %2792 = vmatprep.subr.bf16.mxu0 %v2665
    %2793 = vmatpush1.bf16.msra.mxu0 %v2664
    %2794 = vmatprep.subr.bf16.mxu0 %v2667
    %2795 = vmatpush1.bf16.msra.mxu0 %v2666
    %2796 = vmatprep.subr.bf16.mxu0 %v2669
    %2797 = vmatpush1.bf16.msra.mxu0 %v2668
    %2798 = vmatprep.subr.bf16.mxu0 %v2671
    %2799 = vmatpush1.bf16.msra.mxu0 %v2670
    %2800 = vmatprep.subr.bf16.mxu0 %v2673
    %2801 = vmatpush1.bf16.msra.mxu0 %v2672
    %2802 = vmatprep.subr.bf16.mxu0 %v2675
    %2803 = vmatpush1.bf16.msra.mxu0 %v2674
    %2804 = vmatprep.subr.bf16.mxu0 %v2677
    %2805 = vmatpush1.bf16.msra.mxu0 %v2676
    %2806 = vmatprep.subr.bf16.mxu0 %v2679
    %2807 = vmatpush1.bf16.msra.mxu0 %v2678
    %2808 = vmatprep.subr.bf16.mxu0 %v2681
    %2809 = vmatpush1.bf16.msra.mxu0 %v2680
    %2810 = vmatprep.subr.bf16.mxu0 %v2683
    %2811 = vmatpush1.bf16.msra.mxu0 %v2682
    %2812 = vmatprep.subr.bf16.mxu0 %v2685
    %2813 = vmatpush1.bf16.msra.mxu0 %v2684
    %2814 = vmatprep.subr.bf16.mxu0 %v2687
    %2815 = vmatpush1.bf16.msra.mxu0 %v2686
    %2816 = vmatprep.mubr.bf16.mxu0 %v2385
    %2817 = vmatmul.mubr.bf16.gmra.mrb[0].mxu0 %v2384
    %v2818 = vpop.f32.mrb[0].mxu0
    %v2819 = vadd.f32 %v2457, %v2818
    %v2820 = vpop.f32.mrb[0].mxu0
    %v2821 = vadd.f32 %v2461, %v2820
    %v2822 = vpop.f32.mrb[0].mxu0
    %v2823 = vadd.f32 %v2457, %v2822
    %v2824 = vpop.f32.mrb[0].mxu0
    %v2825 = vadd.f32 %v2461, %v2824
    %2826 = vdwg.mxu0
    %2827 = vmatprep.subr.bf16.mxu0 %v2689
    %2828 = vmatpush1.bf16.msra.mxu0 %v2688
    %2829 = vmatprep.subr.bf16.mxu0 %v2691
    %2830 = vmatpush1.bf16.msra.mxu0 %v2690
    %2831 = vmatprep.subr.bf16.mxu0 %v2693
    %2832 = vmatpush1.bf16.msra.mxu0 %v2692
    %2833 = vmatprep.subr.bf16.mxu0 %v2695
    %2834 = vmatpush1.bf16.msra.mxu0 %v2694
    %2835 = vmatprep.subr.bf16.mxu0 %v2697
    %2836 = vmatpush1.bf16.msra.mxu0 %v2696
    %2837 = vmatprep.subr.bf16.mxu0 %v2699
    %2838 = vmatpush1.bf16.msra.mxu0 %v2698
    %2839 = vmatprep.subr.bf16.mxu0 %v2701
    %2840 = vmatpush1.bf16.msra.mxu0 %v2700
    %2841 = vmatprep.subr.bf16.mxu0 %v2703
    %2842 = vmatpush1.bf16.msra.mxu0 %v2702
    %2843 = vmatprep.subr.bf16.mxu0 %v2705
    %2844 = vmatpush1.bf16.msra.mxu0 %v2704
    %2845 = vmatprep.subr.bf16.mxu0 %v2707
    %2846 = vmatpush1.bf16.msra.mxu0 %v2706
    %2847 = vmatprep.subr.bf16.mxu0 %v2709
    %2848 = vmatpush1.bf16.msra.mxu0 %v2708
    %2849 = vmatprep.subr.bf16.mxu0 %v2711
    %2850 = vmatpush1.bf16.msra.mxu0 %v2710
    %2851 = vmatprep.subr.bf16.mxu0 %v2713
    %2852 = vmatpush1.bf16.msra.mxu0 %v2712
    %2853 = vmatprep.subr.bf16.mxu0 %v2715
    %2854 = vmatpush1.bf16.msra.mxu0 %v2714
    %2855 = vmatprep.subr.bf16.mxu0 %v2717
    %2856 = vmatpush1.bf16.msra.mxu0 %v2716
    %2857 = vmatprep.subr.bf16.mxu0 %v2719
    %2858 = vmatpush1.bf16.msra.mxu0 %v2718
    %2859 = vmatprep.mubr.bf16.mxu0 %v2387
    %2860 = vmatmul.mubr.bf16.gmra.mrb[0].mxu0 %v2386
    %v2861 = vpop.f32.mrb[0].mxu0
    %v2862 = vadd.f32 %v2819, %v2861
    %v2863 = vpop.f32.mrb[0].mxu0
    %v2864 = vadd.f32 %v2821, %v2863
    %v2865 = vpop.f32.mrb[0].mxu0
    %v2866 = vadd.f32 %v2823, %v2865
    %v2867 = vpop.f32.mrb[0].mxu0
    %v2868 = vadd.f32 %v2825, %v2867
    %2869 = vdwg.mxu0
    %v2870 = vmax.f32 %v2862, 0.0
    %v2871 = vmax.f32 %v2864, 0.0
    %v2872 = vmax.f32 %v2866, 0.0
    %v2873 = vmax.f32 %v2868, 0.0
    %v2874 = vpack.c.bf16 %v2872, %v2870
    %v2875 = vpack.c.bf16 %v2873, %v2871
    %v2876 = vld [vmem:[#allocation11] sm:$0xf]
    %v2877 = vld [vmem:[#allocation11 + $0x4] sm:$0xf]
    %v2878 = vld [vmem:[#allocation11 + $0x8] sm:$0xf]
    %v2879 = vld [vmem:[#allocation11 + $0xc] sm:$0xf]
    %v2880 = vld [vmem:[#allocation11 + $0x10] sm:$0xf]
    %v2881 = vld [vmem:[#allocation11 + $0x14] sm:$0xf]
    %v2882 = vld [vmem:[#allocation11 + $0x18] sm:$0xf]
    %v2883 = vld [vmem:[#allocation11 + $0x1c] sm:$0xf]
    %v2884 = vld [vmem:[#allocation11 + $0x20] sm:$0xf]
    %v2885 = vld [vmem:[#allocation11 + $0x24] sm:$0xf]
    %v2886 = vld [vmem:[#allocation11 + $0x28] sm:$0xf]
    %v2887 = vld [vmem:[#allocation11 + $0x2c] sm:$0xf]
    %v2888 = vld [vmem:[#allocation11 + $0x30] sm:$0xf]
    %v2889 = vld [vmem:[#allocation11 + $0x34] sm:$0xf]
    %v2890 = vld [vmem:[#allocation11 + $0x38] sm:$0xf]
    %v2891 = vld [vmem:[#allocation11 + $0x3c] sm:$0xf]
    %v2892 = vld [vmem:[#allocation11 + $0x40] sm:$0xf]
    %v2893 = vld [vmem:[#allocation11 + $0x44] sm:$0xf]
    %v2894 = vld [vmem:[#allocation11 + $0x48] sm:$0xf]
    %v2895 = vld [vmem:[#allocation11 + $0x4c] sm:$0xf]
    %v2896 = vld [vmem:[#allocation11 + $0x50] sm:$0xf]
    %v2897 = vld [vmem:[#allocation11 + $0x54] sm:$0xf]
    %v2898 = vld [vmem:[#allocation11 + $0x58] sm:$0xf]
    %v2899 = vld [vmem:[#allocation11 + $0x5c] sm:$0xf]
    %v2900 = vld [vmem:[#allocation11 + $0x60] sm:$0xf]
    %v2901 = vld [vmem:[#allocation11 + $0x64] sm:$0xf]
    %v2902 = vld [vmem:[#allocation11 + $0x68] sm:$0xf]
    %v2903 = vld [vmem:[#allocation11 + $0x6c] sm:$0xf]
    %v2904 = vld [vmem:[#allocation11 + $0x70] sm:$0xf]
    %v2905 = vld [vmem:[#allocation11 + $0x74] sm:$0xf]
    %v2906 = vld [vmem:[#allocation11 + $0x78] sm:$0xf]
    %v2907 = vld [vmem:[#allocation11 + $0x7c] sm:$0xf]
    %v2908 = vld [vmem:[%s8] sm:$0x1]
    %v2910 = vlaneseq
    %v2911 = vshrl.u32 %v2910, 7
    %v2912 = vsub.s32 0, %v2911
    %v2913 = vrot.slane %v2908, %v2912
    %v2947 = vunpack.c.l.b16 %v2876
    %v2948 = vunpack.c.l.b16 %v2877
    %v2949 = vunpack.c.l.b16 %v2878
    %v2950 = vunpack.c.l.b16 %v2879
    %v2951 = vunpack.c.l.b16 %v2880
    %v2952 = vunpack.c.l.b16 %v2881
    %v2953 = vunpack.c.l.b16 %v2882
    %v2954 = vunpack.c.l.b16 %v2883
    %v2955 = vunpack.c.l.b16 %v2884
    %v2956 = vunpack.c.l.b16 %v2885
    %v2957 = vunpack.c.l.b16 %v2886
    %v2958 = vunpack.c.l.b16 %v2887
    %v2959 = vunpack.c.l.b16 %v2888
    %v2960 = vunpack.c.l.b16 %v2889
    %v2961 = vunpack.c.l.b16 %v2890
    %v2962 = vunpack.c.l.b16 %v2891
    %v2963 = vunpack.c.l.b16 %v2892
    %v2964 = vunpack.c.l.b16 %v2893
    %v2965 = vunpack.c.l.b16 %v2894
    %v2966 = vunpack.c.l.b16 %v2895
    %v2967 = vunpack.c.l.b16 %v2896
    %v2968 = vunpack.c.l.b16 %v2897
    %v2969 = vunpack.c.l.b16 %v2898
    %v2970 = vunpack.c.l.b16 %v2899
    %v2971 = vunpack.c.l.b16 %v2900
    %v2972 = vunpack.c.l.b16 %v2901
    %v2973 = vunpack.c.l.b16 %v2902
    %v2974 = vunpack.c.l.b16 %v2903
    %v2975 = vunpack.c.l.b16 %v2904
    %v2976 = vunpack.c.l.b16 %v2905
    %v2977 = vunpack.c.l.b16 %v2906
    %v2978 = vunpack.c.l.b16 %v2907
    %v2979 = vpack.c.b16 %v2948, %v2947
    %v2980 = vpack.c.b16 %v2950, %v2949
    %v2981 = vpack.c.b16 %v2952, %v2951
    %v2982 = vpack.c.b16 %v2954, %v2953
    %v2983 = vpack.c.b16 %v2956, %v2955
    %v2984 = vpack.c.b16 %v2958, %v2957
    %v2985 = vpack.c.b16 %v2960, %v2959
    %v2986 = vpack.c.b16 %v2962, %v2961
    %v2987 = vpack.c.b16 %v2964, %v2963
    %v2988 = vpack.c.b16 %v2966, %v2965
    %v2989 = vpack.c.b16 %v2968, %v2967
    %v2990 = vpack.c.b16 %v2970, %v2969
    %v2991 = vpack.c.b16 %v2972, %v2971
    %v2992 = vpack.c.b16 %v2974, %v2973
    %v2993 = vpack.c.b16 %v2976, %v2975
    %v2994 = vpack.c.b16 %v2978, %v2977
    %3011 = vmatprep.subr.bf16.mxu0 0
    %3012 = vmatpush1.bf16.msra.mxu0 %v2979
    %3013 = vmatprep.subr.bf16.mxu0 0
    %3014 = vmatpush1.bf16.msra.mxu0 %v2980
    %3015 = vmatprep.subr.bf16.mxu0 0
    %3016 = vmatpush1.bf16.msra.mxu0 %v2981
    %3017 = vmatprep.subr.bf16.mxu0 0
    %3018 = vmatpush1.bf16.msra.mxu0 %v2982
    %3019 = vmatprep.subr.bf16.mxu0 0
    %3020 = vmatpush1.bf16.msra.mxu0 %v2983
    %3021 = vmatprep.subr.bf16.mxu0 0
    %3022 = vmatpush1.bf16.msra.mxu0 %v2984
    %3023 = vmatprep.subr.bf16.mxu0 0
    %3024 = vmatpush1.bf16.msra.mxu0 %v2985
    %3025 = vmatprep.subr.bf16.mxu0 0
    %3026 = vmatpush1.bf16.msra.mxu0 %v2986
    %3027 = vmatprep.subr.bf16.mxu0 0
    %3028 = vmatpush1.bf16.msra.mxu0 %v2987
    %3029 = vmatprep.subr.bf16.mxu0 0
    %3030 = vmatpush1.bf16.msra.mxu0 %v2988
    %3031 = vmatprep.subr.bf16.mxu0 0
    %3032 = vmatpush1.bf16.msra.mxu0 %v2989
    %3033 = vmatprep.subr.bf16.mxu0 0
    %3034 = vmatpush1.bf16.msra.mxu0 %v2990
    %3035 = vmatprep.subr.bf16.mxu0 0
    %3036 = vmatpush1.bf16.msra.mxu0 %v2991
    %3037 = vmatprep.subr.bf16.mxu0 0
    %3038 = vmatpush1.bf16.msra.mxu0 %v2992
    %3039 = vmatprep.subr.bf16.mxu0 0
    %3040 = vmatpush1.bf16.msra.mxu0 %v2993
    %3041 = vmatprep.subr.bf16.mxu0 0
    %3042 = vmatpush1.bf16.msra.mxu0 %v2994
    %3043 = vmatprep.mubr.bf16.mxu0 %v2875
    %3044 = vmatmul.mubr.bf16.gmra.mrb[0].mxu0 %v2874
    %v3045 = vpop.f32.mrb[0].mxu0
    %v3046 = vadd.f32 %v2913, %v3045
    %v3047 = vpop.f32.mrb[0].mxu0
    %v3048 = vpop.f32.mrb[0].mxu0
    %v3049 = vadd.f32 %v2913, %v3048
    %v3050 = vpop.f32.mrb[0].mxu0
    %3051 = vdwg.mxu0
    %v3052 = vmax.f32 %v3046, 0.0
    %v3053 = vmax.f32 %v3049, 0.0
    %v3054 = vpack.c.bf16 %v3053, %v3052
    %v3055 = vld [vmem:[#allocation13] sm:$0xf]
    %v3056 = vld [vmem:[#allocation13 + $0x4] sm:$0xf]
    %v3057 = vld [vmem:[#allocation13 + $0x8] sm:$0xf]
    %v3058 = vld [vmem:[#allocation13 + $0xc] sm:$0xf]
    %v3059 = vld [vmem:[#allocation13 + $0x10] sm:$0xf]
    %v3060 = vld [vmem:[#allocation13 + $0x14] sm:$0xf]
    %v3061 = vld [vmem:[#allocation13 + $0x18] sm:$0xf]
    %v3062 = vld [vmem:[#allocation13 + $0x1c] sm:$0xf]
    %v3063 = vld [vmem:[#allocation13 + $0x20] sm:$0xf]
    %v3064 = vld [vmem:[#allocation13 + $0x24] sm:$0xf]
    %v3065 = vld [vmem:[#allocation13 + $0x28] sm:$0xf]
    %v3066 = vld [vmem:[#allocation13 + $0x2c] sm:$0xf]
    %v3067 = vld [vmem:[#allocation13 + $0x30] sm:$0xf]
    %v3068 = vld [vmem:[#allocation13 + $0x34] sm:$0xf]
    %v3069 = vld [vmem:[#allocation13 + $0x38] sm:$0xf]
    %v3070 = vld [vmem:[#allocation13 + $0x3c] sm:$0xf]
    %v3071 = vld [vmem:[%s10] sm:$0x1]
    %v3073 = vlaneseq
    %v3074 = vshrl.u32 %v3073, 7
    %v3075 = vsub.s32 0, %v3074
    %v3076 = vrot.slane %v3071, %v3075
    %v3094 = vunpack.c.l.b16 %v3055
    %v3095 = vunpack.c.l.b16 %v3056
    %v3096 = vunpack.c.l.b16 %v3057
    %v3097 = vunpack.c.l.b16 %v3058
    %v3098 = vunpack.c.l.b16 %v3059
    %v3099 = vunpack.c.l.b16 %v3060
    %v3100 = vunpack.c.l.b16 %v3061
    %v3101 = vunpack.c.l.b16 %v3062
    %v3102 = vunpack.c.l.b16 %v3063
    %v3103 = vunpack.c.l.b16 %v3064
    %v3104 = vunpack.c.l.b16 %v3065
    %v3105 = vunpack.c.l.b16 %v3066
    %v3106 = vunpack.c.l.b16 %v3067
    %v3107 = vunpack.c.l.b16 %v3068
    %v3108 = vunpack.c.l.b16 %v3069
    %v3109 = vunpack.c.l.b16 %v3070
    %v3110 = vpack.c.b16 %v3095, %v3094
    %v3111 = vpack.c.b16 %v3097, %v3096
    %v3112 = vpack.c.b16 %v3099, %v3098
    %v3113 = vpack.c.b16 %v3101, %v3100
    %v3114 = vpack.c.b16 %v3103, %v3102
    %v3115 = vpack.c.b16 %v3105, %v3104
    %v3116 = vpack.c.b16 %v3107, %v3106
    %v3117 = vpack.c.b16 %v3109, %v3108
    %3126 = vmatprep.subr.bf16.mxu0 0
    %3127 = vmatpush1.bf16.msra.mxu0 %v3110
    %3128 = vmatprep.subr.bf16.mxu0 0
    %3129 = vmatpush1.bf16.msra.mxu0 %v3111
    %3130 = vmatprep.subr.bf16.mxu0 0
    %3131 = vmatpush1.bf16.msra.mxu0 %v3112
    %3132 = vmatprep.subr.bf16.mxu0 0
    %3133 = vmatpush1.bf16.msra.mxu0 %v3113
    %3134 = vmatprep.subr.bf16.mxu0 0
    %3135 = vmatpush1.bf16.msra.mxu0 %v3114
    %3136 = vmatprep.subr.bf16.mxu0 0
    %3137 = vmatpush1.bf16.msra.mxu0 %v3115
    %3138 = vmatprep.subr.bf16.mxu0 0
    %3139 = vmatpush1.bf16.msra.mxu0 %v3116
    %3140 = vmatprep.subr.bf16.mxu0 0
    %3141 = vmatpush1.bf16.msra.mxu0 %v3117
    %3142 = vmatprep.subr.bf16.mxu0 0
    %3143 = vmatpush1.bf16.msra.mxu0 0
    %3144 = vmatprep.subr.bf16.mxu0 0
    %3145 = vmatpush1.bf16.msra.mxu0 0
    %3146 = vmatprep.subr.bf16.mxu0 0
    %3147 = vmatpush1.bf16.msra.mxu0 0
    %3148 = vmatprep.subr.bf16.mxu0 0
    %3149 = vmatpush1.bf16.msra.mxu0 0
    %3150 = vmatprep.subr.bf16.mxu0 0
    %3151 = vmatpush1.bf16.msra.mxu0 0
    %3152 = vmatprep.subr.bf16.mxu0 0
    %3153 = vmatpush1.bf16.msra.mxu0 0
    %3154 = vmatprep.subr.bf16.mxu0 0
    %3155 = vmatpush1.bf16.msra.mxu0 0
    %3156 = vmatprep.subr.bf16.mxu0 0
    %3157 = vmatpush1.bf16.msra.mxu0 0
    %3158 = vmatprep.mubr.bf16.mxu0 0
    %3159 = vmatmul.mubr.bf16.gmra.mrb[0].mxu0 %v3054
    %v3160 = vpop.f32.mrb[0].mxu0
    %v3161 = vadd.f32 %v3076, %v3160
    %v3162 = vpop.f32.mrb[0].mxu0
    %v3163 = vpop.f32.mrb[0].mxu0
    %v3164 = vadd.f32 %v3076, %v3163
    %v3165 = vpop.f32.mrb[0].mxu0
    %3166 = vdwg.mxu0
    %3167 = vst [vmem:[#allocation14] sm:$0xff] %v3161
    %3168 = vst [vmem:[#allocation14 + $0x8] sm:$0xff] %v3164
    // Predicated region
    $region74: #{tpu_custom_call.1} parent=1 // pred_check
      _
    $region75: #{tpu_custom_call.1} parent=1 // pred_check_branch
      %3170 = sbr.rel (0) target = $region77
    $region76: #{tpu_custom_call.1} parent=1 // pred_region
      %s3172 = ssub.s32 256, 256
      %3173 = vsyncadd [#allocation4], %s3172
      %s3174 = sshll.u32 [#allocation14], 4
      %s3175 = int_to_ptr.vmem [resolvable:$true] %s3174
      %3180 = dma.vmem_to_hbm [thread:$0]  %s3175, 256, %s11, [#allocation4], 128, 128, 8
    $region77: #{tpu_custom_call.1} parent=1 // pred_fallthru
      _
    // Predicated region
    $region78: #{tpu_custom_call.1} parent=1 // pred_check
      _
    $region79: #{tpu_custom_call.1} parent=1 // pred_check_branch
      %3182 = sbr.rel (0) target = $region81
    $region80: #{tpu_custom_call.1} parent=1 // pred_region
      %3183 = dma.done [#allocation4], 256
    $region81: #{tpu_custom_call.1} parent=1 // pred_fallthru
      _
    %3184 = vsyncpa [#allocation3], 1
    %3185 = vsyncpa [#allocation6], 1
    %3186 = vsyncpa [#allocation9], 1
    %3187 = vsyncpa [#allocation12], 1
    %3188 = vsyncpa [#allocation4], 1

</llo_original>
